<compile_context>
chip_gen: v6e
topology: v6e:2x2x1
jax: 0.10.0
libtpu: 0.0.40
codegen_flags: <defaults>
</compile_context>

<pallas_src>
import math

import jax
import jax.numpy as jnp
from jax import lax
from jax.experimental import pallas as pl
from jax.experimental.pallas import tpu as pltpu

NUM_FTRS = 2208   # densenet161 classifier.in_features
HIDDEN = 512
BN_EPS = 1e-5


def _head_kernel(xf_ref, w1_ref, b1_ref, w2_ref, b2_ref, out_ref):
    """One batch element per grid step.

    xf_ref : [1, S, F]   f32 backbone feature map (lane-dense in F)
    w1_ref : [F, 512]    bf16 BN-folded classifier weight (resident across grid)
    b1_ref : [1, 512]    f32 BN-folded bias
    w2_ref : [512, Np]   f32 fc2 weight (lane-padded)
    b2_ref : [1, Np]     f32 fc2 bias   (lane-padded)
    out_ref: [1, 1, Np]  f32 logits     (lane-padded)
    """
    # relu on backbone features, per spatial position.
    x = jnp.maximum(xf_ref[0], 0.0)                      # [S, F] f32
    xb = x.astype(jnp.bfloat16)

    # Linear(F -> 512) applied per spatial position on the MXU; the (linear)
    # adaptive average pool commutes with the matmul and is fused afterwards.
    y = jnp.dot(xb, w1_ref[...], preferred_element_type=jnp.float32)   # [S, 512]
    h = jnp.mean(y, axis=0, keepdims=True) + b1_ref[...]               # [1, 512]

    # Mish: x * tanh(softplus(x))  (PyTorch softplus threshold = 20)
    sp = jnp.where(h > 20.0, h, jnp.log1p(jnp.exp(jnp.minimum(h, 20.0))))
    h = h * jnp.tanh(sp)

    # fc2 : Linear(512 -> n_class)  (lane-padded to Np)
    out_ref[0] = (jnp.dot(h, w2_ref[...], preferred_element_type=jnp.float32)
                  + b2_ref[...]).astype(out_ref.dtype)


def prepare_params(raw):
    """Fold eval-mode BN into w1/b1, quantize w1 to bf16, lane-pad w2/b2."""
    scale = raw["gamma"] * lax.rsqrt(raw["rvar"] + BN_EPS)            # [1, 512]
    w1f = (raw["w1"] * scale).astype(jnp.bfloat16)                    # [F, 512]
    b1f = (raw["b1"] - raw["rmean"]) * scale + raw["beta"]            # [1, 512]

    w2, b2 = raw["w2"], raw["b2"]
    n_class = w2.shape[1]
    n_pad = ((n_class + 127) // 128) * 128
    w2p = jnp.zeros((HIDDEN, n_pad), jnp.float32).at[:, :n_class].set(w2)
    b2p = jnp.zeros((1, n_pad), jnp.float32).at[:, :n_class].set(b2)

    return dict(w1=w1f, b1=b1f, w2=w2p, b2=b2p, n_class=n_class)


def clf_head_forward(x_feat, prep):
    """x_feat: [B, F, H, W] float32 backbone feature map (NCHW)."""
    B, F, H, W = x_feat.shape
    S = H * W
    # lane-dense layout: F=2208 in the lane (last) dim.
    xf = jnp.transpose(x_feat.reshape(B, F, S), (0, 2, 1))            # [B, S, F]

    w1, b1, w2, b2 = prep["w1"], prep["b1"], prep["w2"], prep["b2"]
    n_class = prep["n_class"]
    n_pad = w2.shape[1]

    out = pl.pallas_call(
        _head_kernel,
        out_shape=jax.ShapeDtypeStruct((B, 1, n_pad), jnp.float32),
        grid=(B,),
        in_specs=[
            pl.BlockSpec((1, S, F), lambda b: (b, 0, 0)),   # feature map, per batch row
            pl.BlockSpec(w1.shape, lambda b: (0, 0)),       # resident bf16 [F, 512]
            pl.BlockSpec(b1.shape, lambda b: (0, 0)),       # [1, 512]
            pl.BlockSpec(w2.shape, lambda b: (0, 0)),       # [512, n_pad]
            pl.BlockSpec(b2.shape, lambda b: (0, 0)),       # [1, n_pad]
        ],
        out_specs=pl.BlockSpec((1, 1, n_pad), lambda b: (b, 0, 0)),
        compiler_params=pltpu.CompilerParams(
            dimension_semantics=("parallel",)),
    )(xf, w1, b1, w2, b2)

    return out.reshape(B, n_pad)[:, :n_class]


def init_params(key, n_class):
    """Raw parameters matching the PyTorch module's initialization."""
    k1, k2, k3, k4 = jax.random.split(key, 4)
    # classifier: kaiming_normal_, mode='fan_out', nonlinearity='relu'
    std = math.sqrt(2.0 / HIDDEN)
    w1 = jax.random.normal(k1, (NUM_FTRS, HIDDEN), jnp.float32) * std
    bnd1 = 1.0 / math.sqrt(NUM_FTRS)
    b1 = jax.random.uniform(k2, (1, HIDDEN), jnp.float32, -bnd1, bnd1)

    # bn1: weight = 1, bias = 0, fresh running stats (eval mode)
    gamma = jnp.ones((1, HIDDEN), jnp.float32)
    beta = jnp.zeros((1, HIDDEN), jnp.float32)
    rmean = jnp.zeros((1, HIDDEN), jnp.float32)
    rvar = jnp.ones((1, HIDDEN), jnp.float32)

    # fc2: xavier_uniform_ weight, default uniform bias
    bnd2 = math.sqrt(6.0 / (HIDDEN + n_class))
    w2 = jax.random.uniform(k3, (HIDDEN, n_class), jnp.float32, -bnd2, bnd2)
    bnd2b = 1.0 / math.sqrt(HIDDEN)
    b2 = jax.random.uniform(k4, (1, n_class), jnp.float32, -bnd2b, bnd2b)

    return dict(w1=w1, b1=b1, gamma=gamma, beta=beta,
                rmean=rmean, rvar=rvar, w2=w2, b2=b2)


def reference_forward(x_feat, raw):
    """Pure-JAX f32 reference of the original (unfolded) module math."""
    B, F, H, W = x_feat.shape
    xf = jnp.maximum(x_feat.reshape(B, F, H * W), 0.0)
    pooled = jnp.mean(xf, axis=-1)                                     # [B, F]
    h = pooled @ raw["w1"] + raw["b1"]
    h = (h - raw["rmean"]) * lax.rsqrt(raw["rvar"] + BN_EPS) \
        * raw["gamma"] + raw["beta"]
    sp = jnp.where(h > 20.0, h, jnp.log1p(jnp.exp(jnp.minimum(h, 20.0))))
    h = h * jnp.tanh(sp)
    return h @ raw["w2"] + raw["b2"]


if __name__ == "__main__":
    B, HH, WW = 2, 7, 7
    N_CLASS = 10

    key = jax.random.PRNGKey(0)
    kp, kx = jax.random.split(key)
    raw_params = init_params(kp, N_CLASS)
    prep_params = prepare_params(raw_params)

    # deterministic synthetic backbone feature map (NCHW)
    x_feat = jax.random.normal(kx, (B, NUM_FTRS, HH, WW), jnp.float32)

    out = clf_head_forward(x_feat, prep_params)
    out = jax.block_until_ready(out)

    ref = reference_forward(x_feat, raw_params)
    assert out.shape == (B, N_CLASS)
    # tolerance accounts for bf16 storage of the BN-folded w1 / bf16 activations
    assert jnp.allclose(out, ref, atol=5e-2, rtol=5e-2), "mismatch vs reference"

    print("KERNEL_OK")
</pallas_src>

<mosaic_0001>
module attributes {stable_mosaic.version = 11 : i64} {
  func.func @_head_kernel(%arg0: i32, %arg1: memref<1x49x2208xf32, #tpu.memory_space<vmem>>, %arg2: memref<2208x512xbf16, #tpu.memory_space<vmem>>, %arg3: memref<1x512xf32, #tpu.memory_space<vmem>>, %arg4: memref<512x128xf32, #tpu.memory_space<vmem>>, %arg5: memref<1x128xf32, #tpu.memory_space<vmem>>, %arg6: memref<1x1x128xf32, #tpu.memory_space<vmem>>) attributes {dimension_semantics = [#tpu.dimension_semantics<parallel>], iteration_bounds = array<i64: 2>, scalar_prefetch = 0 : i64, scratch_operands = 0 : i64, tpu.core_type = #tpu.core_type<tc>, window_params = [{transform_indices = @transform_0, window_bounds = array<i64: 1, 49, 2208>}, {pipeline_mode = #tpu.pipeline_mode<synchronous>, transform_indices = @transform_1, window_bounds = array<i64: 2208, 512>}, {pipeline_mode = #tpu.pipeline_mode<synchronous>, transform_indices = @transform_2, window_bounds = array<i64: 1, 512>}, {pipeline_mode = #tpu.pipeline_mode<synchronous>, transform_indices = @transform_3, window_bounds = array<i64: 512, 128>}, {pipeline_mode = #tpu.pipeline_mode<synchronous>, transform_indices = @transform_4, window_bounds = array<i64: 1, 128>}, {transform_indices = @transform_5, window_bounds = array<i64: 1, 1, 128>}]} {
    %c0 = arith.constant 0 : index
    %c0_0 = arith.constant 0 : index
    %c0_1 = arith.constant 0 : index
    %0 = vector.load %arg1[%c0, %c0_0, %c0_1] : memref<1x49x2208xf32, #tpu.memory_space<vmem>>, vector<1x49x2208xf32>
    %1 = vector.shape_cast %0 : vector<1x49x2208xf32> to vector<49x2208xf32>
    %cst = arith.constant 0.000000e+00 : f32
    %2 = vector.broadcast %cst : f32 to vector<49x2208xf32>
    %3 = arith.maximumf %1, %2 : vector<49x2208xf32>
    %4 = arith.truncf %3 : vector<49x2208xf32> to vector<49x2208xbf16>
    %c0_2 = arith.constant 0 : index
    %c0_3 = arith.constant 0 : index
    %5 = vector.load %arg2[%c0_2, %c0_3] : memref<2208x512xbf16, #tpu.memory_space<vmem>>, vector<2208x512xbf16>
    %cst_4 = arith.constant dense<0.000000e+00> : vector<49x512xf32>
    %6 = tpu.matmul %4, %5, %cst_4 {dimension_numbers = #tpu.dot_dimension_numbers<[1], [0], [0], [1], [0, 0, 1, 1], [], []>} : vector<49x2208xbf16>, vector<2208x512xbf16>, vector<49x512xf32> -> vector<49x512xf32>
    %cst_5 = arith.constant dense<0.000000e+00> : vector<512xf32>
    %7 = vector.multi_reduction <add>, %6, %cst_5 [0] : vector<49x512xf32> to vector<512xf32>
    %8 = vector.shape_cast %7 : vector<512xf32> to vector<1x512xf32>
    %cst_6 = arith.constant 4.900000e+01 : f32
    %9 = vector.broadcast %cst_6 : f32 to vector<1x512xf32>
    %10 = arith.divf %8, %9 : vector<1x512xf32>
    %c0_7 = arith.constant 0 : index
    %c0_8 = arith.constant 0 : index
    %11 = vector.load %arg3[%c0_7, %c0_8] : memref<1x512xf32, #tpu.memory_space<vmem>>, vector<1x512xf32>
    %12 = arith.addf %10, %11 : vector<1x512xf32>
    %cst_9 = arith.constant 2.000000e+01 : f32
    %13 = vector.broadcast %cst_9 : f32 to vector<1x512xf32>
    %14 = arith.cmpf ogt, %12, %13 : vector<1x512xf32>
    %cst_10 = arith.constant 2.000000e+01 : f32
    %15 = vector.broadcast %cst_10 : f32 to vector<1x512xf32>
    %16 = arith.minimumf %12, %15 : vector<1x512xf32>
    %17 = math.exp %16 : vector<1x512xf32>
    %18 = math.log1p %17 : vector<1x512xf32>
    %19 = arith.select %14, %12, %18 : vector<1x512xi1>, vector<1x512xf32>
    %20 = math.tanh %19 : vector<1x512xf32>
    %21 = arith.mulf %12, %20 : vector<1x512xf32>
    %c0_11 = arith.constant 0 : index
    %c0_12 = arith.constant 0 : index
    %22 = vector.load %arg4[%c0_11, %c0_12] : memref<512x128xf32, #tpu.memory_space<vmem>>, vector<512x128xf32>
    %cst_13 = arith.constant dense<0.000000e+00> : vector<1x128xf32>
    %23 = tpu.matmul %21, %22, %cst_13 {dimension_numbers = #tpu.dot_dimension_numbers<[1], [0], [0], [1], [0, 0, 1, 1], [], []>} : vector<1x512xf32>, vector<512x128xf32>, vector<1x128xf32> -> vector<1x128xf32>
    %c0_14 = arith.constant 0 : index
    %c0_15 = arith.constant 0 : index
    %24 = vector.load %arg5[%c0_14, %c0_15] : memref<1x128xf32, #tpu.memory_space<vmem>>, vector<1x128xf32>
    %25 = arith.addf %23, %24 : vector<1x128xf32>
    %c0_16 = arith.constant 0 : index
    %c0_17 = arith.constant 0 : index
    %c0_18 = arith.constant 0 : index
    %26 = vector.load %arg6[%c0_16, %c0_17, %c0_18] : memref<1x1x128xf32, #tpu.memory_space<vmem>>, vector<1x1x128xf32>
    %27 = vector.shape_cast %26 : vector<1x1x128xf32> to vector<1x128xf32>
    %28 = vector.shape_cast %25 : vector<1x128xf32> to vector<1x1x128xf32>
    tpu.vector_store %arg6[%c0_16, %c0_17, %c0_18], %28 {strides = array<i32>} : memref<1x1x128xf32, #tpu.memory_space<vmem>>, vector<1x1x128xf32>,
    return
  }
  func.func @transform_0(%arg0: i32) -> (i32, i32, i32) {
    %c0_i32 = arith.constant 0 : i32
    %c0_i32_0 = arith.constant 0 : i32
    %c0_i32_1 = arith.constant 0 : i32
    return %arg0, %c0_i32, %c0_i32_0 : i32, i32, i32
  }
  func.func @transform_1(%arg0: i32) -> (i32, i32) {
    %c0_i32 = arith.constant 0 : i32
    %c0_i32_0 = arith.constant 0 : i32
    %c0_i32_1 = arith.constant 0 : i32
    return %c0_i32, %c0_i32_0 : i32, i32
  }
  func.func @transform_2(%arg0: i32) -> (i32, i32) {
    %c0_i32 = arith.constant 0 : i32
    %c0_i32_0 = arith.constant 0 : i32
    %c0_i32_1 = arith.constant 0 : i32
    return %c0_i32, %c0_i32_0 : i32, i32
  }
  func.func @transform_3(%arg0: i32) -> (i32, i32) {
    %c0_i32 = arith.constant 0 : i32
    %c0_i32_0 = arith.constant 0 : i32
    %c0_i32_1 = arith.constant 0 : i32
    return %c0_i32, %c0_i32_0 : i32, i32
  }
  func.func @transform_4(%arg0: i32) -> (i32, i32) {
    %c0_i32 = arith.constant 0 : i32
    %c0_i32_0 = arith.constant 0 : i32
    %c0_i32_1 = arith.constant 0 : i32
    return %c0_i32, %c0_i32_0 : i32, i32
  }
  func.func @transform_5(%arg0: i32) -> (i32, i32, i32) {
    %c0_i32 = arith.constant 0 : i32
    %c0_i32_0 = arith.constant 0 : i32
    %c0_i32_1 = arith.constant 0 : i32
    return %arg0, %c0_i32, %c0_i32_0 : i32, i32, i32
  }
}

</mosaic_0001>

<llo_original>
// kernel: tpu_custom_call.1
$region0: #{tpu_custom_call.1}
  #allocation0 [shape = 'u32[]', space=smem, size = 0x4, offset = 0x4, fixed_abs, tag = 'smem constant byte address 0x4 - core index']
  #allocation1 [shape = 'u32[144,128]{1,0:T(1,128)}', space=vmem, size = 0x12000, scoped, tag = 'internal scratch']
  %s0 = inlined_call_operand.vmem [shape: f32[2,49,2208], index: 0, kind: input, shape index: {}]
  %s1 = inlined_call_operand.hbm [shape: bf16[2208,512], index: 1, kind: input, shape index: {}]
  %s2 = inlined_call_operand.hbm [shape: f32[1,512], index: 2, kind: input, shape index: {}]
  %s3 = inlined_call_operand.hbm [shape: f32[512,128], index: 3, kind: input, shape index: {}]
  %s4 = inlined_call_operand.hbm [shape: f32[1,128], index: 4, kind: input, shape index: {}]
  %s5 = inlined_call_operand.hbm [shape: f32[2,1,128], index: 5, kind: output, shape index: {}]
  %s6 = sld [smem:[#allocation0]]
  $region69: #{tpu_custom_call.1} parent=0
    _
  %s8 = ssub.s32 1, %s6
  %s9 = scalar_select 0, %s8, %s6
  $region1: #{tpu_custom_call.1} parent=0
    #allocation2 [shape = 'u8[2260992]{0}', space=vmem, size = 0x228000, scoped, tag = 'input window, operand 1, single buffered']
    #allocation3 [shape = 's32[2]{0}', space=sflag, size = 0x8, scoped, tag = 'scoped memory for tpu_custom_call.1']
    #allocation4 [shape = 's32[2]{0}', space=sflag, size = 0x8, scoped, tag = 'scoped memory for tpu_custom_call.1']
    #allocation5 [shape = 'u8[2048]{0}', space=vmem, size = 0x800, scoped, tag = 'input window, operand 2, single buffered']
    #allocation6 [shape = 's32[1]{0}', space=sflag, size = 0x4, scoped, tag = 'scoped memory for tpu_custom_call.1']
    #allocation7 [shape = 'u8[262144]{0}', space=vmem, size = 0x40000, scoped, tag = 'input window, operand 3, single buffered']
    #allocation8 [shape = 'u8[512]{0}', space=vmem, size = 0x400, scoped, tag = 'input window, operand 4, single buffered']
    #allocation9 [shape = 's32[1]{0}', space=sflag, size = 0x4, scoped, tag = 'scoped memory for tpu_custom_call.1']
    #allocation10 [shape = 'u8[1024]{0}', space=vmem, size = 0x400, scoped, tag = 'output window, operand 0']
    %10 = vsyncpa [#allocation3], 0
    %11 = vsyncpa [#allocation6], 0
    %12 = vsyncpa [#allocation9], 0
    %13 = vsyncpa [#allocation4], 0
    %s14 = scalar_lea.sflag [#allocation4], 1
    %15 = vsyncpa %s14, 0
    loop: start=0, step=1, limit=4
    $region2: #{tpu_custom_call.1} parent=1 // loop_pre_header
      _
    $region3: #{tpu_custom_call.1} parent=1 // loop_header
      %s17 = sphi 0, %s21
      %p18 = scmp.ge.s32.totalorder %s17, 4
      %s27 = sphi 0, %s29
      %s30 = sphi 0, %s27
      %s31 = sphi 0, %s30
      %s47 = sphi 0, %s31
      %s51 = sphi 0, %s51
      %s53 = sphi 0, %s51
      %s54 = sphi 0, %s53
      %s68 = sphi 0, %s54
      %s72 = sphi 0, %s72
      %s74 = sphi 0, %s72
      %s75 = sphi 0, %s74
      %s89 = sphi 0, %s75
      %s93 = sphi 0, %s93
      %s95 = sphi 0, %s93
      %s96 = sphi 0, %s95
      %s110 = sphi 0, %s96
      %s114 = sphi 0, %s114
      %s116 = sphi 0, %s114
      %s117 = sphi 0, %s116
      %s131 = sphi 0, %s117
      %s137 = sphi 0, %s139
      %s140 = sphi 0, %s137
      %s141 = sphi 0, %s140
      %s157 = sphi 0, %s141
    $region4: #{tpu_custom_call.1} parent=1 // loop_header_branch
      %20 = sbr.rel (%p18) target = $region8
    $region5: #{tpu_custom_call.1} parent=1 // loop_body
      %s22 = ssub.s32 %s17, 1
      %s23 = ssub.s32 %s17, 2
      %s24 = sadd.s32 %s17, 1
      %s25 = ssub.s32 %s17, %s24
      %p26 = scmp.eq.s32.totalorder %s25, 0
      %s28 = sadd.s32 %s27, 1
      %s29 = scalar_select %p26, %s27, %s28
      %p32 = pneg %p26
      %p33 = scmp.eq.s32.totalorder %s17, 1
      %p34 = por %p32, %p33
      %p35 = scmp.ne.s32.totalorder %s27, %s30
      %p36 = scmp.eq.s32.totalorder %s17, 0
      %p37 = por %p35, %p36
      %p38 = scmp.ne.s32.totalorder %s27, %s30
      %p39 = scmp.eq.s32.totalorder %s22, 1
      %p40 = por %p38, %p39
      %p41 = scmp.ne.s32.totalorder %s30, %s31
      %p42 = scmp.eq.s32.totalorder %s22, 0
      %p43 = por %p41, %p42
      %p44 = scmp.ne.s32.totalorder %s30, %s31
      %p45 = scmp.eq.s32.totalorder %s23, 1
      %p46 = por %p44, %p45
      %p48 = scmp.ne.s32.totalorder %s31, %s47
      %p49 = scmp.eq.s32.totalorder %s23, 0
      %p50 = por %p48, %p49
      %s52 = sadd.s32 %s51, 1
      %p55 = scmp.eq.s32.totalorder %s17, 1
      %p56 = scmp.ne.s32.totalorder %s51, %s53
      %p57 = scmp.eq.s32.totalorder %s17, 0
      %p58 = por %p56, %p57
      %p59 = scmp.ne.s32.totalorder %s51, %s53
      %p60 = scmp.eq.s32.totalorder %s22, 1
      %p61 = por %p59, %p60
      %p62 = scmp.ne.s32.totalorder %s53, %s54
      %p63 = scmp.eq.s32.totalorder %s22, 0
      %p64 = por %p62, %p63
      %p65 = scmp.ne.s32.totalorder %s53, %s54
      %p66 = scmp.eq.s32.totalorder %s23, 1
      %p67 = por %p65, %p66
      %p69 = scmp.ne.s32.totalorder %s54, %s68
      %p70 = scmp.eq.s32.totalorder %s23, 0
      %p71 = por %p69, %p70
      %s73 = sadd.s32 %s72, 1
      %p76 = scmp.eq.s32.totalorder %s17, 1
      %p77 = scmp.ne.s32.totalorder %s72, %s74
      %p78 = scmp.eq.s32.totalorder %s17, 0
      %p79 = por %p77, %p78
      %p80 = scmp.ne.s32.totalorder %s72, %s74
      %p81 = scmp.eq.s32.totalorder %s22, 1
      %p82 = por %p80, %p81
      %p83 = scmp.ne.s32.totalorder %s74, %s75
      %p84 = scmp.eq.s32.totalorder %s22, 0
      %p85 = por %p83, %p84
      %p86 = scmp.ne.s32.totalorder %s74, %s75
      %p87 = scmp.eq.s32.totalorder %s23, 1
      %p88 = por %p86, %p87
      %p90 = scmp.ne.s32.totalorder %s75, %s89
      %p91 = scmp.eq.s32.totalorder %s23, 0
      %p92 = por %p90, %p91
      %s94 = sadd.s32 %s93, 1
      %p97 = scmp.eq.s32.totalorder %s17, 1
      %p98 = scmp.ne.s32.totalorder %s93, %s95
      %p99 = scmp.eq.s32.totalorder %s17, 0
      %p100 = por %p98, %p99
      %p101 = scmp.ne.s32.totalorder %s93, %s95
      %p102 = scmp.eq.s32.totalorder %s22, 1
      %p103 = por %p101, %p102
      %p104 = scmp.ne.s32.totalorder %s95, %s96
      %p105 = scmp.eq.s32.totalorder %s22, 0
      %p106 = por %p104, %p105
      %p107 = scmp.ne.s32.totalorder %s95, %s96
      %p108 = scmp.eq.s32.totalorder %s23, 1
      %p109 = por %p107, %p108
      %p111 = scmp.ne.s32.totalorder %s96, %s110
      %p112 = scmp.eq.s32.totalorder %s23, 0
      %p113 = por %p111, %p112
      %s115 = sadd.s32 %s114, 1
      %p118 = scmp.eq.s32.totalorder %s17, 1
      %p119 = scmp.ne.s32.totalorder %s114, %s116
      %p120 = scmp.eq.s32.totalorder %s17, 0
      %p121 = por %p119, %p120
      %p122 = scmp.ne.s32.totalorder %s114, %s116
      %p123 = scmp.eq.s32.totalorder %s22, 1
      %p124 = por %p122, %p123
      %p125 = scmp.ne.s32.totalorder %s116, %s117
      %p126 = scmp.eq.s32.totalorder %s22, 0
      %p127 = por %p125, %p126
      %p128 = scmp.ne.s32.totalorder %s116, %s117
      %p129 = scmp.eq.s32.totalorder %s23, 1
      %p130 = por %p128, %p129
      %p132 = scmp.ne.s32.totalorder %s117, %s131
      %p133 = scmp.eq.s32.totalorder %s23, 0
      %p134 = por %p132, %p133
      %s135 = ssub.s32 %s17, %s24
      %p136 = scmp.eq.s32.totalorder %s135, 0
      %s138 = sadd.s32 %s137, 1
      %s139 = scalar_select %p136, %s137, %s138
      %p142 = pneg %p136
      %p143 = scmp.eq.s32.totalorder %s17, 1
      %p144 = por %p142, %p143
      %p145 = scmp.ne.s32.totalorder %s137, %s140
      %p146 = scmp.eq.s32.totalorder %s17, 0
      %p147 = por %p145, %p146
      %p148 = scmp.ne.s32.totalorder %s137, %s140
      %p149 = scmp.eq.s32.totalorder %s22, 1
      %p150 = por %p148, %p149
      %p151 = scmp.ne.s32.totalorder %s140, %s141
      %p152 = scmp.eq.s32.totalorder %s22, 0
      %p153 = por %p151, %p152
      %p154 = scmp.ne.s32.totalorder %s140, %s141
      %p155 = scmp.eq.s32.totalorder %s23, 1
      %p156 = por %p154, %p155
      %p158 = scmp.ne.s32.totalorder %s141, %s157
      %p159 = scmp.eq.s32.totalorder %s23, 0
      %p160 = por %p158, %p159
      %p161 = scmp.le.s32.totalorder 1, %s17
      %p162 = scmp.lt.s32.totalorder %s17, 3
      %p163 = pnand %p161, %p162
      %p164 = pneg %p163
      // Predicated region
      $region9: #{tpu_custom_call.1} parent=5 // pred_check
        _
      $region10: #{tpu_custom_call.1} parent=5 // pred_check_branch
        %166 = sbr.rel (%p163) target = $region12
      $region11: #{tpu_custom_call.1} parent=5 // pred_region
        %s167 = ssub.s32 %s17, 1
        // Predicated region
        $region13: #{tpu_custom_call.1} parent=11 // pred_check
          %p168 = pneg %p64
        $region14: #{tpu_custom_call.1} parent=11 // pred_check_branch
          %170 = sbr.rel (%p168) target = $region16
        $region15: #{tpu_custom_call.1} parent=11 // pred_region
          %s172 = ssub.s32 70656, 70656
          %173 = vsyncadd [#allocation3], %s172
          %s174 = sshll.u32 [#allocation2], 4
          %s175 = int_to_ptr.vmem [resolvable:$true] %s174
          %180 = dma.hbm_to_vmem [thread:$0]  %s1, 70656, %s175, [#allocation3], 256, 256, 16
        $region16: #{tpu_custom_call.1} parent=11 // pred_fallthru
          _
        // Predicated region
        $region17: #{tpu_custom_call.1} parent=11 // pred_check
          %p181 = pneg %p85
        $region18: #{tpu_custom_call.1} parent=11 // pred_check_branch
          %183 = sbr.rel (%p181) target = $region20
        $region19: #{tpu_custom_call.1} parent=11 // pred_region
          %s185 = ssub.s32 64, 64
          %186 = vsyncadd [#allocation6], %s185
          %s188 = sshll.u32 [#allocation5], 4
          %s189 = int_to_ptr.vmem [resolvable:$true] %s188
          %191 = dma.hbm_to_vmem [thread:$0]  %s2, 64, %s189, [#allocation6]
        $region20: #{tpu_custom_call.1} parent=11 // pred_fallthru
          _
        // Predicated region
        $region21: #{tpu_custom_call.1} parent=11 // pred_check
          %p192 = pneg %p106
        $region22: #{tpu_custom_call.1} parent=11 // pred_check_branch
          %194 = sbr.rel (%p192) target = $region24
        $region23: #{tpu_custom_call.1} parent=11 // pred_region
          %s196 = ssub.s32 8192, 8192
          %197 = vsyncadd [#allocation6], %s196
          %s198 = sshll.u32 [#allocation7], 4
          %s199 = int_to_ptr.vmem [resolvable:$true] %s198
          %204 = dma.hbm_to_vmem [thread:$0]  %s3, 8192, %s199, [#allocation6], 128, 128, 8
        $region24: #{tpu_custom_call.1} parent=11 // pred_fallthru
          _
        // Predicated region
        $region25: #{tpu_custom_call.1} parent=11 // pred_check
          %p205 = pneg %p127
        $region26: #{tpu_custom_call.1} parent=11 // pred_check_branch
          %207 = sbr.rel (%p205) target = $region28
        $region27: #{tpu_custom_call.1} parent=11 // pred_region
          %s209 = ssub.s32 16, 16
          %210 = vsyncadd [#allocation9], %s209
          %s212 = sshll.u32 [#allocation8], 4
          %s213 = int_to_ptr.vmem [resolvable:$true] %s212
          %215 = dma.hbm_to_vmem [thread:$0]  %s4, 16, %s213, [#allocation9]
        $region28: #{tpu_custom_call.1} parent=11 // pred_fallthru
          _
      $region12: #{tpu_custom_call.1} parent=5 // pred_fallthru
        _
      %p216 = scmp.lt.s32.totalorder %s17, 2
      // Predicated region
      $region29: #{tpu_custom_call.1} parent=5 // pred_check
        %p217 = pneg %p216
      $region30: #{tpu_custom_call.1} parent=5 // pred_check_branch
        %219 = sbr.rel (%p217) target = $region32
      $region31: #{tpu_custom_call.1} parent=5 // pred_region
        // Predicated region
        $region33: #{tpu_custom_call.1} parent=31 // pred_check
          %p220 = pneg %p37
        $region34: #{tpu_custom_call.1} parent=31 // pred_check_branch
          %222 = sbr.rel (%p220) target = $region36
        $region35: #{tpu_custom_call.1} parent=31 // pred_region
          %p223 = scmp.lt.s32.totalorder %s17, 1
          %s224 = scalar_select %p223, %s17, 1
          %s225 = smul.addr %s224, 126
          %s226 = smul.addr %s225, 8
          %s227 = scalar_lea.vmem %s0, %s226
        $region36: #{tpu_custom_call.1} parent=31 // pred_fallthru
          _
      $region32: #{tpu_custom_call.1} parent=5 // pred_fallthru
        _
      %p228 = scmp.le.s32.totalorder 1, %s17
      %p229 = scmp.lt.s32.totalorder %s17, 3
      %p230 = pnand %p228, %p229
      %p231 = pneg %p230
      // Predicated region
      $region37: #{tpu_custom_call.1} parent=5 // pred_check
        _
      $region38: #{tpu_custom_call.1} parent=5 // pred_check_branch
        %233 = sbr.rel (%p230) target = $region40
      $region39: #{tpu_custom_call.1} parent=5 // pred_region
        %s234 = ssub.s32 %s17, 1
        // Predicated region
        $region41: #{tpu_custom_call.1} parent=39 // pred_check
          %p235 = pneg %p64
        $region42: #{tpu_custom_call.1} parent=39 // pred_check_branch
          %237 = sbr.rel (%p235) target = $region44
        $region43: #{tpu_custom_call.1} parent=39 // pred_region
          %238 = dma.done [#allocation3], 70656
        $region44: #{tpu_custom_call.1} parent=39 // pred_fallthru
          _
        // Predicated region
        $region45: #{tpu_custom_call.1} parent=39 // pred_check
          %p239 = pneg %p85
        $region46: #{tpu_custom_call.1} parent=39 // pred_check_branch
          %241 = sbr.rel (%p239) target = $region48
        $region47: #{tpu_custom_call.1} parent=39 // pred_region
          %242 = dma.done [#allocation6], 64
        $region48: #{tpu_custom_call.1} parent=39 // pred_fallthru
          _
        // Predicated region
        $region49: #{tpu_custom_call.1} parent=39 // pred_check
          %p243 = pneg %p106
        $region50: #{tpu_custom_call.1} parent=39 // pred_check_branch
          %245 = sbr.rel (%p243) target = $region52
        $region51: #{tpu_custom_call.1} parent=39 // pred_region
          %246 = dma.done [#allocation6], 8192
        $region52: #{tpu_custom_call.1} parent=39 // pred_fallthru
          _
        // Predicated region
        $region53: #{tpu_custom_call.1} parent=39 // pred_check
          %p247 = pneg %p127
        $region54: #{tpu_custom_call.1} parent=39 // pred_check_branch
          %249 = sbr.rel (%p247) target = $region56
        $region55: #{tpu_custom_call.1} parent=39 // pred_region
          %250 = dma.done [#allocation9], 16
        $region56: #{tpu_custom_call.1} parent=39 // pred_fallthru
          _
        %p251 = scmp.lt.s32.totalorder %s22, 1
        %s252 = scalar_select %p251, %s22, 1
        %s253 = smul.addr %s252, 126
        %s254 = smul.addr %s253, 8
        %s255 = scalar_lea.vmem %s0, %s254
        %p256 = pneg %p43
        %p257 = pneg %p40
        %p258 = pneg %p64
        %p259 = pneg %p61
        %p260 = pneg %p85
        %p261 = pneg %p82
        %p262 = pneg %p106
        %p263 = pneg %p103
        %p264 = pneg %p127
        %p265 = pneg %p124
        %p266 = pneg %p153
        %p267 = pneg %p150
        %s268 = sand.u32 %s140, 1
        %s269 = scalar_lea.sflag [#allocation4], %s268
        %s270 = sand.u32 %s140, 1
        %s271 = scalar_lea.vmem [#allocation10], %s270
        %p272 = scmp.lt.s32.totalorder %s22, 1
        %s273 = scalar_select %p272, %s22, 1
        %s274 = smul.addr %s273, 126
        %s275 = smul.addr %s274, 8
        %s276 = scalar_lea.vmem %s0, %s275
        %v278 = vld [vmem:[%s276] sm:$0xff]
        %v279 = vld [vmem:[%s276 + $0x8] sm:$0xff]
        %v280 = vld [vmem:[%s276 + $0x10] sm:$0xff]
        %v281 = vld [vmem:[%s276 + $0x18] sm:$0xff]
        %v282 = vld [vmem:[%s276 + $0x20] sm:$0xff]
        %v283 = vld [vmem:[%s276 + $0x28] sm:$0xff]
        %v284 = vld [vmem:[%s276 + $0x30] sm:$0xff]
        %v285 = vld [vmem:[%s276 + $0x38] sm:$0xff]
        %v286 = vld [vmem:[%s276 + $0x40] sm:$0xff]
        %v287 = vld [vmem:[%s276 + $0x48] sm:$0xff]
        %v288 = vld [vmem:[%s276 + $0x50] sm:$0xff]
        %v289 = vld [vmem:[%s276 + $0x58] sm:$0xff]
        %v290 = vld [vmem:[%s276 + $0x60] sm:$0xff]
        %v291 = vld [vmem:[%s276 + $0x68] sm:$0xff]
        %v292 = vld [vmem:[%s276 + $0x70] sm:$0xff]
        %v293 = vld [vmem:[%s276 + $0x78] sm:$0xff]
        %v294 = vld [vmem:[%s276 + $0x80] sm:$0xff]
        %v295 = vld [vmem:[%s276 + $0x88] sm:$0xff]
        %v296 = vld [vmem:[%s276 + $0x90] sm:$0xff]
        %v297 = vld [vmem:[%s276 + $0x98] sm:$0xff]
        %v298 = vld [vmem:[%s276 + $0xa0] sm:$0xff]
        %v299 = vld [vmem:[%s276 + $0xa8] sm:$0xff]
        %v300 = vld [vmem:[%s276 + $0xb0] sm:$0xff]
        %v301 = vld [vmem:[%s276 + $0xb8] sm:$0xff]
        %v302 = vld [vmem:[%s276 + $0xc0] sm:$0xff]
        %v303 = vld [vmem:[%s276 + $0xc8] sm:$0xff]
        %v304 = vld [vmem:[%s276 + $0xd0] sm:$0xff]
        %v305 = vld [vmem:[%s276 + $0xd8] sm:$0xff]
        %v306 = vld [vmem:[%s276 + $0xe0] sm:$0xff]
        %v307 = vld [vmem:[%s276 + $0xe8] sm:$0xff]
        %v308 = vld [vmem:[%s276 + $0xf0] sm:$0xff]
        %v309 = vld [vmem:[%s276 + $0xf8] sm:$0xff]
        %v310 = vld [vmem:[%s276 + $0x100] sm:$0xff]
        %v311 = vld [vmem:[%s276 + $0x108] sm:$0xff]
        %v312 = vld [vmem:[%s276 + $0x110] sm:$0xff]
        %v313 = vld [vmem:[%s276 + $0x118] sm:$0xff]
        %v314 = vld [vmem:[%s276 + $0x120] sm:$0xff]
        %v315 = vld [vmem:[%s276 + $0x128] sm:$0xff]
        %v316 = vld [vmem:[%s276 + $0x130] sm:$0xff]
        %v317 = vld [vmem:[%s276 + $0x138] sm:$0xff]
        %v318 = vld [vmem:[%s276 + $0x140] sm:$0xff]
        %v319 = vld [vmem:[%s276 + $0x148] sm:$0xff]
        %v320 = vld [vmem:[%s276 + $0x150] sm:$0xff]
        %v321 = vld [vmem:[%s276 + $0x158] sm:$0xff]
        %v322 = vld [vmem:[%s276 + $0x160] sm:$0xff]
        %v323 = vld [vmem:[%s276 + $0x168] sm:$0xff]
        %v324 = vld [vmem:[%s276 + $0x170] sm:$0xff]
        %v325 = vld [vmem:[%s276 + $0x178] sm:$0xff]
        %v326 = vld [vmem:[%s276 + $0x180] sm:$0xff]
        %v327 = vld [vmem:[%s276 + $0x188] sm:$0xff]
        %v328 = vld [vmem:[%s276 + $0x190] sm:$0xff]
        %v329 = vld [vmem:[%s276 + $0x198] sm:$0xff]
        %v330 = vld [vmem:[%s276 + $0x1a0] sm:$0xff]
        %v331 = vld [vmem:[%s276 + $0x1a8] sm:$0xff]
        %v332 = vld [vmem:[%s276 + $0x1b0] sm:$0xff]
        %v333 = vld [vmem:[%s276 + $0x1b8] sm:$0xff]
        %v334 = vld [vmem:[%s276 + $0x1c0] sm:$0xff]
        %v335 = vld [vmem:[%s276 + $0x1c8] sm:$0xff]
        %v336 = vld [vmem:[%s276 + $0x1d0] sm:$0xff]
        %v337 = vld [vmem:[%s276 + $0x1d8] sm:$0xff]
        %v338 = vld [vmem:[%s276 + $0x1e0] sm:$0xff]
        %v339 = vld [vmem:[%s276 + $0x1e8] sm:$0xff]
        %v340 = vld [vmem:[%s276 + $0x1f0] sm:$0xff]
        %v341 = vld [vmem:[%s276 + $0x1f8] sm:$0xff]
        %v342 = vld [vmem:[%s276 + $0x200] sm:$0xff]
        %v343 = vld [vmem:[%s276 + $0x208] sm:$0xff]
        %v344 = vld [vmem:[%s276 + $0x210] sm:$0xff]
        %v345 = vld [vmem:[%s276 + $0x218] sm:$0xff]
        %v346 = vld [vmem:[%s276 + $0x220] sm:$0xff]
        %v347 = vld [vmem:[%s276 + $0x228] sm:$0xff]
        %v348 = vld [vmem:[%s276 + $0x230] sm:$0xff]
        %v349 = vld [vmem:[%s276 + $0x238] sm:$0xff]
        %v350 = vld [vmem:[%s276 + $0x240] sm:$0xff]
        %v351 = vld [vmem:[%s276 + $0x248] sm:$0xff]
        %v352 = vld [vmem:[%s276 + $0x250] sm:$0xff]
        %v353 = vld [vmem:[%s276 + $0x258] sm:$0xff]
        %v354 = vld [vmem:[%s276 + $0x260] sm:$0xff]
        %v355 = vld [vmem:[%s276 + $0x268] sm:$0xff]
        %v356 = vld [vmem:[%s276 + $0x270] sm:$0xff]
        %v357 = vld [vmem:[%s276 + $0x278] sm:$0xff]
        %v358 = vld [vmem:[%s276 + $0x280] sm:$0xff]
        %v359 = vld [vmem:[%s276 + $0x288] sm:$0xff]
        %v360 = vld [vmem:[%s276 + $0x290] sm:$0xff]
        %v361 = vld [vmem:[%s276 + $0x298] sm:$0xff]
        %v362 = vld [vmem:[%s276 + $0x2a0] sm:$0xff]
        %v363 = vld [vmem:[%s276 + $0x2a8] sm:$0xff]
        %v364 = vld [vmem:[%s276 + $0x2b0] sm:$0xff]
        %v365 = vld [vmem:[%s276 + $0x2b8] sm:$0xff]
        %v366 = vld [vmem:[%s276 + $0x2c0] sm:$0xff]
        %v367 = vld [vmem:[%s276 + $0x2c8] sm:$0xff]
        %v368 = vld [vmem:[%s276 + $0x2d0] sm:$0xff]
        %v369 = vld [vmem:[%s276 + $0x2d8] sm:$0xff]
        %v370 = vld [vmem:[%s276 + $0x2e0] sm:$0xff]
        %v371 = vld [vmem:[%s276 + $0x2e8] sm:$0xff]
        %v372 = vld [vmem:[%s276 + $0x2f0] sm:$0xff]
        %v373 = vld [vmem:[%s276 + $0x2f8] sm:$0xff]
        %v374 = vld [vmem:[%s276 + $0x300] sm:$0xff]
        %v375 = vld [vmem:[%s276 + $0x308] sm:$0xff]
        %v376 = vld [vmem:[%s276 + $0x310] sm:$0xff]
        %v377 = vld [vmem:[%s276 + $0x318] sm:$0xff]
        %v378 = vld [vmem:[%s276 + $0x320] sm:$0xff]
        %v379 = vld [vmem:[%s276 + $0x328] sm:$0xff]
        %v380 = vld [vmem:[%s276 + $0x330] sm:$0xff]
        %v381 = vld [vmem:[%s276 + $0x338] sm:$0xff]
        %v382 = vld [vmem:[%s276 + $0x340] sm:$0xff]
        %v383 = vld [vmem:[%s276 + $0x348] sm:$0xff]
        %v384 = vld [vmem:[%s276 + $0x350] sm:$0xff]
        %v385 = vld [vmem:[%s276 + $0x358] sm:$0xff]
        %v386 = vld [vmem:[%s276 + $0x360] sm:$0x1]
        %v387 = vld [vmem:[%s276 + $0x368] sm:$0x1]
        %v388 = vld [vmem:[%s276 + $0x370] sm:$0x1]
        %v389 = vld [vmem:[%s276 + $0x378] sm:$0x1]
        %v390 = vld [vmem:[%s276 + $0x380] sm:$0x1]
        %v391 = vld [vmem:[%s276 + $0x388] sm:$0x1]
        %v392 = vld [vmem:[%s276 + $0x390] sm:$0x1]
        %v393 = vld [vmem:[%s276 + $0x398] sm:$0x1]
        %v394 = vld [vmem:[%s276 + $0x3a0] sm:$0x1]
        %v395 = vld [vmem:[%s276 + $0x3a8] sm:$0x1]
        %v396 = vld [vmem:[%s276 + $0x3b0] sm:$0x1]
        %v397 = vld [vmem:[%s276 + $0x3b8] sm:$0x1]
        %v398 = vld [vmem:[%s276 + $0x3c0] sm:$0x1]
        %v399 = vld [vmem:[%s276 + $0x3c8] sm:$0x1]
        %v400 = vld [vmem:[%s276 + $0x3d0] sm:$0x1]
        %v401 = vld [vmem:[%s276 + $0x3d8] sm:$0x1]
        %v402 = vld [vmem:[%s276 + $0x3e0] sm:$0x1]
        %v403 = vld [vmem:[%s276 + $0x3e8] sm:$0x1]
        %v404 = vmax.f32 %v278, 0.0
        %v405 = vmax.f32 %v279, 0.0
        %v406 = vmax.f32 %v280, 0.0
        %v407 = vmax.f32 %v281, 0.0
        %v408 = vmax.f32 %v282, 0.0
        %v409 = vmax.f32 %v283, 0.0
        %v410 = vmax.f32 %v284, 0.0
        %v411 = vmax.f32 %v285, 0.0
        %v412 = vmax.f32 %v286, 0.0
        %v413 = vmax.f32 %v287, 0.0
        %v414 = vmax.f32 %v288, 0.0
        %v415 = vmax.f32 %v289, 0.0
        %v416 = vmax.f32 %v290, 0.0
        %v417 = vmax.f32 %v291, 0.0
        %v418 = vmax.f32 %v292, 0.0
        %v419 = vmax.f32 %v293, 0.0
        %v420 = vmax.f32 %v294, 0.0
        %v421 = vmax.f32 %v295, 0.0
        %v422 = vmax.f32 %v296, 0.0
        %v423 = vmax.f32 %v297, 0.0
        %v424 = vmax.f32 %v298, 0.0
        %v425 = vmax.f32 %v299, 0.0
        %v426 = vmax.f32 %v300, 0.0
        %v427 = vmax.f32 %v301, 0.0
        %v428 = vmax.f32 %v302, 0.0
        %v429 = vmax.f32 %v303, 0.0
        %v430 = vmax.f32 %v304, 0.0
        %v431 = vmax.f32 %v305, 0.0
        %v432 = vmax.f32 %v306, 0.0
        %v433 = vmax.f32 %v307, 0.0
        %v434 = vmax.f32 %v308, 0.0
        %v435 = vmax.f32 %v309, 0.0
        %v436 = vmax.f32 %v310, 0.0
        %v437 = vmax.f32 %v311, 0.0
        %v438 = vmax.f32 %v312, 0.0
        %v439 = vmax.f32 %v313, 0.0
        %v440 = vmax.f32 %v314, 0.0
        %v441 = vmax.f32 %v315, 0.0
        %v442 = vmax.f32 %v316, 0.0
        %v443 = vmax.f32 %v317, 0.0
        %v444 = vmax.f32 %v318, 0.0
        %v445 = vmax.f32 %v319, 0.0
        %v446 = vmax.f32 %v320, 0.0
        %v447 = vmax.f32 %v321, 0.0
        %v448 = vmax.f32 %v322, 0.0
        %v449 = vmax.f32 %v323, 0.0
        %v450 = vmax.f32 %v324, 0.0
        %v451 = vmax.f32 %v325, 0.0
        %v452 = vmax.f32 %v326, 0.0
        %v453 = vmax.f32 %v327, 0.0
        %v454 = vmax.f32 %v328, 0.0
        %v455 = vmax.f32 %v329, 0.0
        %v456 = vmax.f32 %v330, 0.0
        %v457 = vmax.f32 %v331, 0.0
        %v458 = vmax.f32 %v332, 0.0
        %v459 = vmax.f32 %v333, 0.0
        %v460 = vmax.f32 %v334, 0.0
        %v461 = vmax.f32 %v335, 0.0
        %v462 = vmax.f32 %v336, 0.0
        %v463 = vmax.f32 %v337, 0.0
        %v464 = vmax.f32 %v338, 0.0
        %v465 = vmax.f32 %v339, 0.0
        %v466 = vmax.f32 %v340, 0.0
        %v467 = vmax.f32 %v341, 0.0
        %v468 = vmax.f32 %v342, 0.0
        %v469 = vmax.f32 %v343, 0.0
        %v470 = vmax.f32 %v344, 0.0
        %v471 = vmax.f32 %v345, 0.0
        %v472 = vmax.f32 %v346, 0.0
        %v473 = vmax.f32 %v347, 0.0
        %v474 = vmax.f32 %v348, 0.0
        %v475 = vmax.f32 %v349, 0.0
        %v476 = vmax.f32 %v350, 0.0
        %v477 = vmax.f32 %v351, 0.0
        %v478 = vmax.f32 %v352, 0.0
        %v479 = vmax.f32 %v353, 0.0
        %v480 = vmax.f32 %v354, 0.0
        %v481 = vmax.f32 %v355, 0.0
        %v482 = vmax.f32 %v356, 0.0
        %v483 = vmax.f32 %v357, 0.0
        %v484 = vmax.f32 %v358, 0.0
        %v485 = vmax.f32 %v359, 0.0
        %v486 = vmax.f32 %v360, 0.0
        %v487 = vmax.f32 %v361, 0.0
        %v488 = vmax.f32 %v362, 0.0
        %v489 = vmax.f32 %v363, 0.0
        %v490 = vmax.f32 %v364, 0.0
        %v491 = vmax.f32 %v365, 0.0
        %v492 = vmax.f32 %v366, 0.0
        %v493 = vmax.f32 %v367, 0.0
        %v494 = vmax.f32 %v368, 0.0
        %v495 = vmax.f32 %v369, 0.0
        %v496 = vmax.f32 %v370, 0.0
        %v497 = vmax.f32 %v371, 0.0
        %v498 = vmax.f32 %v372, 0.0
        %v499 = vmax.f32 %v373, 0.0
        %v500 = vmax.f32 %v374, 0.0
        %v501 = vmax.f32 %v375, 0.0
        %v502 = vmax.f32 %v376, 0.0
        %v503 = vmax.f32 %v377, 0.0
        %v504 = vmax.f32 %v378, 0.0
        %v505 = vmax.f32 %v379, 0.0
        %v506 = vmax.f32 %v380, 0.0
        %v507 = vmax.f32 %v381, 0.0
        %v508 = vmax.f32 %v382, 0.0
        %v509 = vmax.f32 %v383, 0.0
        %v510 = vmax.f32 %v384, 0.0
        %v511 = vmax.f32 %v385, 0.0
        %v512 = vmax.f32 %v386, 0.0
        %v513 = vmax.f32 %v387, 0.0
        %v514 = vmax.f32 %v388, 0.0
        %v515 = vmax.f32 %v389, 0.0
        %v516 = vmax.f32 %v390, 0.0
        %v517 = vmax.f32 %v391, 0.0
        %v518 = vmax.f32 %v392, 0.0
        %v519 = vmax.f32 %v393, 0.0
        %v520 = vmax.f32 %v394, 0.0
        %v521 = vmax.f32 %v395, 0.0
        %v522 = vmax.f32 %v396, 0.0
        %v523 = vmax.f32 %v397, 0.0
        %v524 = vmax.f32 %v398, 0.0
        %v525 = vmax.f32 %v399, 0.0
        %v526 = vmax.f32 %v400, 0.0
        %v527 = vmax.f32 %v401, 0.0
        %v528 = vmax.f32 %v402, 0.0
        %v529 = vmax.f32 %v403, 0.0
        %v530 = vpack.c.bf16 %v422, %v404
        %v531 = vpack.c.bf16 %v423, %v405
        %v532 = vpack.c.bf16 %v424, %v406
        %v533 = vpack.c.bf16 %v425, %v407
        %v534 = vpack.c.bf16 %v426, %v408
        %v535 = vpack.c.bf16 %v427, %v409
        %v536 = vpack.c.bf16 %v428, %v410
        %v537 = vpack.c.bf16 %v429, %v411
        %v538 = vpack.c.bf16 %v430, %v412
        %v539 = vpack.c.bf16 %v431, %v413
        %v540 = vpack.c.bf16 %v432, %v414
        %v541 = vpack.c.bf16 %v433, %v415
        %v542 = vpack.c.bf16 %v434, %v416
        %v543 = vpack.c.bf16 %v435, %v417
        %v544 = vpack.c.bf16 %v436, %v418
        %v545 = vpack.c.bf16 %v437, %v419
        %v546 = vpack.c.bf16 %v438, %v420
        %v547 = vpack.c.bf16 %v439, %v421
        %v548 = vpack.c.bf16 %v458, %v440
        %v549 = vpack.c.bf16 %v459, %v441
        %v550 = vpack.c.bf16 %v460, %v442
        %v551 = vpack.c.bf16 %v461, %v443
        %v552 = vpack.c.bf16 %v462, %v444
        %v553 = vpack.c.bf16 %v463, %v445
        %v554 = vpack.c.bf16 %v464, %v446
        %v555 = vpack.c.bf16 %v465, %v447
        %v556 = vpack.c.bf16 %v466, %v448
        %v557 = vpack.c.bf16 %v467, %v449
        %v558 = vpack.c.bf16 %v468, %v450
        %v559 = vpack.c.bf16 %v469, %v451
        %v560 = vpack.c.bf16 %v470, %v452
        %v561 = vpack.c.bf16 %v471, %v453
        %v562 = vpack.c.bf16 %v472, %v454
        %v563 = vpack.c.bf16 %v473, %v455
        %v564 = vpack.c.bf16 %v474, %v456
        %v565 = vpack.c.bf16 %v475, %v457
        %v566 = vpack.c.bf16 %v494, %v476
        %v567 = vpack.c.bf16 %v495, %v477
        %v568 = vpack.c.bf16 %v496, %v478
        %v569 = vpack.c.bf16 %v497, %v479
        %v570 = vpack.c.bf16 %v498, %v480
        %v571 = vpack.c.bf16 %v499, %v481
        %v572 = vpack.c.bf16 %v500, %v482
        %v573 = vpack.c.bf16 %v501, %v483
        %v574 = vpack.c.bf16 %v502, %v484
        %v575 = vpack.c.bf16 %v503, %v485
        %v576 = vpack.c.bf16 %v504, %v486
        %v577 = vpack.c.bf16 %v505, %v487
        %v578 = vpack.c.bf16 %v506, %v488
        %v579 = vpack.c.bf16 %v507, %v489
        %v580 = vpack.c.bf16 %v508, %v490
        %v581 = vpack.c.bf16 %v509, %v491
        %v582 = vpack.c.bf16 %v510, %v492
        %v583 = vpack.c.bf16 %v511, %v493
        %v584 = vpack.c.bf16 %v512, %v512
        %v585 = vpack.c.bf16 %v513, %v513
        %v586 = vpack.c.bf16 %v514, %v514
        %v587 = vpack.c.bf16 %v515, %v515
        %v588 = vpack.c.bf16 %v516, %v516
        %v589 = vpack.c.bf16 %v517, %v517
        %v590 = vpack.c.bf16 %v518, %v518
        %v591 = vpack.c.bf16 %v519, %v519
        %v592 = vpack.c.bf16 %v520, %v520
        %v593 = vpack.c.bf16 %v521, %v521
        %v594 = vpack.c.bf16 %v522, %v522
        %v595 = vpack.c.bf16 %v523, %v523
        %v596 = vpack.c.bf16 %v524, %v524
        %v597 = vpack.c.bf16 %v525, %v525
        %v598 = vpack.c.bf16 %v526, %v526
        %v599 = vpack.c.bf16 %v527, %v527
        %v600 = vpack.c.bf16 %v528, %v528
        %v601 = vpack.c.bf16 %v529, %v529
        %v602 = vld [vmem:[#allocation2] sm:$0xff]
        %v603 = vld [vmem:[#allocation2 + $0x8] sm:$0xff]
        %v604 = vld [vmem:[#allocation2 + $0x10] sm:$0xff]
        %v605 = vld [vmem:[#allocation2 + $0x18] sm:$0xff]
        %v606 = vld [vmem:[#allocation2 + $0x20] sm:$0xff]
        %v607 = vld [vmem:[#allocation2 + $0x28] sm:$0xff]
        %v608 = vld [vmem:[#allocation2 + $0x30] sm:$0xff]
        %v609 = vld [vmem:[#allocation2 + $0x38] sm:$0xff]
        %v610 = vld [vmem:[#allocation2 + $0x40] sm:$0xff]
        %v611 = vld [vmem:[#allocation2 + $0x48] sm:$0xff]
        %v612 = vld [vmem:[#allocation2 + $0x50] sm:$0xff]
        %v613 = vld [vmem:[#allocation2 + $0x58] sm:$0xff]
        %v614 = vld [vmem:[#allocation2 + $0x60] sm:$0xff]
        %v615 = vld [vmem:[#allocation2 + $0x68] sm:$0xff]
        %v616 = vld [vmem:[#allocation2 + $0x70] sm:$0xff]
        %v617 = vld [vmem:[#allocation2 + $0x78] sm:$0xff]
        %v618 = vld [vmem:[#allocation2 + $0x80] sm:$0xff]
        %v619 = vld [vmem:[#allocation2 + $0x88] sm:$0xff]
        %v620 = vld [vmem:[#allocation2 + $0x90] sm:$0xff]
        %v621 = vld [vmem:[#allocation2 + $0x98] sm:$0xff]
        %v622 = vld [vmem:[#allocation2 + $0xa0] sm:$0xff]
        %v623 = vld [vmem:[#allocation2 + $0xa8] sm:$0xff]
        %v624 = vld [vmem:[#allocation2 + $0xb0] sm:$0xff]
        %v625 = vld [vmem:[#allocation2 + $0xb8] sm:$0xff]
        %v626 = vld [vmem:[#allocation2 + $0xc0] sm:$0xff]
        %v627 = vld [vmem:[#allocation2 + $0xc8] sm:$0xff]
        %v628 = vld [vmem:[#allocation2 + $0xd0] sm:$0xff]
        %v629 = vld [vmem:[#allocation2 + $0xd8] sm:$0xff]
        %v630 = vld [vmem:[#allocation2 + $0xe0] sm:$0xff]
        %v631 = vld [vmem:[#allocation2 + $0xe8] sm:$0xff]
        %v632 = vld [vmem:[#allocation2 + $0xf0] sm:$0xff]
        %v633 = vld [vmem:[#allocation2 + $0xf8] sm:$0xff]
        %v634 = vld [vmem:[#allocation2 + $0x100] sm:$0xff]
        %v635 = vld [vmem:[#allocation2 + $0x108] sm:$0xff]
        %v636 = vld [vmem:[#allocation2 + $0x110] sm:$0xff]
        %v637 = vld [vmem:[#allocation2 + $0x118] sm:$0xff]
        %v638 = vld [vmem:[#allocation2 + $0x120] sm:$0xff]
        %v639 = vld [vmem:[#allocation2 + $0x128] sm:$0xff]
        %v640 = vld [vmem:[#allocation2 + $0x130] sm:$0xff]
        %v641 = vld [vmem:[#allocation2 + $0x138] sm:$0xff]
        %v642 = vld [vmem:[#allocation2 + $0x140] sm:$0xff]
        %v643 = vld [vmem:[#allocation2 + $0x148] sm:$0xff]
        %v644 = vld [vmem:[#allocation2 + $0x150] sm:$0xff]
        %v645 = vld [vmem:[#allocation2 + $0x158] sm:$0xff]
        %v646 = vld [vmem:[#allocation2 + $0x160] sm:$0xff]
        %v647 = vld [vmem:[#allocation2 + $0x168] sm:$0xff]
        %v648 = vld [vmem:[#allocation2 + $0x170] sm:$0xff]
        %v649 = vld [vmem:[#allocation2 + $0x178] sm:$0xff]
        %v650 = vld [vmem:[#allocation2 + $0x180] sm:$0xff]
        %v651 = vld [vmem:[#allocation2 + $0x188] sm:$0xff]
        %v652 = vld [vmem:[#allocation2 + $0x190] sm:$0xff]
        %v653 = vld [vmem:[#allocation2 + $0x198] sm:$0xff]
        %v654 = vld [vmem:[#allocation2 + $0x1a0] sm:$0xff]
        %v655 = vld [vmem:[#allocation2 + $0x1a8] sm:$0xff]
        %v656 = vld [vmem:[#allocation2 + $0x1b0] sm:$0xff]
        %v657 = vld [vmem:[#allocation2 + $0x1b8] sm:$0xff]
        %v658 = vld [vmem:[#allocation2 + $0x1c0] sm:$0xff]
        %v659 = vld [vmem:[#allocation2 + $0x1c8] sm:$0xff]
        %v660 = vld [vmem:[#allocation2 + $0x1d0] sm:$0xff]
        %v661 = vld [vmem:[#allocation2 + $0x1d8] sm:$0xff]
        %v662 = vld [vmem:[#allocation2 + $0x1e0] sm:$0xff]
        %v663 = vld [vmem:[#allocation2 + $0x1e8] sm:$0xff]
        %v664 = vld [vmem:[#allocation2 + $0x1f0] sm:$0xff]
        %v665 = vld [vmem:[#allocation2 + $0x1f8] sm:$0xff]
        %v666 = vld [vmem:[#allocation2 + $0x200] sm:$0xff]
        %v667 = vld [vmem:[#allocation2 + $0x208] sm:$0xff]
        %v668 = vld [vmem:[#allocation2 + $0x210] sm:$0xff]
        %v669 = vld [vmem:[#allocation2 + $0x218] sm:$0xff]
        %v670 = vld [vmem:[#allocation2 + $0x220] sm:$0xff]
        %v671 = vld [vmem:[#allocation2 + $0x228] sm:$0xff]
        %v672 = vld [vmem:[#allocation2 + $0x230] sm:$0xff]
        %v673 = vld [vmem:[#allocation2 + $0x238] sm:$0xff]
        %v674 = vld [vmem:[#allocation2 + $0x240] sm:$0xff]
        %v675 = vld [vmem:[#allocation2 + $0x248] sm:$0xff]
        %v676 = vld [vmem:[#allocation2 + $0x250] sm:$0xff]
        %v677 = vld [vmem:[#allocation2 + $0x258] sm:$0xff]
        %v678 = vld [vmem:[#allocation2 + $0x260] sm:$0xff]
        %v679 = vld [vmem:[#allocation2 + $0x268] sm:$0xff]
        %v680 = vld [vmem:[#allocation2 + $0x270] sm:$0xff]
        %v681 = vld [vmem:[#allocation2 + $0x278] sm:$0xff]
        %v682 = vld [vmem:[#allocation2 + $0x280] sm:$0xff]
        %v683 = vld [vmem:[#allocation2 + $0x288] sm:$0xff]
        %v684 = vld [vmem:[#allocation2 + $0x290] sm:$0xff]
        %v685 = vld [vmem:[#allocation2 + $0x298] sm:$0xff]
        %v686 = vld [vmem:[#allocation2 + $0x2a0] sm:$0xff]
        %v687 = vld [vmem:[#allocation2 + $0x2a8] sm:$0xff]
        %v688 = vld [vmem:[#allocation2 + $0x2b0] sm:$0xff]
        %v689 = vld [vmem:[#allocation2 + $0x2b8] sm:$0xff]
        %v690 = vld [vmem:[#allocation2 + $0x2c0] sm:$0xff]
        %v691 = vld [vmem:[#allocation2 + $0x2c8] sm:$0xff]
        %v692 = vld [vmem:[#allocation2 + $0x2d0] sm:$0xff]
        %v693 = vld [vmem:[#allocation2 + $0x2d8] sm:$0xff]
        %v694 = vld [vmem:[#allocation2 + $0x2e0] sm:$0xff]
        %v695 = vld [vmem:[#allocation2 + $0x2e8] sm:$0xff]
        %v696 = vld [vmem:[#allocation2 + $0x2f0] sm:$0xff]
        %v697 = vld [vmem:[#allocation2 + $0x2f8] sm:$0xff]
        %v698 = vld [vmem:[#allocation2 + $0x300] sm:$0xff]
        %v699 = vld [vmem:[#allocation2 + $0x308] sm:$0xff]
        %v700 = vld [vmem:[#allocation2 + $0x310] sm:$0xff]
        %v701 = vld [vmem:[#allocation2 + $0x318] sm:$0xff]
        %v702 = vld [vmem:[#allocation2 + $0x320] sm:$0xff]
        %v703 = vld [vmem:[#allocation2 + $0x328] sm:$0xff]
        %v704 = vld [vmem:[#allocation2 + $0x330] sm:$0xff]
        %v705 = vld [vmem:[#allocation2 + $0x338] sm:$0xff]
        %v706 = vld [vmem:[#allocation2 + $0x340] sm:$0xff]
        %v707 = vld [vmem:[#allocation2 + $0x348] sm:$0xff]
        %v708 = vld [vmem:[#allocation2 + $0x350] sm:$0xff]
        %v709 = vld [vmem:[#allocation2 + $0x358] sm:$0xff]
        %v710 = vld [vmem:[#allocation2 + $0x360] sm:$0xff]
        %v711 = vld [vmem:[#allocation2 + $0x368] sm:$0xff]
        %v712 = vld [vmem:[#allocation2 + $0x370] sm:$0xff]
        %v713 = vld [vmem:[#allocation2 + $0x378] sm:$0xff]
        %v714 = vld [vmem:[#allocation2 + $0x380] sm:$0xff]
        %v715 = vld [vmem:[#allocation2 + $0x388] sm:$0xff]
        %v716 = vld [vmem:[#allocation2 + $0x390] sm:$0xff]
        %v717 = vld [vmem:[#allocation2 + $0x398] sm:$0xff]
        %v718 = vld [vmem:[#allocation2 + $0x3a0] sm:$0xff]
        %v719 = vld [vmem:[#allocation2 + $0x3a8] sm:$0xff]
        %v720 = vld [vmem:[#allocation2 + $0x3b0] sm:$0xff]
        %v721 = vld [vmem:[#allocation2 + $0x3b8] sm:$0xff]
        %v722 = vld [vmem:[#allocation2 + $0x3c0] sm:$0xff]
        %v723 = vld [vmem:[#allocation2 + $0x3c8] sm:$0xff]
        %v724 = vld [vmem:[#allocation2 + $0x3d0] sm:$0xff]
        %v725 = vld [vmem:[#allocation2 + $0x3d8] sm:$0xff]
        %v726 = vld [vmem:[#allocation2 + $0x3e0] sm:$0xff]
        %v727 = vld [vmem:[#allocation2 + $0x3e8] sm:$0xff]
        %v728 = vld [vmem:[#allocation2 + $0x3f0] sm:$0xff]
        %v729 = vld [vmem:[#allocation2 + $0x3f8] sm:$0xff]
        %v730 = vld [vmem:[#allocation2 + $0x400] sm:$0xff]
        %v731 = vld [vmem:[#allocation2 + $0x408] sm:$0xff]
        %v732 = vld [vmem:[#allocation2 + $0x410] sm:$0xff]
        %v733 = vld [vmem:[#allocation2 + $0x418] sm:$0xff]
        %v734 = vld [vmem:[#allocation2 + $0x420] sm:$0xff]
        %v735 = vld [vmem:[#allocation2 + $0x428] sm:$0xff]
        %v736 = vld [vmem:[#allocation2 + $0x430] sm:$0xff]
        %v737 = vld [vmem:[#allocation2 + $0x438] sm:$0xff]
        %v738 = vld [vmem:[#allocation2 + $0x440] sm:$0xff]
        %v739 = vld [vmem:[#allocation2 + $0x448] sm:$0xff]
        %v740 = vld [vmem:[#allocation2 + $0x450] sm:$0xff]
        %v741 = vld [vmem:[#allocation2 + $0x458] sm:$0xff]
        %v742 = vld [vmem:[#allocation2 + $0x460] sm:$0xff]
        %v743 = vld [vmem:[#allocation2 + $0x468] sm:$0xff]
        %v744 = vld [vmem:[#allocation2 + $0x470] sm:$0xff]
        %v745 = vld [vmem:[#allocation2 + $0x478] sm:$0xff]
        %v746 = vld [vmem:[#allocation2 + $0x480] sm:$0xff]
        %v747 = vld [vmem:[#allocation2 + $0x488] sm:$0xff]
        %v748 = vld [vmem:[#allocation2 + $0x490] sm:$0xff]
        %v749 = vld [vmem:[#allocation2 + $0x498] sm:$0xff]
        %v750 = vld [vmem:[#allocation2 + $0x4a0] sm:$0xff]
        %v751 = vld [vmem:[#allocation2 + $0x4a8] sm:$0xff]
        %v752 = vld [vmem:[#allocation2 + $0x4b0] sm:$0xff]
        %v753 = vld [vmem:[#allocation2 + $0x4b8] sm:$0xff]
        %v754 = vld [vmem:[#allocation2 + $0x4c0] sm:$0xff]
        %v755 = vld [vmem:[#allocation2 + $0x4c8] sm:$0xff]
        %v756 = vld [vmem:[#allocation2 + $0x4d0] sm:$0xff]
        %v757 = vld [vmem:[#allocation2 + $0x4d8] sm:$0xff]
        %v758 = vld [vmem:[#allocation2 + $0x4e0] sm:$0xff]
        %v759 = vld [vmem:[#allocation2 + $0x4e8] sm:$0xff]
        %v760 = vld [vmem:[#allocation2 + $0x4f0] sm:$0xff]
        %v761 = vld [vmem:[#allocation2 + $0x4f8] sm:$0xff]
        %v762 = vld [vmem:[#allocation2 + $0x500] sm:$0xff]
        %v763 = vld [vmem:[#allocation2 + $0x508] sm:$0xff]
        %v764 = vld [vmem:[#allocation2 + $0x510] sm:$0xff]
        %v765 = vld [vmem:[#allocation2 + $0x518] sm:$0xff]
        %v766 = vld [vmem:[#allocation2 + $0x520] sm:$0xff]
        %v767 = vld [vmem:[#allocation2 + $0x528] sm:$0xff]
        %v768 = vld [vmem:[#allocation2 + $0x530] sm:$0xff]
        %v769 = vld [vmem:[#allocation2 + $0x538] sm:$0xff]
        %v770 = vld [vmem:[#allocation2 + $0x540] sm:$0xff]
        %v771 = vld [vmem:[#allocation2 + $0x548] sm:$0xff]
        %v772 = vld [vmem:[#allocation2 + $0x550] sm:$0xff]
        %v773 = vld [vmem:[#allocation2 + $0x558] sm:$0xff]
        %v774 = vld [vmem:[#allocation2 + $0x560] sm:$0xff]
        %v775 = vld [vmem:[#allocation2 + $0x568] sm:$0xff]
        %v776 = vld [vmem:[#allocation2 + $0x570] sm:$0xff]
        %v777 = vld [vmem:[#allocation2 + $0x578] sm:$0xff]
        %v778 = vld [vmem:[#allocation2 + $0x580] sm:$0xff]
        %v779 = vld [vmem:[#allocation2 + $0x588] sm:$0xff]
        %v780 = vld [vmem:[#allocation2 + $0x590] sm:$0xff]
        %v781 = vld [vmem:[#allocation2 + $0x598] sm:$0xff]
        %v782 = vld [vmem:[#allocation2 + $0x5a0] sm:$0xff]
        %v783 = vld [vmem:[#allocation2 + $0x5a8] sm:$0xff]
        %v784 = vld [vmem:[#allocation2 + $0x5b0] sm:$0xff]
        %v785 = vld [vmem:[#allocation2 + $0x5b8] sm:$0xff]
        %v786 = vld [vmem:[#allocation2 + $0x5c0] sm:$0xff]
        %v787 = vld [vmem:[#allocation2 + $0x5c8] sm:$0xff]
        %v788 = vld [vmem:[#allocation2 + $0x5d0] sm:$0xff]
        %v789 = vld [vmem:[#allocation2 + $0x5d8] sm:$0xff]
        %v790 = vld [vmem:[#allocation2 + $0x5e0] sm:$0xff]
        %v791 = vld [vmem:[#allocation2 + $0x5e8] sm:$0xff]
        %v792 = vld [vmem:[#allocation2 + $0x5f0] sm:$0xff]
        %v793 = vld [vmem:[#allocation2 + $0x5f8] sm:$0xff]
        %v794 = vld [vmem:[#allocation2 + $0x600] sm:$0xff]
        %v795 = vld [vmem:[#allocation2 + $0x608] sm:$0xff]
        %v796 = vld [vmem:[#allocation2 + $0x610] sm:$0xff]
        %v797 = vld [vmem:[#allocation2 + $0x618] sm:$0xff]
        %v798 = vld [vmem:[#allocation2 + $0x620] sm:$0xff]
        %v799 = vld [vmem:[#allocation2 + $0x628] sm:$0xff]
        %v800 = vld [vmem:[#allocation2 + $0x630] sm:$0xff]
        %v801 = vld [vmem:[#allocation2 + $0x638] sm:$0xff]
        %v802 = vld [vmem:[#allocation2 + $0x640] sm:$0xff]
        %v803 = vld [vmem:[#allocation2 + $0x648] sm:$0xff]
        %v804 = vld [vmem:[#allocation2 + $0x650] sm:$0xff]
        %v805 = vld [vmem:[#allocation2 + $0x658] sm:$0xff]
        %v806 = vld [vmem:[#allocation2 + $0x660] sm:$0xff]
        %v807 = vld [vmem:[#allocation2 + $0x668] sm:$0xff]
        %v808 = vld [vmem:[#allocation2 + $0x670] sm:$0xff]
        %v809 = vld [vmem:[#allocation2 + $0x678] sm:$0xff]
        %v810 = vld [vmem:[#allocation2 + $0x680] sm:$0xff]
        %v811 = vld [vmem:[#allocation2 + $0x688] sm:$0xff]
        %v812 = vld [vmem:[#allocation2 + $0x690] sm:$0xff]
        %v813 = vld [vmem:[#allocation2 + $0x698] sm:$0xff]
        %v814 = vld [vmem:[#allocation2 + $0x6a0] sm:$0xff]
        %v815 = vld [vmem:[#allocation2 + $0x6a8] sm:$0xff]
        %v816 = vld [vmem:[#allocation2 + $0x6b0] sm:$0xff]
        %v817 = vld [vmem:[#allocation2 + $0x6b8] sm:$0xff]
        %v818 = vld [vmem:[#allocation2 + $0x6c0] sm:$0xff]
        %v819 = vld [vmem:[#allocation2 + $0x6c8] sm:$0xff]
        %v820 = vld [vmem:[#allocation2 + $0x6d0] sm:$0xff]
        %v821 = vld [vmem:[#allocation2 + $0x6d8] sm:$0xff]
        %v822 = vld [vmem:[#allocation2 + $0x6e0] sm:$0xff]
        %v823 = vld [vmem:[#allocation2 + $0x6e8] sm:$0xff]
        %v824 = vld [vmem:[#allocation2 + $0x6f0] sm:$0xff]
        %v825 = vld [vmem:[#allocation2 + $0x6f8] sm:$0xff]
        %v826 = vld [vmem:[#allocation2 + $0x700] sm:$0xff]
        %v827 = vld [vmem:[#allocation2 + $0x708] sm:$0xff]
        %v828 = vld [vmem:[#allocation2 + $0x710] sm:$0xff]
        %v829 = vld [vmem:[#allocation2 + $0x718] sm:$0xff]
        %v830 = vld [vmem:[#allocation2 + $0x720] sm:$0xff]
        %v831 = vld [vmem:[#allocation2 + $0x728] sm:$0xff]
        %v832 = vld [vmem:[#allocation2 + $0x730] sm:$0xff]
        %v833 = vld [vmem:[#allocation2 + $0x738] sm:$0xff]
        %v834 = vld [vmem:[#allocation2 + $0x740] sm:$0xff]
        %v835 = vld [vmem:[#allocation2 + $0x748] sm:$0xff]
        %v836 = vld [vmem:[#allocation2 + $0x750] sm:$0xff]
        %v837 = vld [vmem:[#allocation2 + $0x758] sm:$0xff]
        %v838 = vld [vmem:[#allocation2 + $0x760] sm:$0xff]
        %v839 = vld [vmem:[#allocation2 + $0x768] sm:$0xff]
        %v840 = vld [vmem:[#allocation2 + $0x770] sm:$0xff]
        %v841 = vld [vmem:[#allocation2 + $0x778] sm:$0xff]
        %v842 = vld [vmem:[#allocation2 + $0x780] sm:$0xff]
        %v843 = vld [vmem:[#allocation2 + $0x788] sm:$0xff]
        %v844 = vld [vmem:[#allocation2 + $0x790] sm:$0xff]
        %v845 = vld [vmem:[#allocation2 + $0x798] sm:$0xff]
        %v846 = vld [vmem:[#allocation2 + $0x7a0] sm:$0xff]
        %v847 = vld [vmem:[#allocation2 + $0x7a8] sm:$0xff]
        %v848 = vld [vmem:[#allocation2 + $0x7b0] sm:$0xff]
        %v849 = vld [vmem:[#allocation2 + $0x7b8] sm:$0xff]
        %v850 = vld [vmem:[#allocation2 + $0x7c0] sm:$0xff]
        %v851 = vld [vmem:[#allocation2 + $0x7c8] sm:$0xff]
        %v852 = vld [vmem:[#allocation2 + $0x7d0] sm:$0xff]
        %v853 = vld [vmem:[#allocation2 + $0x7d8] sm:$0xff]
        %v854 = vld [vmem:[#allocation2 + $0x7e0] sm:$0xff]
        %v855 = vld [vmem:[#allocation2 + $0x7e8] sm:$0xff]
        %v856 = vld [vmem:[#allocation2 + $0x7f0] sm:$0xff]
        %v857 = vld [vmem:[#allocation2 + $0x7f8] sm:$0xff]
        %v858 = vld [vmem:[#allocation2 + $0x800] sm:$0xff]
        %v859 = vld [vmem:[#allocation2 + $0x808] sm:$0xff]
        %v860 = vld [vmem:[#allocation2 + $0x810] sm:$0xff]
        %v861 = vld [vmem:[#allocation2 + $0x818] sm:$0xff]
        %v862 = vld [vmem:[#allocation2 + $0x820] sm:$0xff]
        %v863 = vld [vmem:[#allocation2 + $0x828] sm:$0xff]
        %v864 = vld [vmem:[#allocation2 + $0x830] sm:$0xff]
        %v865 = vld [vmem:[#allocation2 + $0x838] sm:$0xff]
        %v866 = vld [vmem:[#allocation2 + $0x840] sm:$0xff]
        %v867 = vld [vmem:[#allocation2 + $0x848] sm:$0xff]
        %v868 = vld [vmem:[#allocation2 + $0x850] sm:$0xff]
        %v869 = vld [vmem:[#allocation2 + $0x858] sm:$0xff]
        %v870 = vld [vmem:[#allocation2 + $0x860] sm:$0xff]
        %v871 = vld [vmem:[#allocation2 + $0x868] sm:$0xff]
        %v872 = vld [vmem:[#allocation2 + $0x870] sm:$0xff]
        %v873 = vld [vmem:[#allocation2 + $0x878] sm:$0xff]
        %v874 = vld [vmem:[#allocation2 + $0x880] sm:$0xff]
        %v875 = vld [vmem:[#allocation2 + $0x888] sm:$0xff]
        %v876 = vld [vmem:[#allocation2 + $0x890] sm:$0xff]
        %v877 = vld [vmem:[#allocation2 + $0x898] sm:$0xff]
        %v878 = vld [vmem:[#allocation2 + $0x8a0] sm:$0xff]
        %v879 = vld [vmem:[#allocation2 + $0x8a8] sm:$0xff]
        %v880 = vld [vmem:[#allocation2 + $0x8b0] sm:$0xff]
        %v881 = vld [vmem:[#allocation2 + $0x8b8] sm:$0xff]
        %v882 = vld [vmem:[#allocation2 + $0x8c0] sm:$0xff]
        %v883 = vld [vmem:[#allocation2 + $0x8c8] sm:$0xff]
        %v884 = vld [vmem:[#allocation2 + $0x8d0] sm:$0xff]
        %v885 = vld [vmem:[#allocation2 + $0x8d8] sm:$0xff]
        %v886 = vld [vmem:[#allocation2 + $0x8e0] sm:$0xff]
        %v887 = vld [vmem:[#allocation2 + $0x8e8] sm:$0xff]
        %v888 = vld [vmem:[#allocation2 + $0x8f0] sm:$0xff]
        %v889 = vld [vmem:[#allocation2 + $0x8f8] sm:$0xff]
        %v890 = vld [vmem:[#allocation2 + $0x900] sm:$0xff]
        %v891 = vld [vmem:[#allocation2 + $0x908] sm:$0xff]
        %v892 = vld [vmem:[#allocation2 + $0x910] sm:$0xff]
        %v893 = vld [vmem:[#allocation2 + $0x918] sm:$0xff]
        %v894 = vld [vmem:[#allocation2 + $0x920] sm:$0xff]
        %v895 = vld [vmem:[#allocation2 + $0x928] sm:$0xff]
        %v896 = vld [vmem:[#allocation2 + $0x930] sm:$0xff]
        %v897 = vld [vmem:[#allocation2 + $0x938] sm:$0xff]
        %v898 = vld [vmem:[#allocation2 + $0x940] sm:$0xff]
        %v899 = vld [vmem:[#allocation2 + $0x948] sm:$0xff]
        %v900 = vld [vmem:[#allocation2 + $0x950] sm:$0xff]
        %v901 = vld [vmem:[#allocation2 + $0x958] sm:$0xff]
        %v902 = vld [vmem:[#allocation2 + $0x960] sm:$0xff]
        %v903 = vld [vmem:[#allocation2 + $0x968] sm:$0xff]
        %v904 = vld [vmem:[#allocation2 + $0x970] sm:$0xff]
        %v905 = vld [vmem:[#allocation2 + $0x978] sm:$0xff]
        %v906 = vld [vmem:[#allocation2 + $0x980] sm:$0xff]
        %v907 = vld [vmem:[#allocation2 + $0x988] sm:$0xff]
        %v908 = vld [vmem:[#allocation2 + $0x990] sm:$0xff]
        %v909 = vld [vmem:[#allocation2 + $0x998] sm:$0xff]
        %v910 = vld [vmem:[#allocation2 + $0x9a0] sm:$0xff]
        %v911 = vld [vmem:[#allocation2 + $0x9a8] sm:$0xff]
        %v912 = vld [vmem:[#allocation2 + $0x9b0] sm:$0xff]
        %v913 = vld [vmem:[#allocation2 + $0x9b8] sm:$0xff]
        %v914 = vld [vmem:[#allocation2 + $0x9c0] sm:$0xff]
        %v915 = vld [vmem:[#allocation2 + $0x9c8] sm:$0xff]
        %v916 = vld [vmem:[#allocation2 + $0x9d0] sm:$0xff]
        %v917 = vld [vmem:[#allocation2 + $0x9d8] sm:$0xff]
        %v918 = vld [vmem:[#allocation2 + $0x9e0] sm:$0xff]
        %v919 = vld [vmem:[#allocation2 + $0x9e8] sm:$0xff]
        %v920 = vld [vmem:[#allocation2 + $0x9f0] sm:$0xff]
        %v921 = vld [vmem:[#allocation2 + $0x9f8] sm:$0xff]
        %v922 = vld [vmem:[#allocation2 + $0xa00] sm:$0xff]
        %v923 = vld [vmem:[#allocation2 + $0xa08] sm:$0xff]
        %v924 = vld [vmem:[#allocation2 + $0xa10] sm:$0xff]
        %v925 = vld [vmem:[#allocation2 + $0xa18] sm:$0xff]
        %v926 = vld [vmem:[#allocation2 + $0xa20] sm:$0xff]
        %v927 = vld [vmem:[#allocation2 + $0xa28] sm:$0xff]
        %v928 = vld [vmem:[#allocation2 + $0xa30] sm:$0xff]
        %v929 = vld [vmem:[#allocation2 + $0xa38] sm:$0xff]
        %v930 = vld [vmem:[#allocation2 + $0xa40] sm:$0xff]
        %v931 = vld [vmem:[#allocation2 + $0xa48] sm:$0xff]
        %v932 = vld [vmem:[#allocation2 + $0xa50] sm:$0xff]
        %v933 = vld [vmem:[#allocation2 + $0xa58] sm:$0xff]
        %v934 = vld [vmem:[#allocation2 + $0xa60] sm:$0xff]
        %v935 = vld [vmem:[#allocation2 + $0xa68] sm:$0xff]
        %v936 = vld [vmem:[#allocation2 + $0xa70] sm:$0xff]
        %v937 = vld [vmem:[#allocation2 + $0xa78] sm:$0xff]
        %v938 = vld [vmem:[#allocation2 + $0xa80] sm:$0xff]
        %v939 = vld [vmem:[#allocation2 + $0xa88] sm:$0xff]
        %v940 = vld [vmem:[#allocation2 + $0xa90] sm:$0xff]
        %v941 = vld [vmem:[#allocation2 + $0xa98] sm:$0xff]
        %v942 = vld [vmem:[#allocation2 + $0xaa0] sm:$0xff]
        %v943 = vld [vmem:[#allocation2 + $0xaa8] sm:$0xff]
        %v944 = vld [vmem:[#allocation2 + $0xab0] sm:$0xff]
        %v945 = vld [vmem:[#allocation2 + $0xab8] sm:$0xff]
        %v946 = vld [vmem:[#allocation2 + $0xac0] sm:$0xff]
        %v947 = vld [vmem:[#allocation2 + $0xac8] sm:$0xff]
        %v948 = vld [vmem:[#allocation2 + $0xad0] sm:$0xff]
        %v949 = vld [vmem:[#allocation2 + $0xad8] sm:$0xff]
        %v950 = vld [vmem:[#allocation2 + $0xae0] sm:$0xff]
        %v951 = vld [vmem:[#allocation2 + $0xae8] sm:$0xff]
        %v952 = vld [vmem:[#allocation2 + $0xaf0] sm:$0xff]
        %v953 = vld [vmem:[#allocation2 + $0xaf8] sm:$0xff]
        %v954 = vld [vmem:[#allocation2 + $0xb00] sm:$0xff]
        %v955 = vld [vmem:[#allocation2 + $0xb08] sm:$0xff]
        %v956 = vld [vmem:[#allocation2 + $0xb10] sm:$0xff]
        %v957 = vld [vmem:[#allocation2 + $0xb18] sm:$0xff]
        %v958 = vld [vmem:[#allocation2 + $0xb20] sm:$0xff]
        %v959 = vld [vmem:[#allocation2 + $0xb28] sm:$0xff]
        %v960 = vld [vmem:[#allocation2 + $0xb30] sm:$0xff]
        %v961 = vld [vmem:[#allocation2 + $0xb38] sm:$0xff]
        %v962 = vld [vmem:[#allocation2 + $0xb40] sm:$0xff]
        %v963 = vld [vmem:[#allocation2 + $0xb48] sm:$0xff]
        %v964 = vld [vmem:[#allocation2 + $0xb50] sm:$0xff]
        %v965 = vld [vmem:[#allocation2 + $0xb58] sm:$0xff]
        %v966 = vld [vmem:[#allocation2 + $0xb60] sm:$0xff]
        %v967 = vld [vmem:[#allocation2 + $0xb68] sm:$0xff]
        %v968 = vld [vmem:[#allocation2 + $0xb70] sm:$0xff]
        %v969 = vld [vmem:[#allocation2 + $0xb78] sm:$0xff]
        %v970 = vld [vmem:[#allocation2 + $0xb80] sm:$0xff]
        %v971 = vld [vmem:[#allocation2 + $0xb88] sm:$0xff]
        %v972 = vld [vmem:[#allocation2 + $0xb90] sm:$0xff]
        %v973 = vld [vmem:[#allocation2 + $0xb98] sm:$0xff]
        %v974 = vld [vmem:[#allocation2 + $0xba0] sm:$0xff]
        %v975 = vld [vmem:[#allocation2 + $0xba8] sm:$0xff]
        %v976 = vld [vmem:[#allocation2 + $0xbb0] sm:$0xff]
        %v977 = vld [vmem:[#allocation2 + $0xbb8] sm:$0xff]
        %v978 = vld [vmem:[#allocation2 + $0xbc0] sm:$0xff]
        %v979 = vld [vmem:[#allocation2 + $0xbc8] sm:$0xff]
        %v980 = vld [vmem:[#allocation2 + $0xbd0] sm:$0xff]
        %v981 = vld [vmem:[#allocation2 + $0xbd8] sm:$0xff]
        %v982 = vld [vmem:[#allocation2 + $0xbe0] sm:$0xff]
        %v983 = vld [vmem:[#allocation2 + $0xbe8] sm:$0xff]
        %v984 = vld [vmem:[#allocation2 + $0xbf0] sm:$0xff]
        %v985 = vld [vmem:[#allocation2 + $0xbf8] sm:$0xff]
        %v986 = vld [vmem:[#allocation2 + $0xc00] sm:$0xff]
        %v987 = vld [vmem:[#allocation2 + $0xc08] sm:$0xff]
        %v988 = vld [vmem:[#allocation2 + $0xc10] sm:$0xff]
        %v989 = vld [vmem:[#allocation2 + $0xc18] sm:$0xff]
        %v990 = vld [vmem:[#allocation2 + $0xc20] sm:$0xff]
        %v991 = vld [vmem:[#allocation2 + $0xc28] sm:$0xff]
        %v992 = vld [vmem:[#allocation2 + $0xc30] sm:$0xff]
        %v993 = vld [vmem:[#allocation2 + $0xc38] sm:$0xff]
        %v994 = vld [vmem:[#allocation2 + $0xc40] sm:$0xff]
        %v995 = vld [vmem:[#allocation2 + $0xc48] sm:$0xff]
        %v996 = vld [vmem:[#allocation2 + $0xc50] sm:$0xff]
        %v997 = vld [vmem:[#allocation2 + $0xc58] sm:$0xff]
        %v998 = vld [vmem:[#allocation2 + $0xc60] sm:$0xff]
        %v999 = vld [vmem:[#allocation2 + $0xc68] sm:$0xff]
        %v1000 = vld [vmem:[#allocation2 + $0xc70] sm:$0xff]
        %v1001 = vld [vmem:[#allocation2 + $0xc78] sm:$0xff]
        %v1002 = vld [vmem:[#allocation2 + $0xc80] sm:$0xff]
        %v1003 = vld [vmem:[#allocation2 + $0xc88] sm:$0xff]
        %v1004 = vld [vmem:[#allocation2 + $0xc90] sm:$0xff]
        %v1005 = vld [vmem:[#allocation2 + $0xc98] sm:$0xff]
        %v1006 = vld [vmem:[#allocation2 + $0xca0] sm:$0xff]
        %v1007 = vld [vmem:[#allocation2 + $0xca8] sm:$0xff]
        %v1008 = vld [vmem:[#allocation2 + $0xcb0] sm:$0xff]
        %v1009 = vld [vmem:[#allocation2 + $0xcb8] sm:$0xff]
        %v1010 = vld [vmem:[#allocation2 + $0xcc0] sm:$0xff]
        %v1011 = vld [vmem:[#allocation2 + $0xcc8] sm:$0xff]
        %v1012 = vld [vmem:[#allocation2 + $0xcd0] sm:$0xff]
        %v1013 = vld [vmem:[#allocation2 + $0xcd8] sm:$0xff]
        %v1014 = vld [vmem:[#allocation2 + $0xce0] sm:$0xff]
        %v1015 = vld [vmem:[#allocation2 + $0xce8] sm:$0xff]
        %v1016 = vld [vmem:[#allocation2 + $0xcf0] sm:$0xff]
        %v1017 = vld [vmem:[#allocation2 + $0xcf8] sm:$0xff]
        %v1018 = vld [vmem:[#allocation2 + $0xd00] sm:$0xff]
        %v1019 = vld [vmem:[#allocation2 + $0xd08] sm:$0xff]
        %v1020 = vld [vmem:[#allocation2 + $0xd10] sm:$0xff]
        %v1021 = vld [vmem:[#allocation2 + $0xd18] sm:$0xff]
        %v1022 = vld [vmem:[#allocation2 + $0xd20] sm:$0xff]
        %v1023 = vld [vmem:[#allocation2 + $0xd28] sm:$0xff]
        %v1024 = vld [vmem:[#allocation2 + $0xd30] sm:$0xff]
        %v1025 = vld [vmem:[#allocation2 + $0xd38] sm:$0xff]
        %v1026 = vld [vmem:[#allocation2 + $0xd40] sm:$0xff]
        %v1027 = vld [vmem:[#allocation2 + $0xd48] sm:$0xff]
        %v1028 = vld [vmem:[#allocation2 + $0xd50] sm:$0xff]
        %v1029 = vld [vmem:[#allocation2 + $0xd58] sm:$0xff]
        %v1030 = vld [vmem:[#allocation2 + $0xd60] sm:$0xff]
        %v1031 = vld [vmem:[#allocation2 + $0xd68] sm:$0xff]
        %v1032 = vld [vmem:[#allocation2 + $0xd70] sm:$0xff]
        %v1033 = vld [vmem:[#allocation2 + $0xd78] sm:$0xff]
        %v1034 = vld [vmem:[#allocation2 + $0xd80] sm:$0xff]
        %v1035 = vld [vmem:[#allocation2 + $0xd88] sm:$0xff]
        %v1036 = vld [vmem:[#allocation2 + $0xd90] sm:$0xff]
        %v1037 = vld [vmem:[#allocation2 + $0xd98] sm:$0xff]
        %v1038 = vld [vmem:[#allocation2 + $0xda0] sm:$0xff]
        %v1039 = vld [vmem:[#allocation2 + $0xda8] sm:$0xff]
        %v1040 = vld [vmem:[#allocation2 + $0xdb0] sm:$0xff]
        %v1041 = vld [vmem:[#allocation2 + $0xdb8] sm:$0xff]
        %v1042 = vld [vmem:[#allocation2 + $0xdc0] sm:$0xff]
        %v1043 = vld [vmem:[#allocation2 + $0xdc8] sm:$0xff]
        %v1044 = vld [vmem:[#allocation2 + $0xdd0] sm:$0xff]
        %v1045 = vld [vmem:[#allocation2 + $0xdd8] sm:$0xff]
        %v1046 = vld [vmem:[#allocation2 + $0xde0] sm:$0xff]
        %v1047 = vld [vmem:[#allocation2 + $0xde8] sm:$0xff]
        %v1048 = vld [vmem:[#allocation2 + $0xdf0] sm:$0xff]
        %v1049 = vld [vmem:[#allocation2 + $0xdf8] sm:$0xff]
        %v1050 = vld [vmem:[#allocation2 + $0xe00] sm:$0xff]
        %v1051 = vld [vmem:[#allocation2 + $0xe08] sm:$0xff]
        %v1052 = vld [vmem:[#allocation2 + $0xe10] sm:$0xff]
        %v1053 = vld [vmem:[#allocation2 + $0xe18] sm:$0xff]
        %v1054 = vld [vmem:[#allocation2 + $0xe20] sm:$0xff]
        %v1055 = vld [vmem:[#allocation2 + $0xe28] sm:$0xff]
        %v1056 = vld [vmem:[#allocation2 + $0xe30] sm:$0xff]
        %v1057 = vld [vmem:[#allocation2 + $0xe38] sm:$0xff]
        %v1058 = vld [vmem:[#allocation2 + $0xe40] sm:$0xff]
        %v1059 = vld [vmem:[#allocation2 + $0xe48] sm:$0xff]
        %v1060 = vld [vmem:[#allocation2 + $0xe50] sm:$0xff]
        %v1061 = vld [vmem:[#allocation2 + $0xe58] sm:$0xff]
        %v1062 = vld [vmem:[#allocation2 + $0xe60] sm:$0xff]
        %v1063 = vld [vmem:[#allocation2 + $0xe68] sm:$0xff]
        %v1064 = vld [vmem:[#allocation2 + $0xe70] sm:$0xff]
        %v1065 = vld [vmem:[#allocation2 + $0xe78] sm:$0xff]
        %v1066 = vld [vmem:[#allocation2 + $0xe80] sm:$0xff]
        %v1067 = vld [vmem:[#allocation2 + $0xe88] sm:$0xff]
        %v1068 = vld [vmem:[#allocation2 + $0xe90] sm:$0xff]
        %v1069 = vld [vmem:[#allocation2 + $0xe98] sm:$0xff]
        %v1070 = vld [vmem:[#allocation2 + $0xea0] sm:$0xff]
        %v1071 = vld [vmem:[#allocation2 + $0xea8] sm:$0xff]
        %v1072 = vld [vmem:[#allocation2 + $0xeb0] sm:$0xff]
        %v1073 = vld [vmem:[#allocation2 + $0xeb8] sm:$0xff]
        %v1074 = vld [vmem:[#allocation2 + $0xec0] sm:$0xff]
        %v1075 = vld [vmem:[#allocation2 + $0xec8] sm:$0xff]
        %v1076 = vld [vmem:[#allocation2 + $0xed0] sm:$0xff]
        %v1077 = vld [vmem:[#allocation2 + $0xed8] sm:$0xff]
        %v1078 = vld [vmem:[#allocation2 + $0xee0] sm:$0xff]
        %v1079 = vld [vmem:[#allocation2 + $0xee8] sm:$0xff]
        %v1080 = vld [vmem:[#allocation2 + $0xef0] sm:$0xff]
        %v1081 = vld [vmem:[#allocation2 + $0xef8] sm:$0xff]
        %v1082 = vld [vmem:[#allocation2 + $0xf00] sm:$0xff]
        %v1083 = vld [vmem:[#allocation2 + $0xf08] sm:$0xff]
        %v1084 = vld [vmem:[#allocation2 + $0xf10] sm:$0xff]
        %v1085 = vld [vmem:[#allocation2 + $0xf18] sm:$0xff]
        %v1086 = vld [vmem:[#allocation2 + $0xf20] sm:$0xff]
        %v1087 = vld [vmem:[#allocation2 + $0xf28] sm:$0xff]
        %v1088 = vld [vmem:[#allocation2 + $0xf30] sm:$0xff]
        %v1089 = vld [vmem:[#allocation2 + $0xf38] sm:$0xff]
        %v1090 = vld [vmem:[#allocation2 + $0xf40] sm:$0xff]
        %v1091 = vld [vmem:[#allocation2 + $0xf48] sm:$0xff]
        %v1092 = vld [vmem:[#allocation2 + $0xf50] sm:$0xff]
        %v1093 = vld [vmem:[#allocation2 + $0xf58] sm:$0xff]
        %v1094 = vld [vmem:[#allocation2 + $0xf60] sm:$0xff]
        %v1095 = vld [vmem:[#allocation2 + $0xf68] sm:$0xff]
        %v1096 = vld [vmem:[#allocation2 + $0xf70] sm:$0xff]
        %v1097 = vld [vmem:[#allocation2 + $0xf78] sm:$0xff]
        %v1098 = vld [vmem:[#allocation2 + $0xf80] sm:$0xff]
        %v1099 = vld [vmem:[#allocation2 + $0xf88] sm:$0xff]
        %v1100 = vld [vmem:[#allocation2 + $0xf90] sm:$0xff]
        %v1101 = vld [vmem:[#allocation2 + $0xf98] sm:$0xff]
        %v1102 = vld [vmem:[#allocation2 + $0xfa0] sm:$0xff]
        %v1103 = vld [vmem:[#allocation2 + $0xfa8] sm:$0xff]
        %v1104 = vld [vmem:[#allocation2 + $0xfb0] sm:$0xff]
        %v1105 = vld [vmem:[#allocation2 + $0xfb8] sm:$0xff]
        %v1106 = vld [vmem:[#allocation2 + $0xfc0] sm:$0xff]
        %v1107 = vld [vmem:[#allocation2 + $0xfc8] sm:$0xff]
        %v1108 = vld [vmem:[#allocation2 + $0xfd0] sm:$0xff]
        %v1109 = vld [vmem:[#allocation2 + $0xfd8] sm:$0xff]
        %v1110 = vld [vmem:[#allocation2 + $0xfe0] sm:$0xff]
        %v1111 = vld [vmem:[#allocation2 + $0xfe8] sm:$0xff]
        %v1112 = vld [vmem:[#allocation2 + $0xff0] sm:$0xff]
        %v1113 = vld [vmem:[#allocation2 + $0xff8] sm:$0xff]
        %v1114 = vld [vmem:[#allocation2 + $0x1000] sm:$0xff]
        %v1115 = vld [vmem:[#allocation2 + $0x1008] sm:$0xff]
        %v1116 = vld [vmem:[#allocation2 + $0x1010] sm:$0xff]
        %v1117 = vld [vmem:[#allocation2 + $0x1018] sm:$0xff]
        %v1118 = vld [vmem:[#allocation2 + $0x1020] sm:$0xff]
        %v1119 = vld [vmem:[#allocation2 + $0x1028] sm:$0xff]
        %v1120 = vld [vmem:[#allocation2 + $0x1030] sm:$0xff]
        %v1121 = vld [vmem:[#allocation2 + $0x1038] sm:$0xff]
        %v1122 = vld [vmem:[#allocation2 + $0x1040] sm:$0xff]
        %v1123 = vld [vmem:[#allocation2 + $0x1048] sm:$0xff]
        %v1124 = vld [vmem:[#allocation2 + $0x1050] sm:$0xff]
        %v1125 = vld [vmem:[#allocation2 + $0x1058] sm:$0xff]
        %v1126 = vld [vmem:[#allocation2 + $0x1060] sm:$0xff]
        %v1127 = vld [vmem:[#allocation2 + $0x1068] sm:$0xff]
        %v1128 = vld [vmem:[#allocation2 + $0x1070] sm:$0xff]
        %v1129 = vld [vmem:[#allocation2 + $0x1078] sm:$0xff]
        %v1130 = vld [vmem:[#allocation2 + $0x1080] sm:$0xff]
        %v1131 = vld [vmem:[#allocation2 + $0x1088] sm:$0xff]
        %v1132 = vld [vmem:[#allocation2 + $0x1090] sm:$0xff]
        %v1133 = vld [vmem:[#allocation2 + $0x1098] sm:$0xff]
        %v1134 = vld [vmem:[#allocation2 + $0x10a0] sm:$0xff]
        %v1135 = vld [vmem:[#allocation2 + $0x10a8] sm:$0xff]
        %v1136 = vld [vmem:[#allocation2 + $0x10b0] sm:$0xff]
        %v1137 = vld [vmem:[#allocation2 + $0x10b8] sm:$0xff]
        %v1138 = vld [vmem:[#allocation2 + $0x10c0] sm:$0xff]
        %v1139 = vld [vmem:[#allocation2 + $0x10c8] sm:$0xff]
        %v1140 = vld [vmem:[#allocation2 + $0x10d0] sm:$0xff]
        %v1141 = vld [vmem:[#allocation2 + $0x10d8] sm:$0xff]
        %v1142 = vld [vmem:[#allocation2 + $0x10e0] sm:$0xff]
        %v1143 = vld [vmem:[#allocation2 + $0x10e8] sm:$0xff]
        %v1144 = vld [vmem:[#allocation2 + $0x10f0] sm:$0xff]
        %v1145 = vld [vmem:[#allocation2 + $0x10f8] sm:$0xff]
        %v1146 = vld [vmem:[#allocation2 + $0x1100] sm:$0xff]
        %v1147 = vld [vmem:[#allocation2 + $0x1108] sm:$0xff]
        %v1148 = vld [vmem:[#allocation2 + $0x1110] sm:$0xff]
        %v1149 = vld [vmem:[#allocation2 + $0x1118] sm:$0xff]
        %v1150 = vld [vmem:[#allocation2 + $0x1120] sm:$0xff]
        %v1151 = vld [vmem:[#allocation2 + $0x1128] sm:$0xff]
        %v1152 = vld [vmem:[#allocation2 + $0x1130] sm:$0xff]
        %v1153 = vld [vmem:[#allocation2 + $0x1138] sm:$0xff]
        %v1706 = vunpack.c.l.b16 %v602
        %v1707 = vunpack.c.h.b16 %v602
        %v1708 = vunpack.c.l.b16 %v603
        %v1709 = vunpack.c.h.b16 %v603
        %v1710 = vunpack.c.l.b16 %v604
        %v1711 = vunpack.c.h.b16 %v604
        %v1712 = vunpack.c.l.b16 %v605
        %v1713 = vunpack.c.h.b16 %v605
        %v1714 = vunpack.c.l.b16 %v606
        %v1715 = vunpack.c.h.b16 %v606
        %v1716 = vunpack.c.l.b16 %v607
        %v1717 = vunpack.c.h.b16 %v607
        %v1718 = vunpack.c.l.b16 %v608
        %v1719 = vunpack.c.h.b16 %v608
        %v1720 = vunpack.c.l.b16 %v609
        %v1721 = vunpack.c.h.b16 %v609
        %v1722 = vunpack.c.l.b16 %v610
        %v1723 = vunpack.c.h.b16 %v610
        %v1724 = vunpack.c.l.b16 %v611
        %v1725 = vunpack.c.h.b16 %v611
        %v1726 = vunpack.c.l.b16 %v612
        %v1727 = vunpack.c.h.b16 %v612
        %v1728 = vunpack.c.l.b16 %v613
        %v1729 = vunpack.c.h.b16 %v613
        %v1730 = vunpack.c.l.b16 %v614
        %v1731 = vunpack.c.h.b16 %v614
        %v1732 = vunpack.c.l.b16 %v615
        %v1733 = vunpack.c.h.b16 %v615
        %v1734 = vunpack.c.l.b16 %v616
        %v1735 = vunpack.c.h.b16 %v616
        %v1736 = vunpack.c.l.b16 %v617
        %v1737 = vunpack.c.h.b16 %v617
        %v1738 = vunpack.c.l.b16 %v618
        %v1739 = vunpack.c.h.b16 %v618
        %v1740 = vunpack.c.l.b16 %v619
        %v1741 = vunpack.c.h.b16 %v619
        %v1742 = vunpack.c.l.b16 %v620
        %v1743 = vunpack.c.h.b16 %v620
        %v1744 = vunpack.c.l.b16 %v621
        %v1745 = vunpack.c.h.b16 %v621
        %v1746 = vunpack.c.l.b16 %v622
        %v1747 = vunpack.c.h.b16 %v622
        %v1748 = vunpack.c.l.b16 %v623
        %v1749 = vunpack.c.h.b16 %v623
        %v1750 = vunpack.c.l.b16 %v624
        %v1751 = vunpack.c.h.b16 %v624
        %v1752 = vunpack.c.l.b16 %v625
        %v1753 = vunpack.c.h.b16 %v625
        %v1754 = vunpack.c.l.b16 %v626
        %v1755 = vunpack.c.h.b16 %v626
        %v1756 = vunpack.c.l.b16 %v627
        %v1757 = vunpack.c.h.b16 %v627
        %v1758 = vunpack.c.l.b16 %v628
        %v1759 = vunpack.c.h.b16 %v628
        %v1760 = vunpack.c.l.b16 %v629
        %v1761 = vunpack.c.h.b16 %v629
        %v1762 = vunpack.c.l.b16 %v630
        %v1763 = vunpack.c.h.b16 %v630
        %v1764 = vunpack.c.l.b16 %v631
        %v1765 = vunpack.c.h.b16 %v631
        %v1766 = vunpack.c.l.b16 %v632
        %v1767 = vunpack.c.h.b16 %v632
        %v1768 = vunpack.c.l.b16 %v633
        %v1769 = vunpack.c.h.b16 %v633
        %v1770 = vunpack.c.l.b16 %v634
        %v1771 = vunpack.c.h.b16 %v634
        %v1772 = vunpack.c.l.b16 %v635
        %v1773 = vunpack.c.h.b16 %v635
        %v1774 = vunpack.c.l.b16 %v636
        %v1775 = vunpack.c.h.b16 %v636
        %v1776 = vunpack.c.l.b16 %v637
        %v1777 = vunpack.c.h.b16 %v637
        %v1778 = vunpack.c.l.b16 %v638
        %v1779 = vunpack.c.h.b16 %v638
        %v1780 = vunpack.c.l.b16 %v639
        %v1781 = vunpack.c.h.b16 %v639
        %v1782 = vunpack.c.l.b16 %v640
        %v1783 = vunpack.c.h.b16 %v640
        %v1784 = vunpack.c.l.b16 %v641
        %v1785 = vunpack.c.h.b16 %v641
        %v1786 = vunpack.c.l.b16 %v642
        %v1787 = vunpack.c.h.b16 %v642
        %v1788 = vunpack.c.l.b16 %v643
        %v1789 = vunpack.c.h.b16 %v643
        %v1790 = vunpack.c.l.b16 %v644
        %v1791 = vunpack.c.h.b16 %v644
        %v1792 = vunpack.c.l.b16 %v645
        %v1793 = vunpack.c.h.b16 %v645
        %v1794 = vunpack.c.l.b16 %v646
        %v1795 = vunpack.c.h.b16 %v646
        %v1796 = vunpack.c.l.b16 %v647
        %v1797 = vunpack.c.h.b16 %v647
        %v1798 = vunpack.c.l.b16 %v648
        %v1799 = vunpack.c.h.b16 %v648
        %v1800 = vunpack.c.l.b16 %v649
        %v1801 = vunpack.c.h.b16 %v649
        %v1802 = vunpack.c.l.b16 %v650
        %v1803 = vunpack.c.h.b16 %v650
        %v1804 = vunpack.c.l.b16 %v651
        %v1805 = vunpack.c.h.b16 %v651
        %v1806 = vunpack.c.l.b16 %v652
        %v1807 = vunpack.c.h.b16 %v652
        %v1808 = vunpack.c.l.b16 %v653
        %v1809 = vunpack.c.h.b16 %v653
        %v1810 = vunpack.c.l.b16 %v654
        %v1811 = vunpack.c.h.b16 %v654
        %v1812 = vunpack.c.l.b16 %v655
        %v1813 = vunpack.c.h.b16 %v655
        %v1814 = vunpack.c.l.b16 %v656
        %v1815 = vunpack.c.h.b16 %v656
        %v1816 = vunpack.c.l.b16 %v657
        %v1817 = vunpack.c.h.b16 %v657
        %v1818 = vunpack.c.l.b16 %v658
        %v1819 = vunpack.c.h.b16 %v658
        %v1820 = vunpack.c.l.b16 %v659
        %v1821 = vunpack.c.h.b16 %v659
        %v1822 = vunpack.c.l.b16 %v660
        %v1823 = vunpack.c.h.b16 %v660
        %v1824 = vunpack.c.l.b16 %v661
        %v1825 = vunpack.c.h.b16 %v661
        %v1826 = vunpack.c.l.b16 %v662
        %v1827 = vunpack.c.h.b16 %v662
        %v1828 = vunpack.c.l.b16 %v663
        %v1829 = vunpack.c.h.b16 %v663
        %v1830 = vunpack.c.l.b16 %v664
        %v1831 = vunpack.c.h.b16 %v664
        %v1832 = vunpack.c.l.b16 %v665
        %v1833 = vunpack.c.h.b16 %v665
        %v1834 = vunpack.c.l.b16 %v666
        %v1835 = vunpack.c.h.b16 %v666
        %v1836 = vunpack.c.l.b16 %v667
        %v1837 = vunpack.c.h.b16 %v667
        %v1838 = vunpack.c.l.b16 %v668
        %v1839 = vunpack.c.h.b16 %v668
        %v1840 = vunpack.c.l.b16 %v669
        %v1841 = vunpack.c.h.b16 %v669
        %v1842 = vunpack.c.l.b16 %v670
        %v1843 = vunpack.c.h.b16 %v670
        %v1844 = vunpack.c.l.b16 %v671
        %v1845 = vunpack.c.h.b16 %v671
        %v1846 = vunpack.c.l.b16 %v672
        %v1847 = vunpack.c.h.b16 %v672
        %v1848 = vunpack.c.l.b16 %v673
        %v1849 = vunpack.c.h.b16 %v673
        %v1850 = vunpack.c.l.b16 %v674
        %v1851 = vunpack.c.h.b16 %v674
        %v1852 = vunpack.c.l.b16 %v675
        %v1853 = vunpack.c.h.b16 %v675
        %v1854 = vunpack.c.l.b16 %v676
        %v1855 = vunpack.c.h.b16 %v676
        %v1856 = vunpack.c.l.b16 %v677
        %v1857 = vunpack.c.h.b16 %v677
        %v1858 = vunpack.c.l.b16 %v678
        %v1859 = vunpack.c.h.b16 %v678
        %v1860 = vunpack.c.l.b16 %v679
        %v1861 = vunpack.c.h.b16 %v679
        %v1862 = vunpack.c.l.b16 %v680
        %v1863 = vunpack.c.h.b16 %v680
        %v1864 = vunpack.c.l.b16 %v681
        %v1865 = vunpack.c.h.b16 %v681
        %v1866 = vunpack.c.l.b16 %v682
        %v1867 = vunpack.c.h.b16 %v682
        %v1868 = vunpack.c.l.b16 %v683
        %v1869 = vunpack.c.h.b16 %v683
        %v1870 = vunpack.c.l.b16 %v684
        %v1871 = vunpack.c.h.b16 %v684
        %v1872 = vunpack.c.l.b16 %v685
        %v1873 = vunpack.c.h.b16 %v685
        %v1874 = vunpack.c.l.b16 %v686
        %v1875 = vunpack.c.h.b16 %v686
        %v1876 = vunpack.c.l.b16 %v687
        %v1877 = vunpack.c.h.b16 %v687
        %v1878 = vunpack.c.l.b16 %v688
        %v1879 = vunpack.c.h.b16 %v688
        %v1880 = vunpack.c.l.b16 %v689
        %v1881 = vunpack.c.h.b16 %v689
        %v1882 = vunpack.c.l.b16 %v690
        %v1883 = vunpack.c.h.b16 %v690
        %v1884 = vunpack.c.l.b16 %v691
        %v1885 = vunpack.c.h.b16 %v691
        %v1886 = vunpack.c.l.b16 %v692
        %v1887 = vunpack.c.h.b16 %v692
        %v1888 = vunpack.c.l.b16 %v693
        %v1889 = vunpack.c.h.b16 %v693
        %v1890 = vunpack.c.l.b16 %v694
        %v1891 = vunpack.c.h.b16 %v694
        %v1892 = vunpack.c.l.b16 %v695
        %v1893 = vunpack.c.h.b16 %v695
        %v1894 = vunpack.c.l.b16 %v696
        %v1895 = vunpack.c.h.b16 %v696
        %v1896 = vunpack.c.l.b16 %v697
        %v1897 = vunpack.c.h.b16 %v697
        %v1898 = vunpack.c.l.b16 %v698
        %v1899 = vunpack.c.h.b16 %v698
        %v1900 = vunpack.c.l.b16 %v699
        %v1901 = vunpack.c.h.b16 %v699
        %v1902 = vunpack.c.l.b16 %v700
        %v1903 = vunpack.c.h.b16 %v700
        %v1904 = vunpack.c.l.b16 %v701
        %v1905 = vunpack.c.h.b16 %v701
        %v1906 = vunpack.c.l.b16 %v702
        %v1907 = vunpack.c.h.b16 %v702
        %v1908 = vunpack.c.l.b16 %v703
        %v1909 = vunpack.c.h.b16 %v703
        %v1910 = vunpack.c.l.b16 %v704
        %v1911 = vunpack.c.h.b16 %v704
        %v1912 = vunpack.c.l.b16 %v705
        %v1913 = vunpack.c.h.b16 %v705
        %v1914 = vunpack.c.l.b16 %v706
        %v1915 = vunpack.c.h.b16 %v706
        %v1916 = vunpack.c.l.b16 %v707
        %v1917 = vunpack.c.h.b16 %v707
        %v1918 = vunpack.c.l.b16 %v708
        %v1919 = vunpack.c.h.b16 %v708
        %v1920 = vunpack.c.l.b16 %v709
        %v1921 = vunpack.c.h.b16 %v709
        %v1922 = vunpack.c.l.b16 %v710
        %v1923 = vunpack.c.h.b16 %v710
        %v1924 = vunpack.c.l.b16 %v711
        %v1925 = vunpack.c.h.b16 %v711
        %v1926 = vunpack.c.l.b16 %v712
        %v1927 = vunpack.c.h.b16 %v712
        %v1928 = vunpack.c.l.b16 %v713
        %v1929 = vunpack.c.h.b16 %v713
        %v1930 = vunpack.c.l.b16 %v714
        %v1931 = vunpack.c.h.b16 %v714
        %v1932 = vunpack.c.l.b16 %v715
        %v1933 = vunpack.c.h.b16 %v715
        %v1934 = vunpack.c.l.b16 %v716
        %v1935 = vunpack.c.h.b16 %v716
        %v1936 = vunpack.c.l.b16 %v717
        %v1937 = vunpack.c.h.b16 %v717
        %v1938 = vunpack.c.l.b16 %v718
        %v1939 = vunpack.c.h.b16 %v718
        %v1940 = vunpack.c.l.b16 %v719
        %v1941 = vunpack.c.h.b16 %v719
        %v1942 = vunpack.c.l.b16 %v720
        %v1943 = vunpack.c.h.b16 %v720
        %v1944 = vunpack.c.l.b16 %v721
        %v1945 = vunpack.c.h.b16 %v721
        %v1946 = vunpack.c.l.b16 %v722
        %v1947 = vunpack.c.h.b16 %v722
        %v1948 = vunpack.c.l.b16 %v723
        %v1949 = vunpack.c.h.b16 %v723
        %v1950 = vunpack.c.l.b16 %v724
        %v1951 = vunpack.c.h.b16 %v724
        %v1952 = vunpack.c.l.b16 %v725
        %v1953 = vunpack.c.h.b16 %v725
        %v1954 = vunpack.c.l.b16 %v726
        %v1955 = vunpack.c.h.b16 %v726
        %v1956 = vunpack.c.l.b16 %v727
        %v1957 = vunpack.c.h.b16 %v727
        %v1958 = vunpack.c.l.b16 %v728
        %v1959 = vunpack.c.h.b16 %v728
        %v1960 = vunpack.c.l.b16 %v729
        %v1961 = vunpack.c.h.b16 %v729
        %v1962 = vunpack.c.l.b16 %v730
        %v1963 = vunpack.c.h.b16 %v730
        %v1964 = vunpack.c.l.b16 %v731
        %v1965 = vunpack.c.h.b16 %v731
        %v1966 = vunpack.c.l.b16 %v732
        %v1967 = vunpack.c.h.b16 %v732
        %v1968 = vunpack.c.l.b16 %v733
        %v1969 = vunpack.c.h.b16 %v733
        %v1970 = vunpack.c.l.b16 %v734
        %v1971 = vunpack.c.h.b16 %v734
        %v1972 = vunpack.c.l.b16 %v735
        %v1973 = vunpack.c.h.b16 %v735
        %v1974 = vunpack.c.l.b16 %v736
        %v1975 = vunpack.c.h.b16 %v736
        %v1976 = vunpack.c.l.b16 %v737
        %v1977 = vunpack.c.h.b16 %v737
        %v1978 = vunpack.c.l.b16 %v738
        %v1979 = vunpack.c.h.b16 %v738
        %v1980 = vunpack.c.l.b16 %v739
        %v1981 = vunpack.c.h.b16 %v739
        %v1982 = vunpack.c.l.b16 %v740
        %v1983 = vunpack.c.h.b16 %v740
        %v1984 = vunpack.c.l.b16 %v741
        %v1985 = vunpack.c.h.b16 %v741
        %v1986 = vunpack.c.l.b16 %v742
        %v1987 = vunpack.c.h.b16 %v742
        %v1988 = vunpack.c.l.b16 %v743
        %v1989 = vunpack.c.h.b16 %v743
        %v1990 = vunpack.c.l.b16 %v744
        %v1991 = vunpack.c.h.b16 %v744
        %v1992 = vunpack.c.l.b16 %v745
        %v1993 = vunpack.c.h.b16 %v745
        %v1994 = vunpack.c.l.b16 %v746
        %v1995 = vunpack.c.h.b16 %v746
        %v1996 = vunpack.c.l.b16 %v747
        %v1997 = vunpack.c.h.b16 %v747
        %v1998 = vunpack.c.l.b16 %v748
        %v1999 = vunpack.c.h.b16 %v748
        %v2000 = vunpack.c.l.b16 %v749
        %v2001 = vunpack.c.h.b16 %v749
        %v2002 = vunpack.c.l.b16 %v750
        %v2003 = vunpack.c.h.b16 %v750
        %v2004 = vunpack.c.l.b16 %v751
        %v2005 = vunpack.c.h.b16 %v751
        %v2006 = vunpack.c.l.b16 %v752
        %v2007 = vunpack.c.h.b16 %v752
        %v2008 = vunpack.c.l.b16 %v753
        %v2009 = vunpack.c.h.b16 %v753
        %v2010 = vunpack.c.l.b16 %v754
        %v2011 = vunpack.c.h.b16 %v754
        %v2012 = vunpack.c.l.b16 %v755
        %v2013 = vunpack.c.h.b16 %v755
        %v2014 = vunpack.c.l.b16 %v756
        %v2015 = vunpack.c.h.b16 %v756
        %v2016 = vunpack.c.l.b16 %v757
        %v2017 = vunpack.c.h.b16 %v757
        %v2018 = vunpack.c.l.b16 %v758
        %v2019 = vunpack.c.h.b16 %v758
        %v2020 = vunpack.c.l.b16 %v759
        %v2021 = vunpack.c.h.b16 %v759
        %v2022 = vunpack.c.l.b16 %v760
        %v2023 = vunpack.c.h.b16 %v760
        %v2024 = vunpack.c.l.b16 %v761
        %v2025 = vunpack.c.h.b16 %v761
        %v2026 = vunpack.c.l.b16 %v762
        %v2027 = vunpack.c.h.b16 %v762
        %v2028 = vunpack.c.l.b16 %v763
        %v2029 = vunpack.c.h.b16 %v763
        %v2030 = vunpack.c.l.b16 %v764
        %v2031 = vunpack.c.h.b16 %v764
        %v2032 = vunpack.c.l.b16 %v765
        %v2033 = vunpack.c.h.b16 %v765
        %v2034 = vunpack.c.l.b16 %v766
        %v2035 = vunpack.c.h.b16 %v766
        %v2036 = vunpack.c.l.b16 %v767
        %v2037 = vunpack.c.h.b16 %v767
        %v2038 = vunpack.c.l.b16 %v768
        %v2039 = vunpack.c.h.b16 %v768
        %v2040 = vunpack.c.l.b16 %v769
        %v2041 = vunpack.c.h.b16 %v769
        %v2042 = vunpack.c.l.b16 %v770
        %v2043 = vunpack.c.h.b16 %v770
        %v2044 = vunpack.c.l.b16 %v771
        %v2045 = vunpack.c.h.b16 %v771
        %v2046 = vunpack.c.l.b16 %v772
        %v2047 = vunpack.c.h.b16 %v772
        %v2048 = vunpack.c.l.b16 %v773
        %v2049 = vunpack.c.h.b16 %v773
        %v2050 = vunpack.c.l.b16 %v774
        %v2051 = vunpack.c.h.b16 %v774
        %v2052 = vunpack.c.l.b16 %v775
        %v2053 = vunpack.c.h.b16 %v775
        %v2054 = vunpack.c.l.b16 %v776
        %v2055 = vunpack.c.h.b16 %v776
        %v2056 = vunpack.c.l.b16 %v777
        %v2057 = vunpack.c.h.b16 %v777
        %v2058 = vunpack.c.l.b16 %v778
        %v2059 = vunpack.c.h.b16 %v778
        %v2060 = vunpack.c.l.b16 %v779
        %v2061 = vunpack.c.h.b16 %v779
        %v2062 = vunpack.c.l.b16 %v780
        %v2063 = vunpack.c.h.b16 %v780
        %v2064 = vunpack.c.l.b16 %v781
        %v2065 = vunpack.c.h.b16 %v781
        %v2066 = vunpack.c.l.b16 %v782
        %v2067 = vunpack.c.h.b16 %v782
        %v2068 = vunpack.c.l.b16 %v783
        %v2069 = vunpack.c.h.b16 %v783
        %v2070 = vunpack.c.l.b16 %v784
        %v2071 = vunpack.c.h.b16 %v784
        %v2072 = vunpack.c.l.b16 %v785
        %v2073 = vunpack.c.h.b16 %v785
        %v2074 = vunpack.c.l.b16 %v786
        %v2075 = vunpack.c.h.b16 %v786
        %v2076 = vunpack.c.l.b16 %v787
        %v2077 = vunpack.c.h.b16 %v787
        %v2078 = vunpack.c.l.b16 %v788
        %v2079 = vunpack.c.h.b16 %v788
        %v2080 = vunpack.c.l.b16 %v789
        %v2081 = vunpack.c.h.b16 %v789
        %v2082 = vunpack.c.l.b16 %v790
        %v2083 = vunpack.c.h.b16 %v790
        %v2084 = vunpack.c.l.b16 %v791
        %v2085 = vunpack.c.h.b16 %v791
        %v2086 = vunpack.c.l.b16 %v792
        %v2087 = vunpack.c.h.b16 %v792
        %v2088 = vunpack.c.l.b16 %v793
        %v2089 = vunpack.c.h.b16 %v793
        %v2090 = vunpack.c.l.b16 %v794
        %v2091 = vunpack.c.h.b16 %v794
        %v2092 = vunpack.c.l.b16 %v795
        %v2093 = vunpack.c.h.b16 %v795
        %v2094 = vunpack.c.l.b16 %v796
        %v2095 = vunpack.c.h.b16 %v796
        %v2096 = vunpack.c.l.b16 %v797
        %v2097 = vunpack.c.h.b16 %v797
        %v2098 = vunpack.c.l.b16 %v798
        %v2099 = vunpack.c.h.b16 %v798
        %v2100 = vunpack.c.l.b16 %v799
        %v2101 = vunpack.c.h.b16 %v799
        %v2102 = vunpack.c.l.b16 %v800
        %v2103 = vunpack.c.h.b16 %v800
        %v2104 = vunpack.c.l.b16 %v801
        %v2105 = vunpack.c.h.b16 %v801
        %v2106 = vunpack.c.l.b16 %v802
        %v2107 = vunpack.c.h.b16 %v802
        %v2108 = vunpack.c.l.b16 %v803
        %v2109 = vunpack.c.h.b16 %v803
        %v2110 = vunpack.c.l.b16 %v804
        %v2111 = vunpack.c.h.b16 %v804
        %v2112 = vunpack.c.l.b16 %v805
        %v2113 = vunpack.c.h.b16 %v805
        %v2114 = vunpack.c.l.b16 %v806
        %v2115 = vunpack.c.h.b16 %v806
        %v2116 = vunpack.c.l.b16 %v807
        %v2117 = vunpack.c.h.b16 %v807
        %v2118 = vunpack.c.l.b16 %v808
        %v2119 = vunpack.c.h.b16 %v808
        %v2120 = vunpack.c.l.b16 %v809
        %v2121 = vunpack.c.h.b16 %v809
        %v2122 = vunpack.c.l.b16 %v810
        %v2123 = vunpack.c.h.b16 %v810
        %v2124 = vunpack.c.l.b16 %v811
        %v2125 = vunpack.c.h.b16 %v811
        %v2126 = vunpack.c.l.b16 %v812
        %v2127 = vunpack.c.h.b16 %v812
        %v2128 = vunpack.c.l.b16 %v813
        %v2129 = vunpack.c.h.b16 %v813
        %v2130 = vunpack.c.l.b16 %v814
        %v2131 = vunpack.c.h.b16 %v814
        %v2132 = vunpack.c.l.b16 %v815
        %v2133 = vunpack.c.h.b16 %v815
        %v2134 = vunpack.c.l.b16 %v816
        %v2135 = vunpack.c.h.b16 %v816
        %v2136 = vunpack.c.l.b16 %v817
        %v2137 = vunpack.c.h.b16 %v817
        %v2138 = vunpack.c.l.b16 %v818
        %v2139 = vunpack.c.h.b16 %v818
        %v2140 = vunpack.c.l.b16 %v819
        %v2141 = vunpack.c.h.b16 %v819
        %v2142 = vunpack.c.l.b16 %v820
        %v2143 = vunpack.c.h.b16 %v820
        %v2144 = vunpack.c.l.b16 %v821
        %v2145 = vunpack.c.h.b16 %v821
        %v2146 = vunpack.c.l.b16 %v822
        %v2147 = vunpack.c.h.b16 %v822
        %v2148 = vunpack.c.l.b16 %v823
        %v2149 = vunpack.c.h.b16 %v823
        %v2150 = vunpack.c.l.b16 %v824
        %v2151 = vunpack.c.h.b16 %v824
        %v2152 = vunpack.c.l.b16 %v825
        %v2153 = vunpack.c.h.b16 %v825
        %v2154 = vunpack.c.l.b16 %v826
        %v2155 = vunpack.c.h.b16 %v826
        %v2156 = vunpack.c.l.b16 %v827
        %v2157 = vunpack.c.h.b16 %v827
        %v2158 = vunpack.c.l.b16 %v828
        %v2159 = vunpack.c.h.b16 %v828
        %v2160 = vunpack.c.l.b16 %v829
        %v2161 = vunpack.c.h.b16 %v829
        %v2162 = vunpack.c.l.b16 %v830
        %v2163 = vunpack.c.h.b16 %v830
        %v2164 = vunpack.c.l.b16 %v831
        %v2165 = vunpack.c.h.b16 %v831
        %v2166 = vunpack.c.l.b16 %v832
        %v2167 = vunpack.c.h.b16 %v832
        %v2168 = vunpack.c.l.b16 %v833
        %v2169 = vunpack.c.h.b16 %v833
        %v2170 = vunpack.c.l.b16 %v834
        %v2171 = vunpack.c.h.b16 %v834
        %v2172 = vunpack.c.l.b16 %v835
        %v2173 = vunpack.c.h.b16 %v835
        %v2174 = vunpack.c.l.b16 %v836
        %v2175 = vunpack.c.h.b16 %v836
        %v2176 = vunpack.c.l.b16 %v837
        %v2177 = vunpack.c.h.b16 %v837
        %v2178 = vunpack.c.l.b16 %v838
        %v2179 = vunpack.c.h.b16 %v838
        %v2180 = vunpack.c.l.b16 %v839
        %v2181 = vunpack.c.h.b16 %v839
        %v2182 = vunpack.c.l.b16 %v840
        %v2183 = vunpack.c.h.b16 %v840
        %v2184 = vunpack.c.l.b16 %v841
        %v2185 = vunpack.c.h.b16 %v841
        %v2186 = vunpack.c.l.b16 %v842
        %v2187 = vunpack.c.h.b16 %v842
        %v2188 = vunpack.c.l.b16 %v843
        %v2189 = vunpack.c.h.b16 %v843
        %v2190 = vunpack.c.l.b16 %v844
        %v2191 = vunpack.c.h.b16 %v844
        %v2192 = vunpack.c.l.b16 %v845
        %v2193 = vunpack.c.h.b16 %v845
        %v2194 = vunpack.c.l.b16 %v846
        %v2195 = vunpack.c.h.b16 %v846
        %v2196 = vunpack.c.l.b16 %v847
        %v2197 = vunpack.c.h.b16 %v847
        %v2198 = vunpack.c.l.b16 %v848
        %v2199 = vunpack.c.h.b16 %v848
        %v2200 = vunpack.c.l.b16 %v849
        %v2201 = vunpack.c.h.b16 %v849
        %v2202 = vunpack.c.l.b16 %v850
        %v2203 = vunpack.c.h.b16 %v850
        %v2204 = vunpack.c.l.b16 %v851
        %v2205 = vunpack.c.h.b16 %v851
        %v2206 = vunpack.c.l.b16 %v852
        %v2207 = vunpack.c.h.b16 %v852
        %v2208 = vunpack.c.l.b16 %v853
        %v2209 = vunpack.c.h.b16 %v853
        %v2210 = vunpack.c.l.b16 %v854
        %v2211 = vunpack.c.h.b16 %v854
        %v2212 = vunpack.c.l.b16 %v855
        %v2213 = vunpack.c.h.b16 %v855
        %v2214 = vunpack.c.l.b16 %v856
        %v2215 = vunpack.c.h.b16 %v856
        %v2216 = vunpack.c.l.b16 %v857
        %v2217 = vunpack.c.h.b16 %v857
        %v2218 = vunpack.c.l.b16 %v858
        %v2219 = vunpack.c.h.b16 %v858
        %v2220 = vunpack.c.l.b16 %v859
        %v2221 = vunpack.c.h.b16 %v859
        %v2222 = vunpack.c.l.b16 %v860
        %v2223 = vunpack.c.h.b16 %v860
        %v2224 = vunpack.c.l.b16 %v861
        %v2225 = vunpack.c.h.b16 %v861
        %v2226 = vunpack.c.l.b16 %v862
        %v2227 = vunpack.c.h.b16 %v862
        %v2228 = vunpack.c.l.b16 %v863
        %v2229 = vunpack.c.h.b16 %v863
        %v2230 = vunpack.c.l.b16 %v864
        %v2231 = vunpack.c.h.b16 %v864
        %v2232 = vunpack.c.l.b16 %v865
        %v2233 = vunpack.c.h.b16 %v865
        %v2234 = vunpack.c.l.b16 %v866
        %v2235 = vunpack.c.h.b16 %v866
        %v2236 = vunpack.c.l.b16 %v867
        %v2237 = vunpack.c.h.b16 %v867
        %v2238 = vunpack.c.l.b16 %v868
        %v2239 = vunpack.c.h.b16 %v868
        %v2240 = vunpack.c.l.b16 %v869
        %v2241 = vunpack.c.h.b16 %v869
        %v2242 = vunpack.c.l.b16 %v870
        %v2243 = vunpack.c.h.b16 %v870
        %v2244 = vunpack.c.l.b16 %v871
        %v2245 = vunpack.c.h.b16 %v871
        %v2246 = vunpack.c.l.b16 %v872
        %v2247 = vunpack.c.h.b16 %v872
        %v2248 = vunpack.c.l.b16 %v873
        %v2249 = vunpack.c.h.b16 %v873
        %v2250 = vunpack.c.l.b16 %v874
        %v2251 = vunpack.c.h.b16 %v874
        %v2252 = vunpack.c.l.b16 %v875
        %v2253 = vunpack.c.h.b16 %v875
        %v2254 = vunpack.c.l.b16 %v876
        %v2255 = vunpack.c.h.b16 %v876
        %v2256 = vunpack.c.l.b16 %v877
        %v2257 = vunpack.c.h.b16 %v877
        %v2258 = vunpack.c.l.b16 %v878
        %v2259 = vunpack.c.h.b16 %v878
        %v2260 = vunpack.c.l.b16 %v879
        %v2261 = vunpack.c.h.b16 %v879
        %v2262 = vunpack.c.l.b16 %v880
        %v2263 = vunpack.c.h.b16 %v880
        %v2264 = vunpack.c.l.b16 %v881
        %v2265 = vunpack.c.h.b16 %v881
        %v2266 = vunpack.c.l.b16 %v882
        %v2267 = vunpack.c.h.b16 %v882
        %v2268 = vunpack.c.l.b16 %v883
        %v2269 = vunpack.c.h.b16 %v883
        %v2270 = vunpack.c.l.b16 %v884
        %v2271 = vunpack.c.h.b16 %v884
        %v2272 = vunpack.c.l.b16 %v885
        %v2273 = vunpack.c.h.b16 %v885
        %v2274 = vunpack.c.l.b16 %v886
        %v2275 = vunpack.c.h.b16 %v886
        %v2276 = vunpack.c.l.b16 %v887
        %v2277 = vunpack.c.h.b16 %v887
        %v2278 = vunpack.c.l.b16 %v888
        %v2279 = vunpack.c.h.b16 %v888
        %v2280 = vunpack.c.l.b16 %v889
        %v2281 = vunpack.c.h.b16 %v889
        %v2282 = vunpack.c.l.b16 %v890
        %v2283 = vunpack.c.h.b16 %v890
        %v2284 = vunpack.c.l.b16 %v891
        %v2285 = vunpack.c.h.b16 %v891
        %v2286 = vunpack.c.l.b16 %v892
        %v2287 = vunpack.c.h.b16 %v892
        %v2288 = vunpack.c.l.b16 %v893
        %v2289 = vunpack.c.h.b16 %v893
        %v2290 = vunpack.c.l.b16 %v894
        %v2291 = vunpack.c.h.b16 %v894
        %v2292 = vunpack.c.l.b16 %v895
        %v2293 = vunpack.c.h.b16 %v895
        %v2294 = vunpack.c.l.b16 %v896
        %v2295 = vunpack.c.h.b16 %v896
        %v2296 = vunpack.c.l.b16 %v897
        %v2297 = vunpack.c.h.b16 %v897
        %v2298 = vunpack.c.l.b16 %v898
        %v2299 = vunpack.c.h.b16 %v898
        %v2300 = vunpack.c.l.b16 %v899
        %v2301 = vunpack.c.h.b16 %v899
        %v2302 = vunpack.c.l.b16 %v900
        %v2303 = vunpack.c.h.b16 %v900
        %v2304 = vunpack.c.l.b16 %v901
        %v2305 = vunpack.c.h.b16 %v901
        %v2306 = vunpack.c.l.b16 %v902
        %v2307 = vunpack.c.h.b16 %v902
        %v2308 = vunpack.c.l.b16 %v903
        %v2309 = vunpack.c.h.b16 %v903
        %v2310 = vunpack.c.l.b16 %v904
        %v2311 = vunpack.c.h.b16 %v904
        %v2312 = vunpack.c.l.b16 %v905
        %v2313 = vunpack.c.h.b16 %v905
        %v2314 = vunpack.c.l.b16 %v906
        %v2315 = vunpack.c.h.b16 %v906
        %v2316 = vunpack.c.l.b16 %v907
        %v2317 = vunpack.c.h.b16 %v907
        %v2318 = vunpack.c.l.b16 %v908
        %v2319 = vunpack.c.h.b16 %v908
        %v2320 = vunpack.c.l.b16 %v909
        %v2321 = vunpack.c.h.b16 %v909
        %v2322 = vunpack.c.l.b16 %v910
        %v2323 = vunpack.c.h.b16 %v910
        %v2324 = vunpack.c.l.b16 %v911
        %v2325 = vunpack.c.h.b16 %v911
        %v2326 = vunpack.c.l.b16 %v912
        %v2327 = vunpack.c.h.b16 %v912
        %v2328 = vunpack.c.l.b16 %v913
        %v2329 = vunpack.c.h.b16 %v913
        %v2330 = vunpack.c.l.b16 %v914
        %v2331 = vunpack.c.h.b16 %v914
        %v2332 = vunpack.c.l.b16 %v915
        %v2333 = vunpack.c.h.b16 %v915
        %v2334 = vunpack.c.l.b16 %v916
        %v2335 = vunpack.c.h.b16 %v916
        %v2336 = vunpack.c.l.b16 %v917
        %v2337 = vunpack.c.h.b16 %v917
        %v2338 = vunpack.c.l.b16 %v918
        %v2339 = vunpack.c.h.b16 %v918
        %v2340 = vunpack.c.l.b16 %v919
        %v2341 = vunpack.c.h.b16 %v919
        %v2342 = vunpack.c.l.b16 %v920
        %v2343 = vunpack.c.h.b16 %v920
        %v2344 = vunpack.c.l.b16 %v921
        %v2345 = vunpack.c.h.b16 %v921
        %v2346 = vunpack.c.l.b16 %v922
        %v2347 = vunpack.c.h.b16 %v922
        %v2348 = vunpack.c.l.b16 %v923
        %v2349 = vunpack.c.h.b16 %v923
        %v2350 = vunpack.c.l.b16 %v924
        %v2351 = vunpack.c.h.b16 %v924
        %v2352 = vunpack.c.l.b16 %v925
        %v2353 = vunpack.c.h.b16 %v925
        %v2354 = vunpack.c.l.b16 %v926
        %v2355 = vunpack.c.h.b16 %v926
        %v2356 = vunpack.c.l.b16 %v927
        %v2357 = vunpack.c.h.b16 %v927
        %v2358 = vunpack.c.l.b16 %v928
        %v2359 = vunpack.c.h.b16 %v928
        %v2360 = vunpack.c.l.b16 %v929
        %v2361 = vunpack.c.h.b16 %v929
        %v2362 = vunpack.c.l.b16 %v930
        %v2363 = vunpack.c.h.b16 %v930
        %v2364 = vunpack.c.l.b16 %v931
        %v2365 = vunpack.c.h.b16 %v931
        %v2366 = vunpack.c.l.b16 %v932
        %v2367 = vunpack.c.h.b16 %v932
        %v2368 = vunpack.c.l.b16 %v933
        %v2369 = vunpack.c.h.b16 %v933
        %v2370 = vunpack.c.l.b16 %v934
        %v2371 = vunpack.c.h.b16 %v934
        %v2372 = vunpack.c.l.b16 %v935
        %v2373 = vunpack.c.h.b16 %v935
        %v2374 = vunpack.c.l.b16 %v936
        %v2375 = vunpack.c.h.b16 %v936
        %v2376 = vunpack.c.l.b16 %v937
        %v2377 = vunpack.c.h.b16 %v937
        %v2378 = vunpack.c.l.b16 %v938
        %v2379 = vunpack.c.h.b16 %v938
        %v2380 = vunpack.c.l.b16 %v939
        %v2381 = vunpack.c.h.b16 %v939
        %v2382 = vunpack.c.l.b16 %v940
        %v2383 = vunpack.c.h.b16 %v940
        %v2384 = vunpack.c.l.b16 %v941
        %v2385 = vunpack.c.h.b16 %v941
        %v2386 = vunpack.c.l.b16 %v942
        %v2387 = vunpack.c.h.b16 %v942
        %v2388 = vunpack.c.l.b16 %v943
        %v2389 = vunpack.c.h.b16 %v943
        %v2390 = vunpack.c.l.b16 %v944
        %v2391 = vunpack.c.h.b16 %v944
        %v2392 = vunpack.c.l.b16 %v945
        %v2393 = vunpack.c.h.b16 %v945
        %v2394 = vunpack.c.l.b16 %v946
        %v2395 = vunpack.c.h.b16 %v946
        %v2396 = vunpack.c.l.b16 %v947
        %v2397 = vunpack.c.h.b16 %v947
        %v2398 = vunpack.c.l.b16 %v948
        %v2399 = vunpack.c.h.b16 %v948
        %v2400 = vunpack.c.l.b16 %v949
        %v2401 = vunpack.c.h.b16 %v949
        %v2402 = vunpack.c.l.b16 %v950
        %v2403 = vunpack.c.h.b16 %v950
        %v2404 = vunpack.c.l.b16 %v951
        %v2405 = vunpack.c.h.b16 %v951
        %v2406 = vunpack.c.l.b16 %v952
        %v2407 = vunpack.c.h.b16 %v952
        %v2408 = vunpack.c.l.b16 %v953
        %v2409 = vunpack.c.h.b16 %v953
        %v2410 = vunpack.c.l.b16 %v954
        %v2411 = vunpack.c.h.b16 %v954
        %v2412 = vunpack.c.l.b16 %v955
        %v2413 = vunpack.c.h.b16 %v955
        %v2414 = vunpack.c.l.b16 %v956
        %v2415 = vunpack.c.h.b16 %v956
        %v2416 = vunpack.c.l.b16 %v957
        %v2417 = vunpack.c.h.b16 %v957
        %v2418 = vunpack.c.l.b16 %v958
        %v2419 = vunpack.c.h.b16 %v958
        %v2420 = vunpack.c.l.b16 %v959
        %v2421 = vunpack.c.h.b16 %v959
        %v2422 = vunpack.c.l.b16 %v960
        %v2423 = vunpack.c.h.b16 %v960
        %v2424 = vunpack.c.l.b16 %v961
        %v2425 = vunpack.c.h.b16 %v961
        %v2426 = vunpack.c.l.b16 %v962
        %v2427 = vunpack.c.h.b16 %v962
        %v2428 = vunpack.c.l.b16 %v963
        %v2429 = vunpack.c.h.b16 %v963
        %v2430 = vunpack.c.l.b16 %v964
        %v2431 = vunpack.c.h.b16 %v964
        %v2432 = vunpack.c.l.b16 %v965
        %v2433 = vunpack.c.h.b16 %v965
        %v2434 = vunpack.c.l.b16 %v966
        %v2435 = vunpack.c.h.b16 %v966
        %v2436 = vunpack.c.l.b16 %v967
        %v2437 = vunpack.c.h.b16 %v967
        %v2438 = vunpack.c.l.b16 %v968
        %v2439 = vunpack.c.h.b16 %v968
        %v2440 = vunpack.c.l.b16 %v969
        %v2441 = vunpack.c.h.b16 %v969
        %v2442 = vunpack.c.l.b16 %v970
        %v2443 = vunpack.c.h.b16 %v970
        %v2444 = vunpack.c.l.b16 %v971
        %v2445 = vunpack.c.h.b16 %v971
        %v2446 = vunpack.c.l.b16 %v972
        %v2447 = vunpack.c.h.b16 %v972
        %v2448 = vunpack.c.l.b16 %v973
        %v2449 = vunpack.c.h.b16 %v973
        %v2450 = vunpack.c.l.b16 %v974
        %v2451 = vunpack.c.h.b16 %v974
        %v2452 = vunpack.c.l.b16 %v975
        %v2453 = vunpack.c.h.b16 %v975
        %v2454 = vunpack.c.l.b16 %v976
        %v2455 = vunpack.c.h.b16 %v976
        %v2456 = vunpack.c.l.b16 %v977
        %v2457 = vunpack.c.h.b16 %v977
        %v2458 = vunpack.c.l.b16 %v978
        %v2459 = vunpack.c.h.b16 %v978
        %v2460 = vunpack.c.l.b16 %v979
        %v2461 = vunpack.c.h.b16 %v979
        %v2462 = vunpack.c.l.b16 %v980
        %v2463 = vunpack.c.h.b16 %v980
        %v2464 = vunpack.c.l.b16 %v981
        %v2465 = vunpack.c.h.b16 %v981
        %v2466 = vunpack.c.l.b16 %v982
        %v2467 = vunpack.c.h.b16 %v982
        %v2468 = vunpack.c.l.b16 %v983
        %v2469 = vunpack.c.h.b16 %v983
        %v2470 = vunpack.c.l.b16 %v984
        %v2471 = vunpack.c.h.b16 %v984
        %v2472 = vunpack.c.l.b16 %v985
        %v2473 = vunpack.c.h.b16 %v985
        %v2474 = vunpack.c.l.b16 %v986
        %v2475 = vunpack.c.h.b16 %v986
        %v2476 = vunpack.c.l.b16 %v987
        %v2477 = vunpack.c.h.b16 %v987
        %v2478 = vunpack.c.l.b16 %v988
        %v2479 = vunpack.c.h.b16 %v988
        %v2480 = vunpack.c.l.b16 %v989
        %v2481 = vunpack.c.h.b16 %v989
        %v2482 = vunpack.c.l.b16 %v990
        %v2483 = vunpack.c.h.b16 %v990
        %v2484 = vunpack.c.l.b16 %v991
        %v2485 = vunpack.c.h.b16 %v991
        %v2486 = vunpack.c.l.b16 %v992
        %v2487 = vunpack.c.h.b16 %v992
        %v2488 = vunpack.c.l.b16 %v993
        %v2489 = vunpack.c.h.b16 %v993
        %v2490 = vunpack.c.l.b16 %v994
        %v2491 = vunpack.c.h.b16 %v994
        %v2492 = vunpack.c.l.b16 %v995
        %v2493 = vunpack.c.h.b16 %v995
        %v2494 = vunpack.c.l.b16 %v996
        %v2495 = vunpack.c.h.b16 %v996
        %v2496 = vunpack.c.l.b16 %v997
        %v2497 = vunpack.c.h.b16 %v997
        %v2498 = vunpack.c.l.b16 %v998
        %v2499 = vunpack.c.h.b16 %v998
        %v2500 = vunpack.c.l.b16 %v999
        %v2501 = vunpack.c.h.b16 %v999
        %v2502 = vunpack.c.l.b16 %v1000
        %v2503 = vunpack.c.h.b16 %v1000
        %v2504 = vunpack.c.l.b16 %v1001
        %v2505 = vunpack.c.h.b16 %v1001
        %v2506 = vunpack.c.l.b16 %v1002
        %v2507 = vunpack.c.h.b16 %v1002
        %v2508 = vunpack.c.l.b16 %v1003
        %v2509 = vunpack.c.h.b16 %v1003
        %v2510 = vunpack.c.l.b16 %v1004
        %v2511 = vunpack.c.h.b16 %v1004
        %v2512 = vunpack.c.l.b16 %v1005
        %v2513 = vunpack.c.h.b16 %v1005
        %v2514 = vunpack.c.l.b16 %v1006
        %v2515 = vunpack.c.h.b16 %v1006
        %v2516 = vunpack.c.l.b16 %v1007
        %v2517 = vunpack.c.h.b16 %v1007
        %v2518 = vunpack.c.l.b16 %v1008
        %v2519 = vunpack.c.h.b16 %v1008
        %v2520 = vunpack.c.l.b16 %v1009
        %v2521 = vunpack.c.h.b16 %v1009
        %v2522 = vunpack.c.l.b16 %v1010
        %v2523 = vunpack.c.h.b16 %v1010
        %v2524 = vunpack.c.l.b16 %v1011
        %v2525 = vunpack.c.h.b16 %v1011
        %v2526 = vunpack.c.l.b16 %v1012
        %v2527 = vunpack.c.h.b16 %v1012
        %v2528 = vunpack.c.l.b16 %v1013
        %v2529 = vunpack.c.h.b16 %v1013
        %v2530 = vunpack.c.l.b16 %v1014
        %v2531 = vunpack.c.h.b16 %v1014
        %v2532 = vunpack.c.l.b16 %v1015
        %v2533 = vunpack.c.h.b16 %v1015
        %v2534 = vunpack.c.l.b16 %v1016
        %v2535 = vunpack.c.h.b16 %v1016
        %v2536 = vunpack.c.l.b16 %v1017
        %v2537 = vunpack.c.h.b16 %v1017
        %v2538 = vunpack.c.l.b16 %v1018
        %v2539 = vunpack.c.h.b16 %v1018
        %v2540 = vunpack.c.l.b16 %v1019
        %v2541 = vunpack.c.h.b16 %v1019
        %v2542 = vunpack.c.l.b16 %v1020
        %v2543 = vunpack.c.h.b16 %v1020
        %v2544 = vunpack.c.l.b16 %v1021
        %v2545 = vunpack.c.h.b16 %v1021
        %v2546 = vunpack.c.l.b16 %v1022
        %v2547 = vunpack.c.h.b16 %v1022
        %v2548 = vunpack.c.l.b16 %v1023
        %v2549 = vunpack.c.h.b16 %v1023
        %v2550 = vunpack.c.l.b16 %v1024
        %v2551 = vunpack.c.h.b16 %v1024
        %v2552 = vunpack.c.l.b16 %v1025
        %v2553 = vunpack.c.h.b16 %v1025
        %v2554 = vunpack.c.l.b16 %v1026
        %v2555 = vunpack.c.h.b16 %v1026
        %v2556 = vunpack.c.l.b16 %v1027
        %v2557 = vunpack.c.h.b16 %v1027
        %v2558 = vunpack.c.l.b16 %v1028
        %v2559 = vunpack.c.h.b16 %v1028
        %v2560 = vunpack.c.l.b16 %v1029
        %v2561 = vunpack.c.h.b16 %v1029
        %v2562 = vunpack.c.l.b16 %v1030
        %v2563 = vunpack.c.h.b16 %v1030
        %v2564 = vunpack.c.l.b16 %v1031
        %v2565 = vunpack.c.h.b16 %v1031
        %v2566 = vunpack.c.l.b16 %v1032
        %v2567 = vunpack.c.h.b16 %v1032
        %v2568 = vunpack.c.l.b16 %v1033
        %v2569 = vunpack.c.h.b16 %v1033
        %v2570 = vunpack.c.l.b16 %v1034
        %v2571 = vunpack.c.h.b16 %v1034
        %v2572 = vunpack.c.l.b16 %v1035
        %v2573 = vunpack.c.h.b16 %v1035
        %v2574 = vunpack.c.l.b16 %v1036
        %v2575 = vunpack.c.h.b16 %v1036
        %v2576 = vunpack.c.l.b16 %v1037
        %v2577 = vunpack.c.h.b16 %v1037
        %v2578 = vunpack.c.l.b16 %v1038
        %v2579 = vunpack.c.h.b16 %v1038
        %v2580 = vunpack.c.l.b16 %v1039
        %v2581 = vunpack.c.h.b16 %v1039
        %v2582 = vunpack.c.l.b16 %v1040
        %v2583 = vunpack.c.h.b16 %v1040
        %v2584 = vunpack.c.l.b16 %v1041
        %v2585 = vunpack.c.h.b16 %v1041
        %v2586 = vunpack.c.l.b16 %v1042
        %v2587 = vunpack.c.h.b16 %v1042
        %v2588 = vunpack.c.l.b16 %v1043
        %v2589 = vunpack.c.h.b16 %v1043
        %v2590 = vunpack.c.l.b16 %v1044
        %v2591 = vunpack.c.h.b16 %v1044
        %v2592 = vunpack.c.l.b16 %v1045
        %v2593 = vunpack.c.h.b16 %v1045
        %v2594 = vunpack.c.l.b16 %v1046
        %v2595 = vunpack.c.h.b16 %v1046
        %v2596 = vunpack.c.l.b16 %v1047
        %v2597 = vunpack.c.h.b16 %v1047
        %v2598 = vunpack.c.l.b16 %v1048
        %v2599 = vunpack.c.h.b16 %v1048
        %v2600 = vunpack.c.l.b16 %v1049
        %v2601 = vunpack.c.h.b16 %v1049
        %v2602 = vunpack.c.l.b16 %v1050
        %v2603 = vunpack.c.h.b16 %v1050
        %v2604 = vunpack.c.l.b16 %v1051
        %v2605 = vunpack.c.h.b16 %v1051
        %v2606 = vunpack.c.l.b16 %v1052
        %v2607 = vunpack.c.h.b16 %v1052
        %v2608 = vunpack.c.l.b16 %v1053
        %v2609 = vunpack.c.h.b16 %v1053
        %v2610 = vunpack.c.l.b16 %v1054
        %v2611 = vunpack.c.h.b16 %v1054
        %v2612 = vunpack.c.l.b16 %v1055
        %v2613 = vunpack.c.h.b16 %v1055
        %v2614 = vunpack.c.l.b16 %v1056
        %v2615 = vunpack.c.h.b16 %v1056
        %v2616 = vunpack.c.l.b16 %v1057
        %v2617 = vunpack.c.h.b16 %v1057
        %v2618 = vunpack.c.l.b16 %v1058
        %v2619 = vunpack.c.h.b16 %v1058
        %v2620 = vunpack.c.l.b16 %v1059
        %v2621 = vunpack.c.h.b16 %v1059
        %v2622 = vunpack.c.l.b16 %v1060
        %v2623 = vunpack.c.h.b16 %v1060
        %v2624 = vunpack.c.l.b16 %v1061
        %v2625 = vunpack.c.h.b16 %v1061
        %v2626 = vunpack.c.l.b16 %v1062
        %v2627 = vunpack.c.h.b16 %v1062
        %v2628 = vunpack.c.l.b16 %v1063
        %v2629 = vunpack.c.h.b16 %v1063
        %v2630 = vunpack.c.l.b16 %v1064
        %v2631 = vunpack.c.h.b16 %v1064
        %v2632 = vunpack.c.l.b16 %v1065
        %v2633 = vunpack.c.h.b16 %v1065
        %v2634 = vunpack.c.l.b16 %v1066
        %v2635 = vunpack.c.h.b16 %v1066
        %v2636 = vunpack.c.l.b16 %v1067
        %v2637 = vunpack.c.h.b16 %v1067
        %v2638 = vunpack.c.l.b16 %v1068
        %v2639 = vunpack.c.h.b16 %v1068
        %v2640 = vunpack.c.l.b16 %v1069
        %v2641 = vunpack.c.h.b16 %v1069
        %v2642 = vunpack.c.l.b16 %v1070
        %v2643 = vunpack.c.h.b16 %v1070
        %v2644 = vunpack.c.l.b16 %v1071
        %v2645 = vunpack.c.h.b16 %v1071
        %v2646 = vunpack.c.l.b16 %v1072
        %v2647 = vunpack.c.h.b16 %v1072
        %v2648 = vunpack.c.l.b16 %v1073
        %v2649 = vunpack.c.h.b16 %v1073
        %v2650 = vunpack.c.l.b16 %v1074
        %v2651 = vunpack.c.h.b16 %v1074
        %v2652 = vunpack.c.l.b16 %v1075
        %v2653 = vunpack.c.h.b16 %v1075
        %v2654 = vunpack.c.l.b16 %v1076
        %v2655 = vunpack.c.h.b16 %v1076
        %v2656 = vunpack.c.l.b16 %v1077
        %v2657 = vunpack.c.h.b16 %v1077
        %v2658 = vunpack.c.l.b16 %v1078
        %v2659 = vunpack.c.h.b16 %v1078
        %v2660 = vunpack.c.l.b16 %v1079
        %v2661 = vunpack.c.h.b16 %v1079
        %v2662 = vunpack.c.l.b16 %v1080
        %v2663 = vunpack.c.h.b16 %v1080
        %v2664 = vunpack.c.l.b16 %v1081
        %v2665 = vunpack.c.h.b16 %v1081
        %v2666 = vunpack.c.l.b16 %v1082
        %v2667 = vunpack.c.h.b16 %v1082
        %v2668 = vunpack.c.l.b16 %v1083
        %v2669 = vunpack.c.h.b16 %v1083
        %v2670 = vunpack.c.l.b16 %v1084
        %v2671 = vunpack.c.h.b16 %v1084
        %v2672 = vunpack.c.l.b16 %v1085
        %v2673 = vunpack.c.h.b16 %v1085
        %v2674 = vunpack.c.l.b16 %v1086
        %v2675 = vunpack.c.h.b16 %v1086
        %v2676 = vunpack.c.l.b16 %v1087
        %v2677 = vunpack.c.h.b16 %v1087
        %v2678 = vunpack.c.l.b16 %v1088
        %v2679 = vunpack.c.h.b16 %v1088
        %v2680 = vunpack.c.l.b16 %v1089
        %v2681 = vunpack.c.h.b16 %v1089
        %v2682 = vunpack.c.l.b16 %v1090
        %v2683 = vunpack.c.h.b16 %v1090
        %v2684 = vunpack.c.l.b16 %v1091
        %v2685 = vunpack.c.h.b16 %v1091
        %v2686 = vunpack.c.l.b16 %v1092
        %v2687 = vunpack.c.h.b16 %v1092
        %v2688 = vunpack.c.l.b16 %v1093
        %v2689 = vunpack.c.h.b16 %v1093
        %v2690 = vunpack.c.l.b16 %v1094
        %v2691 = vunpack.c.h.b16 %v1094
        %v2692 = vunpack.c.l.b16 %v1095
        %v2693 = vunpack.c.h.b16 %v1095
        %v2694 = vunpack.c.l.b16 %v1096
        %v2695 = vunpack.c.h.b16 %v1096
        %v2696 = vunpack.c.l.b16 %v1097
        %v2697 = vunpack.c.h.b16 %v1097
        %v2698 = vunpack.c.l.b16 %v1098
        %v2699 = vunpack.c.h.b16 %v1098
        %v2700 = vunpack.c.l.b16 %v1099
        %v2701 = vunpack.c.h.b16 %v1099
        %v2702 = vunpack.c.l.b16 %v1100
        %v2703 = vunpack.c.h.b16 %v1100
        %v2704 = vunpack.c.l.b16 %v1101
        %v2705 = vunpack.c.h.b16 %v1101
        %v2706 = vunpack.c.l.b16 %v1102
        %v2707 = vunpack.c.h.b16 %v1102
        %v2708 = vunpack.c.l.b16 %v1103
        %v2709 = vunpack.c.h.b16 %v1103
        %v2710 = vunpack.c.l.b16 %v1104
        %v2711 = vunpack.c.h.b16 %v1104
        %v2712 = vunpack.c.l.b16 %v1105
        %v2713 = vunpack.c.h.b16 %v1105
        %v2714 = vunpack.c.l.b16 %v1106
        %v2715 = vunpack.c.h.b16 %v1106
        %v2716 = vunpack.c.l.b16 %v1107
        %v2717 = vunpack.c.h.b16 %v1107
        %v2718 = vunpack.c.l.b16 %v1108
        %v2719 = vunpack.c.h.b16 %v1108
        %v2720 = vunpack.c.l.b16 %v1109
        %v2721 = vunpack.c.h.b16 %v1109
        %v2722 = vunpack.c.l.b16 %v1110
        %v2723 = vunpack.c.h.b16 %v1110
        %v2724 = vunpack.c.l.b16 %v1111
        %v2725 = vunpack.c.h.b16 %v1111
        %v2726 = vunpack.c.l.b16 %v1112
        %v2727 = vunpack.c.h.b16 %v1112
        %v2728 = vunpack.c.l.b16 %v1113
        %v2729 = vunpack.c.h.b16 %v1113
        %v2730 = vunpack.c.l.b16 %v1114
        %v2731 = vunpack.c.h.b16 %v1114
        %v2732 = vunpack.c.l.b16 %v1115
        %v2733 = vunpack.c.h.b16 %v1115
        %v2734 = vunpack.c.l.b16 %v1116
        %v2735 = vunpack.c.h.b16 %v1116
        %v2736 = vunpack.c.l.b16 %v1117
        %v2737 = vunpack.c.h.b16 %v1117
        %v2738 = vunpack.c.l.b16 %v1118
        %v2739 = vunpack.c.h.b16 %v1118
        %v2740 = vunpack.c.l.b16 %v1119
        %v2741 = vunpack.c.h.b16 %v1119
        %v2742 = vunpack.c.l.b16 %v1120
        %v2743 = vunpack.c.h.b16 %v1120
        %v2744 = vunpack.c.l.b16 %v1121
        %v2745 = vunpack.c.h.b16 %v1121
        %v2746 = vunpack.c.l.b16 %v1122
        %v2747 = vunpack.c.h.b16 %v1122
        %v2748 = vunpack.c.l.b16 %v1123
        %v2749 = vunpack.c.h.b16 %v1123
        %v2750 = vunpack.c.l.b16 %v1124
        %v2751 = vunpack.c.h.b16 %v1124
        %v2752 = vunpack.c.l.b16 %v1125
        %v2753 = vunpack.c.h.b16 %v1125
        %v2754 = vunpack.c.l.b16 %v1126
        %v2755 = vunpack.c.h.b16 %v1126
        %v2756 = vunpack.c.l.b16 %v1127
        %v2757 = vunpack.c.h.b16 %v1127
        %v2758 = vunpack.c.l.b16 %v1128
        %v2759 = vunpack.c.h.b16 %v1128
        %v2760 = vunpack.c.l.b16 %v1129
        %v2761 = vunpack.c.h.b16 %v1129
        %v2762 = vunpack.c.l.b16 %v1130
        %v2763 = vunpack.c.h.b16 %v1130
        %v2764 = vunpack.c.l.b16 %v1131
        %v2765 = vunpack.c.h.b16 %v1131
        %v2766 = vunpack.c.l.b16 %v1132
        %v2767 = vunpack.c.h.b16 %v1132
        %v2768 = vunpack.c.l.b16 %v1133
        %v2769 = vunpack.c.h.b16 %v1133
        %v2770 = vunpack.c.l.b16 %v1134
        %v2771 = vunpack.c.h.b16 %v1134
        %v2772 = vunpack.c.l.b16 %v1135
        %v2773 = vunpack.c.h.b16 %v1135
        %v2774 = vunpack.c.l.b16 %v1136
        %v2775 = vunpack.c.h.b16 %v1136
        %v2776 = vunpack.c.l.b16 %v1137
        %v2777 = vunpack.c.h.b16 %v1137
        %v2778 = vunpack.c.l.b16 %v1138
        %v2779 = vunpack.c.h.b16 %v1138
        %v2780 = vunpack.c.l.b16 %v1139
        %v2781 = vunpack.c.h.b16 %v1139
        %v2782 = vunpack.c.l.b16 %v1140
        %v2783 = vunpack.c.h.b16 %v1140
        %v2784 = vunpack.c.l.b16 %v1141
        %v2785 = vunpack.c.h.b16 %v1141
        %v2786 = vunpack.c.l.b16 %v1142
        %v2787 = vunpack.c.h.b16 %v1142
        %v2788 = vunpack.c.l.b16 %v1143
        %v2789 = vunpack.c.h.b16 %v1143
        %v2790 = vunpack.c.l.b16 %v1144
        %v2791 = vunpack.c.h.b16 %v1144
        %v2792 = vunpack.c.l.b16 %v1145
        %v2793 = vunpack.c.h.b16 %v1145
        %v2794 = vunpack.c.l.b16 %v1146
        %v2795 = vunpack.c.h.b16 %v1146
        %v2796 = vunpack.c.l.b16 %v1147
        %v2797 = vunpack.c.h.b16 %v1147
        %v2798 = vunpack.c.l.b16 %v1148
        %v2799 = vunpack.c.h.b16 %v1148
        %v2800 = vunpack.c.l.b16 %v1149
        %v2801 = vunpack.c.h.b16 %v1149
        %v2802 = vunpack.c.l.b16 %v1150
        %v2803 = vunpack.c.h.b16 %v1150
        %v2804 = vunpack.c.l.b16 %v1151
        %v2805 = vunpack.c.h.b16 %v1151
        %v2806 = vunpack.c.l.b16 %v1152
        %v2807 = vunpack.c.h.b16 %v1152
        %v2808 = vunpack.c.l.b16 %v1153
        %v2809 = vunpack.c.h.b16 %v1153
        %v2810 = vpack.c.b16 %v1710, %v1706
        %v2811 = vpack.c.b16 %v1711, %v1707
        %v2812 = vpack.c.b16 %v1712, %v1708
        %v2813 = vpack.c.b16 %v1713, %v1709
        %v2814 = vpack.c.b16 %v1718, %v1714
        %v2815 = vpack.c.b16 %v1719, %v1715
        %v2816 = vpack.c.b16 %v1720, %v1716
        %v2817 = vpack.c.b16 %v1721, %v1717
        %v2818 = vpack.c.b16 %v1726, %v1722
        %v2819 = vpack.c.b16 %v1727, %v1723
        %v2820 = vpack.c.b16 %v1728, %v1724
        %v2821 = vpack.c.b16 %v1729, %v1725
        %v2822 = vpack.c.b16 %v1734, %v1730
        %v2823 = vpack.c.b16 %v1735, %v1731
        %v2824 = vpack.c.b16 %v1736, %v1732
        %v2825 = vpack.c.b16 %v1737, %v1733
        %v2826 = vpack.c.b16 %v1742, %v1738
        %v2827 = vpack.c.b16 %v1743, %v1739
        %v2828 = vpack.c.b16 %v1744, %v1740
        %v2829 = vpack.c.b16 %v1745, %v1741
        %v2830 = vpack.c.b16 %v1750, %v1746
        %v2831 = vpack.c.b16 %v1751, %v1747
        %v2832 = vpack.c.b16 %v1752, %v1748
        %v2833 = vpack.c.b16 %v1753, %v1749
        %v2834 = vpack.c.b16 %v1758, %v1754
        %v2835 = vpack.c.b16 %v1759, %v1755
        %v2836 = vpack.c.b16 %v1760, %v1756
        %v2837 = vpack.c.b16 %v1761, %v1757
        %v2838 = vpack.c.b16 %v1766, %v1762
        %v2839 = vpack.c.b16 %v1767, %v1763
        %v2840 = vpack.c.b16 %v1768, %v1764
        %v2841 = vpack.c.b16 %v1769, %v1765
        %v2842 = vpack.c.b16 %v1774, %v1770
        %v2843 = vpack.c.b16 %v1775, %v1771
        %v2844 = vpack.c.b16 %v1776, %v1772
        %v2845 = vpack.c.b16 %v1777, %v1773
        %v2846 = vpack.c.b16 %v1782, %v1778
        %v2847 = vpack.c.b16 %v1783, %v1779
        %v2848 = vpack.c.b16 %v1784, %v1780
        %v2849 = vpack.c.b16 %v1785, %v1781
        %v2850 = vpack.c.b16 %v1790, %v1786
        %v2851 = vpack.c.b16 %v1791, %v1787
        %v2852 = vpack.c.b16 %v1792, %v1788
        %v2853 = vpack.c.b16 %v1793, %v1789
        %v2854 = vpack.c.b16 %v1798, %v1794
        %v2855 = vpack.c.b16 %v1799, %v1795
        %v2856 = vpack.c.b16 %v1800, %v1796
        %v2857 = vpack.c.b16 %v1801, %v1797
        %v2858 = vpack.c.b16 %v1806, %v1802
        %v2859 = vpack.c.b16 %v1807, %v1803
        %v2860 = vpack.c.b16 %v1808, %v1804
        %v2861 = vpack.c.b16 %v1809, %v1805
        %v2862 = vpack.c.b16 %v1814, %v1810
        %v2863 = vpack.c.b16 %v1815, %v1811
        %v2864 = vpack.c.b16 %v1816, %v1812
        %v2865 = vpack.c.b16 %v1817, %v1813
        %v2866 = vpack.c.b16 %v1822, %v1818
        %v2867 = vpack.c.b16 %v1823, %v1819
        %v2868 = vpack.c.b16 %v1824, %v1820
        %v2869 = vpack.c.b16 %v1825, %v1821
        %v2870 = vpack.c.b16 %v1830, %v1826
        %v2871 = vpack.c.b16 %v1831, %v1827
        %v2872 = vpack.c.b16 %v1832, %v1828
        %v2873 = vpack.c.b16 %v1833, %v1829
        %v2874 = vpack.c.b16 %v1838, %v1834
        %v2875 = vpack.c.b16 %v1839, %v1835
        %v2876 = vpack.c.b16 %v1840, %v1836
        %v2877 = vpack.c.b16 %v1841, %v1837
        %v2878 = vpack.c.b16 %v1846, %v1842
        %v2879 = vpack.c.b16 %v1847, %v1843
        %v2880 = vpack.c.b16 %v1848, %v1844
        %v2881 = vpack.c.b16 %v1849, %v1845
        %v2882 = vpack.c.b16 %v1854, %v1850
        %v2883 = vpack.c.b16 %v1855, %v1851
        %v2884 = vpack.c.b16 %v1856, %v1852
        %v2885 = vpack.c.b16 %v1857, %v1853
        %v2886 = vpack.c.b16 %v1862, %v1858
        %v2887 = vpack.c.b16 %v1863, %v1859
        %v2888 = vpack.c.b16 %v1864, %v1860
        %v2889 = vpack.c.b16 %v1865, %v1861
        %v2890 = vpack.c.b16 %v1870, %v1866
        %v2891 = vpack.c.b16 %v1871, %v1867
        %v2892 = vpack.c.b16 %v1872, %v1868
        %v2893 = vpack.c.b16 %v1873, %v1869
        %v2894 = vpack.c.b16 %v1878, %v1874
        %v2895 = vpack.c.b16 %v1879, %v1875
        %v2896 = vpack.c.b16 %v1880, %v1876
        %v2897 = vpack.c.b16 %v1881, %v1877
        %v2898 = vpack.c.b16 %v1886, %v1882
        %v2899 = vpack.c.b16 %v1887, %v1883
        %v2900 = vpack.c.b16 %v1888, %v1884
        %v2901 = vpack.c.b16 %v1889, %v1885
        %v2902 = vpack.c.b16 %v1894, %v1890
        %v2903 = vpack.c.b16 %v1895, %v1891
        %v2904 = vpack.c.b16 %v1896, %v1892
        %v2905 = vpack.c.b16 %v1897, %v1893
        %v2906 = vpack.c.b16 %v1902, %v1898
        %v2907 = vpack.c.b16 %v1903, %v1899
        %v2908 = vpack.c.b16 %v1904, %v1900
        %v2909 = vpack.c.b16 %v1905, %v1901
        %v2910 = vpack.c.b16 %v1910, %v1906
        %v2911 = vpack.c.b16 %v1911, %v1907
        %v2912 = vpack.c.b16 %v1912, %v1908
        %v2913 = vpack.c.b16 %v1913, %v1909
        %v2914 = vpack.c.b16 %v1918, %v1914
        %v2915 = vpack.c.b16 %v1919, %v1915
        %v2916 = vpack.c.b16 %v1920, %v1916
        %v2917 = vpack.c.b16 %v1921, %v1917
        %v2918 = vpack.c.b16 %v1926, %v1922
        %v2919 = vpack.c.b16 %v1927, %v1923
        %v2920 = vpack.c.b16 %v1928, %v1924
        %v2921 = vpack.c.b16 %v1929, %v1925
        %v2922 = vpack.c.b16 %v1934, %v1930
        %v2923 = vpack.c.b16 %v1935, %v1931
        %v2924 = vpack.c.b16 %v1936, %v1932
        %v2925 = vpack.c.b16 %v1937, %v1933
        %v2926 = vpack.c.b16 %v1942, %v1938
        %v2927 = vpack.c.b16 %v1943, %v1939
        %v2928 = vpack.c.b16 %v1944, %v1940
        %v2929 = vpack.c.b16 %v1945, %v1941
        %v2930 = vpack.c.b16 %v1950, %v1946
        %v2931 = vpack.c.b16 %v1951, %v1947
        %v2932 = vpack.c.b16 %v1952, %v1948
        %v2933 = vpack.c.b16 %v1953, %v1949
        %v2934 = vpack.c.b16 %v1958, %v1954
        %v2935 = vpack.c.b16 %v1959, %v1955
        %v2936 = vpack.c.b16 %v1960, %v1956
        %v2937 = vpack.c.b16 %v1961, %v1957
        %v2938 = vpack.c.b16 %v1966, %v1962
        %v2939 = vpack.c.b16 %v1967, %v1963
        %v2940 = vpack.c.b16 %v1968, %v1964
        %v2941 = vpack.c.b16 %v1969, %v1965
        %v2942 = vpack.c.b16 %v1974, %v1970
        %v2943 = vpack.c.b16 %v1975, %v1971
        %v2944 = vpack.c.b16 %v1976, %v1972
        %v2945 = vpack.c.b16 %v1977, %v1973
        %v2946 = vpack.c.b16 %v1982, %v1978
        %v2947 = vpack.c.b16 %v1983, %v1979
        %v2948 = vpack.c.b16 %v1984, %v1980
        %v2949 = vpack.c.b16 %v1985, %v1981
        %v2950 = vpack.c.b16 %v1990, %v1986
        %v2951 = vpack.c.b16 %v1991, %v1987
        %v2952 = vpack.c.b16 %v1992, %v1988
        %v2953 = vpack.c.b16 %v1993, %v1989
        %v2954 = vpack.c.b16 %v1998, %v1994
        %v2955 = vpack.c.b16 %v1999, %v1995
        %v2956 = vpack.c.b16 %v2000, %v1996
        %v2957 = vpack.c.b16 %v2001, %v1997
        %v2958 = vpack.c.b16 %v2006, %v2002
        %v2959 = vpack.c.b16 %v2007, %v2003
        %v2960 = vpack.c.b16 %v2008, %v2004
        %v2961 = vpack.c.b16 %v2009, %v2005
        %v2962 = vpack.c.b16 %v2014, %v2010
        %v2963 = vpack.c.b16 %v2015, %v2011
        %v2964 = vpack.c.b16 %v2016, %v2012
        %v2965 = vpack.c.b16 %v2017, %v2013
        %v2966 = vpack.c.b16 %v2022, %v2018
        %v2967 = vpack.c.b16 %v2023, %v2019
        %v2968 = vpack.c.b16 %v2024, %v2020
        %v2969 = vpack.c.b16 %v2025, %v2021
        %v2970 = vpack.c.b16 %v2030, %v2026
        %v2971 = vpack.c.b16 %v2031, %v2027
        %v2972 = vpack.c.b16 %v2032, %v2028
        %v2973 = vpack.c.b16 %v2033, %v2029
        %v2974 = vpack.c.b16 %v2038, %v2034
        %v2975 = vpack.c.b16 %v2039, %v2035
        %v2976 = vpack.c.b16 %v2040, %v2036
        %v2977 = vpack.c.b16 %v2041, %v2037
        %v2978 = vpack.c.b16 %v2046, %v2042
        %v2979 = vpack.c.b16 %v2047, %v2043
        %v2980 = vpack.c.b16 %v2048, %v2044
        %v2981 = vpack.c.b16 %v2049, %v2045
        %v2982 = vpack.c.b16 %v2054, %v2050
        %v2983 = vpack.c.b16 %v2055, %v2051
        %v2984 = vpack.c.b16 %v2056, %v2052
        %v2985 = vpack.c.b16 %v2057, %v2053
        %v2986 = vpack.c.b16 %v2062, %v2058
        %v2987 = vpack.c.b16 %v2063, %v2059
        %v2988 = vpack.c.b16 %v2064, %v2060
        %v2989 = vpack.c.b16 %v2065, %v2061
        %v2990 = vpack.c.b16 %v2070, %v2066
        %v2991 = vpack.c.b16 %v2071, %v2067
        %v2992 = vpack.c.b16 %v2072, %v2068
        %v2993 = vpack.c.b16 %v2073, %v2069
        %v2994 = vpack.c.b16 %v2078, %v2074
        %v2995 = vpack.c.b16 %v2079, %v2075
        %v2996 = vpack.c.b16 %v2080, %v2076
        %v2997 = vpack.c.b16 %v2081, %v2077
        %v2998 = vpack.c.b16 %v2086, %v2082
        %v2999 = vpack.c.b16 %v2087, %v2083
        %v3000 = vpack.c.b16 %v2088, %v2084
        %v3001 = vpack.c.b16 %v2089, %v2085
        %v3002 = vpack.c.b16 %v2094, %v2090
        %v3003 = vpack.c.b16 %v2095, %v2091
        %v3004 = vpack.c.b16 %v2096, %v2092
        %v3005 = vpack.c.b16 %v2097, %v2093
        %v3006 = vpack.c.b16 %v2102, %v2098
        %v3007 = vpack.c.b16 %v2103, %v2099
        %v3008 = vpack.c.b16 %v2104, %v2100
        %v3009 = vpack.c.b16 %v2105, %v2101
        %v3010 = vpack.c.b16 %v2110, %v2106
        %v3011 = vpack.c.b16 %v2111, %v2107
        %v3012 = vpack.c.b16 %v2112, %v2108
        %v3013 = vpack.c.b16 %v2113, %v2109
        %v3014 = vpack.c.b16 %v2118, %v2114
        %v3015 = vpack.c.b16 %v2119, %v2115
        %v3016 = vpack.c.b16 %v2120, %v2116
        %v3017 = vpack.c.b16 %v2121, %v2117
        %v3018 = vpack.c.b16 %v2126, %v2122
        %v3019 = vpack.c.b16 %v2127, %v2123
        %v3020 = vpack.c.b16 %v2128, %v2124
        %v3021 = vpack.c.b16 %v2129, %v2125
        %v3022 = vpack.c.b16 %v2134, %v2130
        %v3023 = vpack.c.b16 %v2135, %v2131
        %v3024 = vpack.c.b16 %v2136, %v2132
        %v3025 = vpack.c.b16 %v2137, %v2133
        %v3026 = vpack.c.b16 %v2142, %v2138
        %v3027 = vpack.c.b16 %v2143, %v2139
        %v3028 = vpack.c.b16 %v2144, %v2140
        %v3029 = vpack.c.b16 %v2145, %v2141
        %v3030 = vpack.c.b16 %v2150, %v2146
        %v3031 = vpack.c.b16 %v2151, %v2147
        %v3032 = vpack.c.b16 %v2152, %v2148
        %v3033 = vpack.c.b16 %v2153, %v2149
        %v3034 = vpack.c.b16 %v2158, %v2154
        %v3035 = vpack.c.b16 %v2159, %v2155
        %v3036 = vpack.c.b16 %v2160, %v2156
        %v3037 = vpack.c.b16 %v2161, %v2157
        %v3038 = vpack.c.b16 %v2166, %v2162
        %v3039 = vpack.c.b16 %v2167, %v2163
        %v3040 = vpack.c.b16 %v2168, %v2164
        %v3041 = vpack.c.b16 %v2169, %v2165
        %v3042 = vpack.c.b16 %v2174, %v2170
        %v3043 = vpack.c.b16 %v2175, %v2171
        %v3044 = vpack.c.b16 %v2176, %v2172
        %v3045 = vpack.c.b16 %v2177, %v2173
        %v3046 = vpack.c.b16 %v2182, %v2178
        %v3047 = vpack.c.b16 %v2183, %v2179
        %v3048 = vpack.c.b16 %v2184, %v2180
        %v3049 = vpack.c.b16 %v2185, %v2181
        %v3050 = vpack.c.b16 %v2190, %v2186
        %v3051 = vpack.c.b16 %v2191, %v2187
        %v3052 = vpack.c.b16 %v2192, %v2188
        %v3053 = vpack.c.b16 %v2193, %v2189
        %v3054 = vpack.c.b16 %v2198, %v2194
        %v3055 = vpack.c.b16 %v2199, %v2195
        %v3056 = vpack.c.b16 %v2200, %v2196
        %v3057 = vpack.c.b16 %v2201, %v2197
        %v3058 = vpack.c.b16 %v2206, %v2202
        %v3059 = vpack.c.b16 %v2207, %v2203
        %v3060 = vpack.c.b16 %v2208, %v2204
        %v3061 = vpack.c.b16 %v2209, %v2205
        %v3062 = vpack.c.b16 %v2214, %v2210
        %v3063 = vpack.c.b16 %v2215, %v2211
        %v3064 = vpack.c.b16 %v2216, %v2212
        %v3065 = vpack.c.b16 %v2217, %v2213
        %v3066 = vpack.c.b16 %v2222, %v2218
        %v3067 = vpack.c.b16 %v2223, %v2219
        %v3068 = vpack.c.b16 %v2224, %v2220
        %v3069 = vpack.c.b16 %v2225, %v2221
        %v3070 = vpack.c.b16 %v2230, %v2226
        %v3071 = vpack.c.b16 %v2231, %v2227
        %v3072 = vpack.c.b16 %v2232, %v2228
        %v3073 = vpack.c.b16 %v2233, %v2229
        %v3074 = vpack.c.b16 %v2238, %v2234
        %v3075 = vpack.c.b16 %v2239, %v2235
        %v3076 = vpack.c.b16 %v2240, %v2236
        %v3077 = vpack.c.b16 %v2241, %v2237
        %v3078 = vpack.c.b16 %v2246, %v2242
        %v3079 = vpack.c.b16 %v2247, %v2243
        %v3080 = vpack.c.b16 %v2248, %v2244
        %v3081 = vpack.c.b16 %v2249, %v2245
        %v3082 = vpack.c.b16 %v2254, %v2250
        %v3083 = vpack.c.b16 %v2255, %v2251
        %v3084 = vpack.c.b16 %v2256, %v2252
        %v3085 = vpack.c.b16 %v2257, %v2253
        %v3086 = vpack.c.b16 %v2262, %v2258
        %v3087 = vpack.c.b16 %v2263, %v2259
        %v3088 = vpack.c.b16 %v2264, %v2260
        %v3089 = vpack.c.b16 %v2265, %v2261
        %v3090 = vpack.c.b16 %v2270, %v2266
        %v3091 = vpack.c.b16 %v2271, %v2267
        %v3092 = vpack.c.b16 %v2272, %v2268
        %v3093 = vpack.c.b16 %v2273, %v2269
        %v3094 = vpack.c.b16 %v2278, %v2274
        %v3095 = vpack.c.b16 %v2279, %v2275
        %v3096 = vpack.c.b16 %v2280, %v2276
        %v3097 = vpack.c.b16 %v2281, %v2277
        %v3098 = vpack.c.b16 %v2286, %v2282
        %v3099 = vpack.c.b16 %v2287, %v2283
        %v3100 = vpack.c.b16 %v2288, %v2284
        %v3101 = vpack.c.b16 %v2289, %v2285
        %v3102 = vpack.c.b16 %v2294, %v2290
        %v3103 = vpack.c.b16 %v2295, %v2291
        %v3104 = vpack.c.b16 %v2296, %v2292
        %v3105 = vpack.c.b16 %v2297, %v2293
        %v3106 = vpack.c.b16 %v2302, %v2298
        %v3107 = vpack.c.b16 %v2303, %v2299
        %v3108 = vpack.c.b16 %v2304, %v2300
        %v3109 = vpack.c.b16 %v2305, %v2301
        %v3110 = vpack.c.b16 %v2310, %v2306
        %v3111 = vpack.c.b16 %v2311, %v2307
        %v3112 = vpack.c.b16 %v2312, %v2308
        %v3113 = vpack.c.b16 %v2313, %v2309
        %v3114 = vpack.c.b16 %v2318, %v2314
        %v3115 = vpack.c.b16 %v2319, %v2315
        %v3116 = vpack.c.b16 %v2320, %v2316
        %v3117 = vpack.c.b16 %v2321, %v2317
        %v3118 = vpack.c.b16 %v2326, %v2322
        %v3119 = vpack.c.b16 %v2327, %v2323
        %v3120 = vpack.c.b16 %v2328, %v2324
        %v3121 = vpack.c.b16 %v2329, %v2325
        %v3122 = vpack.c.b16 %v2334, %v2330
        %v3123 = vpack.c.b16 %v2335, %v2331
        %v3124 = vpack.c.b16 %v2336, %v2332
        %v3125 = vpack.c.b16 %v2337, %v2333
        %v3126 = vpack.c.b16 %v2342, %v2338
        %v3127 = vpack.c.b16 %v2343, %v2339
        %v3128 = vpack.c.b16 %v2344, %v2340
        %v3129 = vpack.c.b16 %v2345, %v2341
        %v3130 = vpack.c.b16 %v2350, %v2346
        %v3131 = vpack.c.b16 %v2351, %v2347
        %v3132 = vpack.c.b16 %v2352, %v2348
        %v3133 = vpack.c.b16 %v2353, %v2349
        %v3134 = vpack.c.b16 %v2358, %v2354
        %v3135 = vpack.c.b16 %v2359, %v2355
        %v3136 = vpack.c.b16 %v2360, %v2356
        %v3137 = vpack.c.b16 %v2361, %v2357
        %v3138 = vpack.c.b16 %v2366, %v2362
        %v3139 = vpack.c.b16 %v2367, %v2363
        %v3140 = vpack.c.b16 %v2368, %v2364
        %v3141 = vpack.c.b16 %v2369, %v2365
        %v3142 = vpack.c.b16 %v2374, %v2370
        %v3143 = vpack.c.b16 %v2375, %v2371
        %v3144 = vpack.c.b16 %v2376, %v2372
        %v3145 = vpack.c.b16 %v2377, %v2373
        %v3146 = vpack.c.b16 %v2382, %v2378
        %v3147 = vpack.c.b16 %v2383, %v2379
        %v3148 = vpack.c.b16 %v2384, %v2380
        %v3149 = vpack.c.b16 %v2385, %v2381
        %v3150 = vpack.c.b16 %v2390, %v2386
        %v3151 = vpack.c.b16 %v2391, %v2387
        %v3152 = vpack.c.b16 %v2392, %v2388
        %v3153 = vpack.c.b16 %v2393, %v2389
        %v3154 = vpack.c.b16 %v2398, %v2394
        %v3155 = vpack.c.b16 %v2399, %v2395
        %v3156 = vpack.c.b16 %v2400, %v2396
        %v3157 = vpack.c.b16 %v2401, %v2397
        %v3158 = vpack.c.b16 %v2406, %v2402
        %v3159 = vpack.c.b16 %v2407, %v2403
        %v3160 = vpack.c.b16 %v2408, %v2404
        %v3161 = vpack.c.b16 %v2409, %v2405
        %v3162 = vpack.c.b16 %v2414, %v2410
        %v3163 = vpack.c.b16 %v2415, %v2411
        %v3164 = vpack.c.b16 %v2416, %v2412
        %v3165 = vpack.c.b16 %v2417, %v2413
        %v3166 = vpack.c.b16 %v2422, %v2418
        %v3167 = vpack.c.b16 %v2423, %v2419
        %v3168 = vpack.c.b16 %v2424, %v2420
        %v3169 = vpack.c.b16 %v2425, %v2421
        %v3170 = vpack.c.b16 %v2430, %v2426
        %v3171 = vpack.c.b16 %v2431, %v2427
        %v3172 = vpack.c.b16 %v2432, %v2428
        %v3173 = vpack.c.b16 %v2433, %v2429
        %v3174 = vpack.c.b16 %v2438, %v2434
        %v3175 = vpack.c.b16 %v2439, %v2435
        %v3176 = vpack.c.b16 %v2440, %v2436
        %v3177 = vpack.c.b16 %v2441, %v2437
        %v3178 = vpack.c.b16 %v2446, %v2442
        %v3179 = vpack.c.b16 %v2447, %v2443
        %v3180 = vpack.c.b16 %v2448, %v2444
        %v3181 = vpack.c.b16 %v2449, %v2445
        %v3182 = vpack.c.b16 %v2454, %v2450
        %v3183 = vpack.c.b16 %v2455, %v2451
        %v3184 = vpack.c.b16 %v2456, %v2452
        %v3185 = vpack.c.b16 %v2457, %v2453
        %v3186 = vpack.c.b16 %v2462, %v2458
        %v3187 = vpack.c.b16 %v2463, %v2459
        %v3188 = vpack.c.b16 %v2464, %v2460
        %v3189 = vpack.c.b16 %v2465, %v2461
        %v3190 = vpack.c.b16 %v2470, %v2466
        %v3191 = vpack.c.b16 %v2471, %v2467
        %v3192 = vpack.c.b16 %v2472, %v2468
        %v3193 = vpack.c.b16 %v2473, %v2469
        %v3194 = vpack.c.b16 %v2478, %v2474
        %v3195 = vpack.c.b16 %v2479, %v2475
        %v3196 = vpack.c.b16 %v2480, %v2476
        %v3197 = vpack.c.b16 %v2481, %v2477
        %v3198 = vpack.c.b16 %v2486, %v2482
        %v3199 = vpack.c.b16 %v2487, %v2483
        %v3200 = vpack.c.b16 %v2488, %v2484
        %v3201 = vpack.c.b16 %v2489, %v2485
        %v3202 = vpack.c.b16 %v2494, %v2490
        %v3203 = vpack.c.b16 %v2495, %v2491
        %v3204 = vpack.c.b16 %v2496, %v2492
        %v3205 = vpack.c.b16 %v2497, %v2493
        %v3206 = vpack.c.b16 %v2502, %v2498
        %v3207 = vpack.c.b16 %v2503, %v2499
        %v3208 = vpack.c.b16 %v2504, %v2500
        %v3209 = vpack.c.b16 %v2505, %v2501
        %v3210 = vpack.c.b16 %v2510, %v2506
        %v3211 = vpack.c.b16 %v2511, %v2507
        %v3212 = vpack.c.b16 %v2512, %v2508
        %v3213 = vpack.c.b16 %v2513, %v2509
        %v3214 = vpack.c.b16 %v2518, %v2514
        %v3215 = vpack.c.b16 %v2519, %v2515
        %v3216 = vpack.c.b16 %v2520, %v2516
        %v3217 = vpack.c.b16 %v2521, %v2517
        %v3218 = vpack.c.b16 %v2526, %v2522
        %v3219 = vpack.c.b16 %v2527, %v2523
        %v3220 = vpack.c.b16 %v2528, %v2524
        %v3221 = vpack.c.b16 %v2529, %v2525
        %v3222 = vpack.c.b16 %v2534, %v2530
        %v3223 = vpack.c.b16 %v2535, %v2531
        %v3224 = vpack.c.b16 %v2536, %v2532
        %v3225 = vpack.c.b16 %v2537, %v2533
        %v3226 = vpack.c.b16 %v2542, %v2538
        %v3227 = vpack.c.b16 %v2543, %v2539
        %v3228 = vpack.c.b16 %v2544, %v2540
        %v3229 = vpack.c.b16 %v2545, %v2541
        %v3230 = vpack.c.b16 %v2550, %v2546
        %v3231 = vpack.c.b16 %v2551, %v2547
        %v3232 = vpack.c.b16 %v2552, %v2548
        %v3233 = vpack.c.b16 %v2553, %v2549
        %v3234 = vpack.c.b16 %v2558, %v2554
        %v3235 = vpack.c.b16 %v2559, %v2555
        %v3236 = vpack.c.b16 %v2560, %v2556
        %v3237 = vpack.c.b16 %v2561, %v2557
        %v3238 = vpack.c.b16 %v2566, %v2562
        %v3239 = vpack.c.b16 %v2567, %v2563
        %v3240 = vpack.c.b16 %v2568, %v2564
        %v3241 = vpack.c.b16 %v2569, %v2565
        %v3242 = vpack.c.b16 %v2574, %v2570
        %v3243 = vpack.c.b16 %v2575, %v2571
        %v3244 = vpack.c.b16 %v2576, %v2572
        %v3245 = vpack.c.b16 %v2577, %v2573
        %v3246 = vpack.c.b16 %v2582, %v2578
        %v3247 = vpack.c.b16 %v2583, %v2579
        %v3248 = vpack.c.b16 %v2584, %v2580
        %v3249 = vpack.c.b16 %v2585, %v2581
        %v3250 = vpack.c.b16 %v2590, %v2586
        %v3251 = vpack.c.b16 %v2591, %v2587
        %v3252 = vpack.c.b16 %v2592, %v2588
        %v3253 = vpack.c.b16 %v2593, %v2589
        %v3254 = vpack.c.b16 %v2598, %v2594
        %v3255 = vpack.c.b16 %v2599, %v2595
        %v3256 = vpack.c.b16 %v2600, %v2596
        %v3257 = vpack.c.b16 %v2601, %v2597
        %v3258 = vpack.c.b16 %v2606, %v2602
        %v3259 = vpack.c.b16 %v2607, %v2603
        %v3260 = vpack.c.b16 %v2608, %v2604
        %v3261 = vpack.c.b16 %v2609, %v2605
        %v3262 = vpack.c.b16 %v2614, %v2610
        %v3263 = vpack.c.b16 %v2615, %v2611
        %v3264 = vpack.c.b16 %v2616, %v2612
        %v3265 = vpack.c.b16 %v2617, %v2613
        %v3266 = vpack.c.b16 %v2622, %v2618
        %v3267 = vpack.c.b16 %v2623, %v2619
        %v3268 = vpack.c.b16 %v2624, %v2620
        %v3269 = vpack.c.b16 %v2625, %v2621
        %v3270 = vpack.c.b16 %v2630, %v2626
        %v3271 = vpack.c.b16 %v2631, %v2627
        %v3272 = vpack.c.b16 %v2632, %v2628
        %v3273 = vpack.c.b16 %v2633, %v2629
        %v3274 = vpack.c.b16 %v2638, %v2634
        %v3275 = vpack.c.b16 %v2639, %v2635
        %v3276 = vpack.c.b16 %v2640, %v2636
        %v3277 = vpack.c.b16 %v2641, %v2637
        %v3278 = vpack.c.b16 %v2646, %v2642
        %v3279 = vpack.c.b16 %v2647, %v2643
        %v3280 = vpack.c.b16 %v2648, %v2644
        %v3281 = vpack.c.b16 %v2649, %v2645
        %v3282 = vpack.c.b16 %v2654, %v2650
        %v3283 = vpack.c.b16 %v2655, %v2651
        %v3284 = vpack.c.b16 %v2656, %v2652
        %v3285 = vpack.c.b16 %v2657, %v2653
        %v3286 = vpack.c.b16 %v2662, %v2658
        %v3287 = vpack.c.b16 %v2663, %v2659
        %v3288 = vpack.c.b16 %v2664, %v2660
        %v3289 = vpack.c.b16 %v2665, %v2661
        %v3290 = vpack.c.b16 %v2670, %v2666
        %v3291 = vpack.c.b16 %v2671, %v2667
        %v3292 = vpack.c.b16 %v2672, %v2668
        %v3293 = vpack.c.b16 %v2673, %v2669
        %v3294 = vpack.c.b16 %v2678, %v2674
        %v3295 = vpack.c.b16 %v2679, %v2675
        %v3296 = vpack.c.b16 %v2680, %v2676
        %v3297 = vpack.c.b16 %v2681, %v2677
        %v3298 = vpack.c.b16 %v2686, %v2682
        %v3299 = vpack.c.b16 %v2687, %v2683
        %v3300 = vpack.c.b16 %v2688, %v2684
        %v3301 = vpack.c.b16 %v2689, %v2685
        %v3302 = vpack.c.b16 %v2694, %v2690
        %v3303 = vpack.c.b16 %v2695, %v2691
        %v3304 = vpack.c.b16 %v2696, %v2692
        %v3305 = vpack.c.b16 %v2697, %v2693
        %v3306 = vpack.c.b16 %v2702, %v2698
        %v3307 = vpack.c.b16 %v2703, %v2699
        %v3308 = vpack.c.b16 %v2704, %v2700
        %v3309 = vpack.c.b16 %v2705, %v2701
        %v3310 = vpack.c.b16 %v2710, %v2706
        %v3311 = vpack.c.b16 %v2711, %v2707
        %v3312 = vpack.c.b16 %v2712, %v2708
        %v3313 = vpack.c.b16 %v2713, %v2709
        %v3314 = vpack.c.b16 %v2718, %v2714
        %v3315 = vpack.c.b16 %v2719, %v2715
        %v3316 = vpack.c.b16 %v2720, %v2716
        %v3317 = vpack.c.b16 %v2721, %v2717
        %v3318 = vpack.c.b16 %v2726, %v2722
        %v3319 = vpack.c.b16 %v2727, %v2723
        %v3320 = vpack.c.b16 %v2728, %v2724
        %v3321 = vpack.c.b16 %v2729, %v2725
        %v3322 = vpack.c.b16 %v2734, %v2730
        %v3323 = vpack.c.b16 %v2735, %v2731
        %v3324 = vpack.c.b16 %v2736, %v2732
        %v3325 = vpack.c.b16 %v2737, %v2733
        %v3326 = vpack.c.b16 %v2742, %v2738
        %v3327 = vpack.c.b16 %v2743, %v2739
        %v3328 = vpack.c.b16 %v2744, %v2740
        %v3329 = vpack.c.b16 %v2745, %v2741
        %v3330 = vpack.c.b16 %v2750, %v2746
        %v3331 = vpack.c.b16 %v2751, %v2747
        %v3332 = vpack.c.b16 %v2752, %v2748
        %v3333 = vpack.c.b16 %v2753, %v2749
        %v3334 = vpack.c.b16 %v2758, %v2754
        %v3335 = vpack.c.b16 %v2759, %v2755
        %v3336 = vpack.c.b16 %v2760, %v2756
        %v3337 = vpack.c.b16 %v2761, %v2757
        %v3338 = vpack.c.b16 %v2766, %v2762
        %v3339 = vpack.c.b16 %v2767, %v2763
        %v3340 = vpack.c.b16 %v2768, %v2764
        %v3341 = vpack.c.b16 %v2769, %v2765
        %v3342 = vpack.c.b16 %v2774, %v2770
        %v3343 = vpack.c.b16 %v2775, %v2771
        %v3344 = vpack.c.b16 %v2776, %v2772
        %v3345 = vpack.c.b16 %v2777, %v2773
        %v3346 = vpack.c.b16 %v2782, %v2778
        %v3347 = vpack.c.b16 %v2783, %v2779
        %v3348 = vpack.c.b16 %v2784, %v2780
        %v3349 = vpack.c.b16 %v2785, %v2781
        %v3350 = vpack.c.b16 %v2790, %v2786
        %v3351 = vpack.c.b16 %v2791, %v2787
        %v3352 = vpack.c.b16 %v2792, %v2788
        %v3353 = vpack.c.b16 %v2793, %v2789
        %v3354 = vpack.c.b16 %v2798, %v2794
        %v3355 = vpack.c.b16 %v2799, %v2795
        %v3356 = vpack.c.b16 %v2800, %v2796
        %v3357 = vpack.c.b16 %v2801, %v2797
        %v3358 = vpack.c.b16 %v2806, %v2802
        %v3359 = vpack.c.b16 %v2807, %v2803
        %v3360 = vpack.c.b16 %v2808, %v2804
        %v3361 = vpack.c.b16 %v2809, %v2805
        %vm3914 = vcmask 261120
        %v3916 = vsel %vm3914, %v547, 0
        %v3919 = vsel %vm3914, %v565, 0
        %v3922 = vsel %vm3914, %v583, 0
        %v3925 = vsel %vm3914, %v601, 0
        %3927 = vmatprep.subr.bf16.mxu0 %v2839
        %3928 = vmatpush1.bf16.msra.mxu0 %v2838
        %3929 = vmatprep.subr.bf16.mxu0 %v2835
        %3930 = vmatpush1.bf16.msra.mxu0 %v2834
        %3931 = vmatprep.subr.bf16.mxu0 %v2831
        %3932 = vmatpush1.bf16.msra.mxu0 %v2830
        %3933 = vmatprep.subr.bf16.mxu0 %v2827
        %3934 = vmatpush1.bf16.msra.mxu0 %v2826
        %3935 = vmatprep.subr.bf16.mxu0 %v2823
        %3936 = vmatpush1.bf16.msra.mxu0 %v2822
        %3937 = vmatprep.subr.bf16.mxu0 %v2819
        %3938 = vmatpush1.bf16.msra.mxu0 %v2818
        %3939 = vmatprep.subr.bf16.mxu0 %v2815
        %3940 = vmatpush1.bf16.msra.mxu0 %v2814
        %3941 = vmatprep.subr.bf16.mxu0 %v2811
        %3942 = vmatpush1.bf16.msra.mxu0 %v2810
        %3943 = vmatprep.subr.bf16.mxu0 %v2871
        %3944 = vmatpush2.bf16.msra.mxu0 %v2870
        %3945 = vmatprep.subr.bf16.mxu0 %v2867
        %3946 = vmatpush2.bf16.msra.mxu0 %v2866
        %3947 = vmatprep.subr.bf16.mxu0 %v2863
        %3948 = vmatpush2.bf16.msra.mxu0 %v2862
        %3949 = vmatprep.subr.bf16.mxu0 %v2859
        %3950 = vmatpush2.bf16.msra.mxu0 %v2858
        %3951 = vmatprep.subr.bf16.mxu0 %v2855
        %3952 = vmatpush2.bf16.msra.mxu0 %v2854
        %3953 = vmatprep.subr.bf16.mxu0 %v2851
        %3954 = vmatpush2.bf16.msra.mxu0 %v2850
        %3955 = vmatprep.subr.bf16.mxu0 %v2847
        %3956 = vmatpush2.bf16.msra.mxu0 %v2846
        %3957 = vmatprep.subr.bf16.mxu0 %v2843
        %3958 = vmatpush2.bf16.msra.mxu0 %v2842
        %3959 = vmatprep.mubr.bf16.mxu0 %v531
        %3960 = vmatmul.mubr.bf16.gmra.mxu0 %v530
        %v3961 = vpop.f32.mrf.mxu0
        %v3962 = vadd.f32 0.0, %v3961
        %v3963 = vpop.f32.mrf.mxu0
        %v3964 = vadd.f32 0.0, %v3963
        %v3965 = vpop.f32.mrf.mxu0
        %v3966 = vadd.f32 0.0, %v3965
        %v3967 = vpop.f32.mrf.mxu0
        %v3968 = vadd.f32 0.0, %v3967
        %3969 = vmatprep.mubr.bf16.mxu0 %v549
        %3970 = vmatmul.mubr.bf16.gmra.mxu0 %v548
        %v3971 = vpop.f32.mrf.mxu0
        %v3972 = vadd.f32 0.0, %v3971
        %v3973 = vpop.f32.mrf.mxu0
        %v3974 = vadd.f32 0.0, %v3973
        %v3975 = vpop.f32.mrf.mxu0
        %v3976 = vadd.f32 0.0, %v3975
        %v3977 = vpop.f32.mrf.mxu0
        %v3978 = vadd.f32 0.0, %v3977
        %3979 = vmatprep.mubr.bf16.mxu0 %v567
        %3980 = vmatmul.mubr.bf16.gmra.mxu0 %v566
        %v3981 = vpop.f32.mrf.mxu0
        %v3982 = vadd.f32 0.0, %v3981
        %v3983 = vpop.f32.mrf.mxu0
        %v3984 = vadd.f32 0.0, %v3983
        %v3985 = vpop.f32.mrf.mxu0
        %v3986 = vadd.f32 0.0, %v3985
        %v3987 = vpop.f32.mrf.mxu0
        %v3988 = vadd.f32 0.0, %v3987
        %3989 = vmatprep.mubr.bf16.mxu0 %v585
        %3990 = vmatmul.mubr.bf16.gmra.mxu0 %v584
        %v3991 = vpop.f32.mrf.mxu0
        %v3992 = vadd.f32 0.0, %v3991
        %v3993 = vpop.f32.mrf.mxu0
        %v3994 = vadd.f32 0.0, %v3993
        %v3995 = vpop.f32.mrf.mxu0
        %v3996 = vpop.f32.mrf.mxu0
        %3997 = vdwg.mxu0
        %3998 = vmatprep.subr.bf16.mxu0 %v2903
        %3999 = vmatpush1.bf16.msra.mxu0 %v2902
        %4000 = vmatprep.subr.bf16.mxu0 %v2899
        %4001 = vmatpush1.bf16.msra.mxu0 %v2898
        %4002 = vmatprep.subr.bf16.mxu0 %v2895
        %4003 = vmatpush1.bf16.msra.mxu0 %v2894
        %4004 = vmatprep.subr.bf16.mxu0 %v2891
        %4005 = vmatpush1.bf16.msra.mxu0 %v2890
        %4006 = vmatprep.subr.bf16.mxu0 %v2887
        %4007 = vmatpush1.bf16.msra.mxu0 %v2886
        %4008 = vmatprep.subr.bf16.mxu0 %v2883
        %4009 = vmatpush1.bf16.msra.mxu0 %v2882
        %4010 = vmatprep.subr.bf16.mxu0 %v2879
        %4011 = vmatpush1.bf16.msra.mxu0 %v2878
        %4012 = vmatprep.subr.bf16.mxu0 %v2875
        %4013 = vmatpush1.bf16.msra.mxu0 %v2874
        %4014 = vmatprep.subr.bf16.mxu0 %v2935
        %4015 = vmatpush2.bf16.msra.mxu0 %v2934
        %4016 = vmatprep.subr.bf16.mxu0 %v2931
        %4017 = vmatpush2.bf16.msra.mxu0 %v2930
        %4018 = vmatprep.subr.bf16.mxu0 %v2927
        %4019 = vmatpush2.bf16.msra.mxu0 %v2926
        %4020 = vmatprep.subr.bf16.mxu0 %v2923
        %4021 = vmatpush2.bf16.msra.mxu0 %v2922
        %4022 = vmatprep.subr.bf16.mxu0 %v2919
        %4023 = vmatpush2.bf16.msra.mxu0 %v2918
        %4024 = vmatprep.subr.bf16.mxu0 %v2915
        %4025 = vmatpush2.bf16.msra.mxu0 %v2914
        %4026 = vmatprep.subr.bf16.mxu0 %v2911
        %4027 = vmatpush2.bf16.msra.mxu0 %v2910
        %4028 = vmatprep.subr.bf16.mxu0 %v2907
        %4029 = vmatpush2.bf16.msra.mxu0 %v2906
        %4030 = vmatprep.mubr.bf16.mxu0 %v533
        %4031 = vmatmul.mubr.bf16.gmra.mxu0 %v532
        %v4032 = vpop.f32.mrf.mxu0
        %v4033 = vadd.f32 %v3962, %v4032
        %v4034 = vpop.f32.mrf.mxu0
        %v4035 = vadd.f32 %v3964, %v4034
        %v4036 = vpop.f32.mrf.mxu0
        %v4037 = vadd.f32 %v3966, %v4036
        %v4038 = vpop.f32.mrf.mxu0
        %v4039 = vadd.f32 %v3968, %v4038
        %4040 = vmatprep.mubr.bf16.mxu0 %v551
        %4041 = vmatmul.mubr.bf16.gmra.mxu0 %v550
        %v4042 = vpop.f32.mrf.mxu0
        %v4043 = vadd.f32 %v3972, %v4042
        %v4044 = vpop.f32.mrf.mxu0
        %v4045 = vadd.f32 %v3974, %v4044
        %v4046 = vpop.f32.mrf.mxu0
        %v4047 = vadd.f32 %v3976, %v4046
        %v4048 = vpop.f32.mrf.mxu0
        %v4049 = vadd.f32 %v3978, %v4048
        %4050 = vmatprep.mubr.bf16.mxu0 %v569
        %4051 = vmatmul.mubr.bf16.gmra.mxu0 %v568
        %v4052 = vpop.f32.mrf.mxu0
        %v4053 = vadd.f32 %v3982, %v4052
        %v4054 = vpop.f32.mrf.mxu0
        %v4055 = vadd.f32 %v3984, %v4054
        %v4056 = vpop.f32.mrf.mxu0
        %v4057 = vadd.f32 %v3986, %v4056
        %v4058 = vpop.f32.mrf.mxu0
        %v4059 = vadd.f32 %v3988, %v4058
        %4060 = vmatprep.mubr.bf16.mxu0 %v587
        %4061 = vmatmul.mubr.bf16.gmra.mxu0 %v586
        %v4062 = vpop.f32.mrf.mxu0
        %v4063 = vadd.f32 %v3992, %v4062
        %v4064 = vpop.f32.mrf.mxu0
        %v4065 = vadd.f32 %v3994, %v4064
        %v4066 = vpop.f32.mrf.mxu0
        %v4067 = vpop.f32.mrf.mxu0
        %4068 = vdwg.mxu0
        %4069 = vmatprep.subr.bf16.mxu0 %v2967
        %4070 = vmatpush1.bf16.msra.mxu0 %v2966
        %4071 = vmatprep.subr.bf16.mxu0 %v2963
        %4072 = vmatpush1.bf16.msra.mxu0 %v2962
        %4073 = vmatprep.subr.bf16.mxu0 %v2959
        %4074 = vmatpush1.bf16.msra.mxu0 %v2958
        %4075 = vmatprep.subr.bf16.mxu0 %v2955
        %4076 = vmatpush1.bf16.msra.mxu0 %v2954
        %4077 = vmatprep.subr.bf16.mxu0 %v2951
        %4078 = vmatpush1.bf16.msra.mxu0 %v2950
        %4079 = vmatprep.subr.bf16.mxu0 %v2947
        %4080 = vmatpush1.bf16.msra.mxu0 %v2946
        %4081 = vmatprep.subr.bf16.mxu0 %v2943
        %4082 = vmatpush1.bf16.msra.mxu0 %v2942
        %4083 = vmatprep.subr.bf16.mxu0 %v2939
        %4084 = vmatpush1.bf16.msra.mxu0 %v2938
        %4085 = vmatprep.subr.bf16.mxu0 %v2999
        %4086 = vmatpush2.bf16.msra.mxu0 %v2998
        %4087 = vmatprep.subr.bf16.mxu0 %v2995
        %4088 = vmatpush2.bf16.msra.mxu0 %v2994
        %4089 = vmatprep.subr.bf16.mxu0 %v2991
        %4090 = vmatpush2.bf16.msra.mxu0 %v2990
        %4091 = vmatprep.subr.bf16.mxu0 %v2987
        %4092 = vmatpush2.bf16.msra.mxu0 %v2986
        %4093 = vmatprep.subr.bf16.mxu0 %v2983
        %4094 = vmatpush2.bf16.msra.mxu0 %v2982
        %4095 = vmatprep.subr.bf16.mxu0 %v2979
        %4096 = vmatpush2.bf16.msra.mxu0 %v2978
        %4097 = vmatprep.subr.bf16.mxu0 %v2975
        %4098 = vmatpush2.bf16.msra.mxu0 %v2974
        %4099 = vmatprep.subr.bf16.mxu0 %v2971
        %4100 = vmatpush2.bf16.msra.mxu0 %v2970
        %4101 = vmatprep.mubr.bf16.mxu0 %v535
        %4102 = vmatmul.mubr.bf16.gmra.mxu0 %v534
        %v4103 = vpop.f32.mrf.mxu0
        %v4104 = vadd.f32 %v4033, %v4103
        %v4105 = vpop.f32.mrf.mxu0
        %v4106 = vadd.f32 %v4035, %v4105
        %v4107 = vpop.f32.mrf.mxu0
        %v4108 = vadd.f32 %v4037, %v4107
        %v4109 = vpop.f32.mrf.mxu0
        %v4110 = vadd.f32 %v4039, %v4109
        %4111 = vmatprep.mubr.bf16.mxu0 %v553
        %4112 = vmatmul.mubr.bf16.gmra.mxu0 %v552
        %v4113 = vpop.f32.mrf.mxu0
        %v4114 = vadd.f32 %v4043, %v4113
        %v4115 = vpop.f32.mrf.mxu0
        %v4116 = vadd.f32 %v4045, %v4115
        %v4117 = vpop.f32.mrf.mxu0
        %v4118 = vadd.f32 %v4047, %v4117
        %v4119 = vpop.f32.mrf.mxu0
        %v4120 = vadd.f32 %v4049, %v4119
        %4121 = vmatprep.mubr.bf16.mxu0 %v571
        %4122 = vmatmul.mubr.bf16.gmra.mxu0 %v570
        %v4123 = vpop.f32.mrf.mxu0
        %v4124 = vadd.f32 %v4053, %v4123
        %v4125 = vpop.f32.mrf.mxu0
        %v4126 = vadd.f32 %v4055, %v4125
        %v4127 = vpop.f32.mrf.mxu0
        %v4128 = vadd.f32 %v4057, %v4127
        %v4129 = vpop.f32.mrf.mxu0
        %v4130 = vadd.f32 %v4059, %v4129
        %4131 = vmatprep.mubr.bf16.mxu0 %v589
        %4132 = vmatmul.mubr.bf16.gmra.mxu0 %v588
        %v4133 = vpop.f32.mrf.mxu0
        %v4134 = vadd.f32 %v4063, %v4133
        %v4135 = vpop.f32.mrf.mxu0
        %v4136 = vadd.f32 %v4065, %v4135
        %v4137 = vpop.f32.mrf.mxu0
        %v4138 = vpop.f32.mrf.mxu0
        %4139 = vdwg.mxu0
        %4140 = vmatprep.subr.bf16.mxu0 %v3031
        %4141 = vmatpush1.bf16.msra.mxu0 %v3030
        %4142 = vmatprep.subr.bf16.mxu0 %v3027
        %4143 = vmatpush1.bf16.msra.mxu0 %v3026
        %4144 = vmatprep.subr.bf16.mxu0 %v3023
        %4145 = vmatpush1.bf16.msra.mxu0 %v3022
        %4146 = vmatprep.subr.bf16.mxu0 %v3019
        %4147 = vmatpush1.bf16.msra.mxu0 %v3018
        %4148 = vmatprep.subr.bf16.mxu0 %v3015
        %4149 = vmatpush1.bf16.msra.mxu0 %v3014
        %4150 = vmatprep.subr.bf16.mxu0 %v3011
        %4151 = vmatpush1.bf16.msra.mxu0 %v3010
        %4152 = vmatprep.subr.bf16.mxu0 %v3007
        %4153 = vmatpush1.bf16.msra.mxu0 %v3006
        %4154 = vmatprep.subr.bf16.mxu0 %v3003
        %4155 = vmatpush1.bf16.msra.mxu0 %v3002
        %4156 = vmatprep.subr.bf16.mxu0 %v3063
        %4157 = vmatpush2.bf16.msra.mxu0 %v3062
        %4158 = vmatprep.subr.bf16.mxu0 %v3059
        %4159 = vmatpush2.bf16.msra.mxu0 %v3058
        %4160 = vmatprep.subr.bf16.mxu0 %v3055
        %4161 = vmatpush2.bf16.msra.mxu0 %v3054
        %4162 = vmatprep.subr.bf16.mxu0 %v3051
        %4163 = vmatpush2.bf16.msra.mxu0 %v3050
        %4164 = vmatprep.subr.bf16.mxu0 %v3047
        %4165 = vmatpush2.bf16.msra.mxu0 %v3046
        %4166 = vmatprep.subr.bf16.mxu0 %v3043
        %4167 = vmatpush2.bf16.msra.mxu0 %v3042
        %4168 = vmatprep.subr.bf16.mxu0 %v3039
        %4169 = vmatpush2.bf16.msra.mxu0 %v3038
        %4170 = vmatprep.subr.bf16.mxu0 %v3035
        %4171 = vmatpush2.bf16.msra.mxu0 %v3034
        %4172 = vmatprep.mubr.bf16.mxu0 %v537
        %4173 = vmatmul.mubr.bf16.gmra.mxu0 %v536
        %v4174 = vpop.f32.mrf.mxu0
        %v4175 = vadd.f32 %v4104, %v4174
        %v4176 = vpop.f32.mrf.mxu0
        %v4177 = vadd.f32 %v4106, %v4176
        %v4178 = vpop.f32.mrf.mxu0
        %v4179 = vadd.f32 %v4108, %v4178
        %v4180 = vpop.f32.mrf.mxu0
        %v4181 = vadd.f32 %v4110, %v4180
        %4182 = vmatprep.mubr.bf16.mxu0 %v555
        %4183 = vmatmul.mubr.bf16.gmra.mxu0 %v554
        %v4184 = vpop.f32.mrf.mxu0
        %v4185 = vadd.f32 %v4114, %v4184
        %v4186 = vpop.f32.mrf.mxu0
        %v4187 = vadd.f32 %v4116, %v4186
        %v4188 = vpop.f32.mrf.mxu0
        %v4189 = vadd.f32 %v4118, %v4188
        %v4190 = vpop.f32.mrf.mxu0
        %v4191 = vadd.f32 %v4120, %v4190
        %4192 = vmatprep.mubr.bf16.mxu0 %v573
        %4193 = vmatmul.mubr.bf16.gmra.mxu0 %v572
        %v4194 = vpop.f32.mrf.mxu0
        %v4195 = vadd.f32 %v4124, %v4194
        %v4196 = vpop.f32.mrf.mxu0
        %v4197 = vadd.f32 %v4126, %v4196
        %v4198 = vpop.f32.mrf.mxu0
        %v4199 = vadd.f32 %v4128, %v4198
        %v4200 = vpop.f32.mrf.mxu0
        %v4201 = vadd.f32 %v4130, %v4200
        %4202 = vmatprep.mubr.bf16.mxu0 %v591
        %4203 = vmatmul.mubr.bf16.gmra.mxu0 %v590
        %v4204 = vpop.f32.mrf.mxu0
        %v4205 = vadd.f32 %v4134, %v4204
        %v4206 = vpop.f32.mrf.mxu0
        %v4207 = vadd.f32 %v4136, %v4206
        %v4208 = vpop.f32.mrf.mxu0
        %v4209 = vpop.f32.mrf.mxu0
        %4210 = vdwg.mxu0
        %4211 = vmatprep.subr.bf16.mxu0 %v3095
        %4212 = vmatpush1.bf16.msra.mxu0 %v3094
        %4213 = vmatprep.subr.bf16.mxu0 %v3091
        %4214 = vmatpush1.bf16.msra.mxu0 %v3090
        %4215 = vmatprep.subr.bf16.mxu0 %v3087
        %4216 = vmatpush1.bf16.msra.mxu0 %v3086
        %4217 = vmatprep.subr.bf16.mxu0 %v3083
        %4218 = vmatpush1.bf16.msra.mxu0 %v3082
        %4219 = vmatprep.subr.bf16.mxu0 %v3079
        %4220 = vmatpush1.bf16.msra.mxu0 %v3078
        %4221 = vmatprep.subr.bf16.mxu0 %v3075
        %4222 = vmatpush1.bf16.msra.mxu0 %v3074
        %4223 = vmatprep.subr.bf16.mxu0 %v3071
        %4224 = vmatpush1.bf16.msra.mxu0 %v3070
        %4225 = vmatprep.subr.bf16.mxu0 %v3067
        %4226 = vmatpush1.bf16.msra.mxu0 %v3066
        %4227 = vmatprep.subr.bf16.mxu0 %v3127
        %4228 = vmatpush2.bf16.msra.mxu0 %v3126
        %4229 = vmatprep.subr.bf16.mxu0 %v3123
        %4230 = vmatpush2.bf16.msra.mxu0 %v3122
        %4231 = vmatprep.subr.bf16.mxu0 %v3119
        %4232 = vmatpush2.bf16.msra.mxu0 %v3118
        %4233 = vmatprep.subr.bf16.mxu0 %v3115
        %4234 = vmatpush2.bf16.msra.mxu0 %v3114
        %4235 = vmatprep.subr.bf16.mxu0 %v3111
        %4236 = vmatpush2.bf16.msra.mxu0 %v3110
        %4237 = vmatprep.subr.bf16.mxu0 %v3107
        %4238 = vmatpush2.bf16.msra.mxu0 %v3106
        %4239 = vmatprep.subr.bf16.mxu0 %v3103
        %4240 = vmatpush2.bf16.msra.mxu0 %v3102
        %4241 = vmatprep.subr.bf16.mxu0 %v3099
        %4242 = vmatpush2.bf16.msra.mxu0 %v3098
        %4243 = vmatprep.mubr.bf16.mxu0 %v539
        %4244 = vmatmul.mubr.bf16.gmra.mxu0 %v538
        %v4245 = vpop.f32.mrf.mxu0
        %v4246 = vadd.f32 %v4175, %v4245
        %v4247 = vpop.f32.mrf.mxu0
        %v4248 = vadd.f32 %v4177, %v4247
        %v4249 = vpop.f32.mrf.mxu0
        %v4250 = vadd.f32 %v4179, %v4249
        %v4251 = vpop.f32.mrf.mxu0
        %v4252 = vadd.f32 %v4181, %v4251
        %4253 = vmatprep.mubr.bf16.mxu0 %v557
        %4254 = vmatmul.mubr.bf16.gmra.mxu0 %v556
        %v4255 = vpop.f32.mrf.mxu0
        %v4256 = vadd.f32 %v4185, %v4255
        %v4257 = vpop.f32.mrf.mxu0
        %v4258 = vadd.f32 %v4187, %v4257
        %v4259 = vpop.f32.mrf.mxu0
        %v4260 = vadd.f32 %v4189, %v4259
        %v4261 = vpop.f32.mrf.mxu0
        %v4262 = vadd.f32 %v4191, %v4261
        %4263 = vmatprep.mubr.bf16.mxu0 %v575
        %4264 = vmatmul.mubr.bf16.gmra.mxu0 %v574
        %v4265 = vpop.f32.mrf.mxu0
        %v4266 = vadd.f32 %v4195, %v4265
        %v4267 = vpop.f32.mrf.mxu0
        %v4268 = vadd.f32 %v4197, %v4267
        %v4269 = vpop.f32.mrf.mxu0
        %v4270 = vadd.f32 %v4199, %v4269
        %v4271 = vpop.f32.mrf.mxu0
        %v4272 = vadd.f32 %v4201, %v4271
        %4273 = vmatprep.mubr.bf16.mxu0 %v593
        %4274 = vmatmul.mubr.bf16.gmra.mxu0 %v592
        %v4275 = vpop.f32.mrf.mxu0
        %v4276 = vadd.f32 %v4205, %v4275
        %v4277 = vpop.f32.mrf.mxu0
        %v4278 = vadd.f32 %v4207, %v4277
        %v4279 = vpop.f32.mrf.mxu0
        %v4280 = vpop.f32.mrf.mxu0
        %4281 = vdwg.mxu0
        %4282 = vmatprep.subr.bf16.mxu0 %v3159
        %4283 = vmatpush1.bf16.msra.mxu0 %v3158
        %4284 = vmatprep.subr.bf16.mxu0 %v3155
        %4285 = vmatpush1.bf16.msra.mxu0 %v3154
        %4286 = vmatprep.subr.bf16.mxu0 %v3151
        %4287 = vmatpush1.bf16.msra.mxu0 %v3150
        %4288 = vmatprep.subr.bf16.mxu0 %v3147
        %4289 = vmatpush1.bf16.msra.mxu0 %v3146
        %4290 = vmatprep.subr.bf16.mxu0 %v3143
        %4291 = vmatpush1.bf16.msra.mxu0 %v3142
        %4292 = vmatprep.subr.bf16.mxu0 %v3139
        %4293 = vmatpush1.bf16.msra.mxu0 %v3138
        %4294 = vmatprep.subr.bf16.mxu0 %v3135
        %4295 = vmatpush1.bf16.msra.mxu0 %v3134
        %4296 = vmatprep.subr.bf16.mxu0 %v3131
        %4297 = vmatpush1.bf16.msra.mxu0 %v3130
        %4298 = vmatprep.subr.bf16.mxu0 %v3191
        %4299 = vmatpush2.bf16.msra.mxu0 %v3190
        %4300 = vmatprep.subr.bf16.mxu0 %v3187
        %4301 = vmatpush2.bf16.msra.mxu0 %v3186
        %4302 = vmatprep.subr.bf16.mxu0 %v3183
        %4303 = vmatpush2.bf16.msra.mxu0 %v3182
        %4304 = vmatprep.subr.bf16.mxu0 %v3179
        %4305 = vmatpush2.bf16.msra.mxu0 %v3178
        %4306 = vmatprep.subr.bf16.mxu0 %v3175
        %4307 = vmatpush2.bf16.msra.mxu0 %v3174
        %4308 = vmatprep.subr.bf16.mxu0 %v3171
        %4309 = vmatpush2.bf16.msra.mxu0 %v3170
        %4310 = vmatprep.subr.bf16.mxu0 %v3167
        %4311 = vmatpush2.bf16.msra.mxu0 %v3166
        %4312 = vmatprep.subr.bf16.mxu0 %v3163
        %4313 = vmatpush2.bf16.msra.mxu0 %v3162
        %4314 = vmatprep.mubr.bf16.mxu0 %v541
        %4315 = vmatmul.mubr.bf16.gmra.mxu0 %v540
        %v4316 = vpop.f32.mrf.mxu0
        %v4317 = vadd.f32 %v4246, %v4316
        %v4318 = vpop.f32.mrf.mxu0
        %v4319 = vadd.f32 %v4248, %v4318
        %v4320 = vpop.f32.mrf.mxu0
        %v4321 = vadd.f32 %v4250, %v4320
        %v4322 = vpop.f32.mrf.mxu0
        %v4323 = vadd.f32 %v4252, %v4322
        %4324 = vmatprep.mubr.bf16.mxu0 %v559
        %4325 = vmatmul.mubr.bf16.gmra.mxu0 %v558
        %v4326 = vpop.f32.mrf.mxu0
        %v4327 = vadd.f32 %v4256, %v4326
        %v4328 = vpop.f32.mrf.mxu0
        %v4329 = vadd.f32 %v4258, %v4328
        %v4330 = vpop.f32.mrf.mxu0
        %v4331 = vadd.f32 %v4260, %v4330
        %v4332 = vpop.f32.mrf.mxu0
        %v4333 = vadd.f32 %v4262, %v4332
        %4334 = vmatprep.mubr.bf16.mxu0 %v577
        %4335 = vmatmul.mubr.bf16.gmra.mxu0 %v576
        %v4336 = vpop.f32.mrf.mxu0
        %v4337 = vadd.f32 %v4266, %v4336
        %v4338 = vpop.f32.mrf.mxu0
        %v4339 = vadd.f32 %v4268, %v4338
        %v4340 = vpop.f32.mrf.mxu0
        %v4341 = vadd.f32 %v4270, %v4340
        %v4342 = vpop.f32.mrf.mxu0
        %v4343 = vadd.f32 %v4272, %v4342
        %4344 = vmatprep.mubr.bf16.mxu0 %v595
        %4345 = vmatmul.mubr.bf16.gmra.mxu0 %v594
        %v4346 = vpop.f32.mrf.mxu0
        %v4347 = vadd.f32 %v4276, %v4346
        %v4348 = vpop.f32.mrf.mxu0
        %v4349 = vadd.f32 %v4278, %v4348
        %v4350 = vpop.f32.mrf.mxu0
        %v4351 = vpop.f32.mrf.mxu0
        %4352 = vdwg.mxu0
        %4353 = vmatprep.subr.bf16.mxu0 %v3223
        %4354 = vmatpush1.bf16.msra.mxu0 %v3222
        %4355 = vmatprep.subr.bf16.mxu0 %v3219
        %4356 = vmatpush1.bf16.msra.mxu0 %v3218
        %4357 = vmatprep.subr.bf16.mxu0 %v3215
        %4358 = vmatpush1.bf16.msra.mxu0 %v3214
        %4359 = vmatprep.subr.bf16.mxu0 %v3211
        %4360 = vmatpush1.bf16.msra.mxu0 %v3210
        %4361 = vmatprep.subr.bf16.mxu0 %v3207
        %4362 = vmatpush1.bf16.msra.mxu0 %v3206
        %4363 = vmatprep.subr.bf16.mxu0 %v3203
        %4364 = vmatpush1.bf16.msra.mxu0 %v3202
        %4365 = vmatprep.subr.bf16.mxu0 %v3199
        %4366 = vmatpush1.bf16.msra.mxu0 %v3198
        %4367 = vmatprep.subr.bf16.mxu0 %v3195
        %4368 = vmatpush1.bf16.msra.mxu0 %v3194
        %4369 = vmatprep.subr.bf16.mxu0 %v3255
        %4370 = vmatpush2.bf16.msra.mxu0 %v3254
        %4371 = vmatprep.subr.bf16.mxu0 %v3251
        %4372 = vmatpush2.bf16.msra.mxu0 %v3250
        %4373 = vmatprep.subr.bf16.mxu0 %v3247
        %4374 = vmatpush2.bf16.msra.mxu0 %v3246
        %4375 = vmatprep.subr.bf16.mxu0 %v3243
        %4376 = vmatpush2.bf16.msra.mxu0 %v3242
        %4377 = vmatprep.subr.bf16.mxu0 %v3239
        %4378 = vmatpush2.bf16.msra.mxu0 %v3238
        %4379 = vmatprep.subr.bf16.mxu0 %v3235
        %4380 = vmatpush2.bf16.msra.mxu0 %v3234
        %4381 = vmatprep.subr.bf16.mxu0 %v3231
        %4382 = vmatpush2.bf16.msra.mxu0 %v3230
        %4383 = vmatprep.subr.bf16.mxu0 %v3227
        %4384 = vmatpush2.bf16.msra.mxu0 %v3226
        %4385 = vmatprep.mubr.bf16.mxu0 %v543
        %4386 = vmatmul.mubr.bf16.gmra.mxu0 %v542
        %v4387 = vpop.f32.mrf.mxu0
        %v4388 = vadd.f32 %v4317, %v4387
        %v4389 = vpop.f32.mrf.mxu0
        %v4390 = vadd.f32 %v4319, %v4389
        %v4391 = vpop.f32.mrf.mxu0
        %v4392 = vadd.f32 %v4321, %v4391
        %v4393 = vpop.f32.mrf.mxu0
        %v4394 = vadd.f32 %v4323, %v4393
        %4395 = vmatprep.mubr.bf16.mxu0 %v561
        %4396 = vmatmul.mubr.bf16.gmra.mxu0 %v560
        %v4397 = vpop.f32.mrf.mxu0
        %v4398 = vadd.f32 %v4327, %v4397
        %v4399 = vpop.f32.mrf.mxu0
        %v4400 = vadd.f32 %v4329, %v4399
        %v4401 = vpop.f32.mrf.mxu0
        %v4402 = vadd.f32 %v4331, %v4401
        %v4403 = vpop.f32.mrf.mxu0
        %v4404 = vadd.f32 %v4333, %v4403
        %4405 = vmatprep.mubr.bf16.mxu0 %v579
        %4406 = vmatmul.mubr.bf16.gmra.mxu0 %v578
        %v4407 = vpop.f32.mrf.mxu0
        %v4408 = vadd.f32 %v4337, %v4407
        %v4409 = vpop.f32.mrf.mxu0
        %v4410 = vadd.f32 %v4339, %v4409
        %v4411 = vpop.f32.mrf.mxu0
        %v4412 = vadd.f32 %v4341, %v4411
        %v4413 = vpop.f32.mrf.mxu0
        %v4414 = vadd.f32 %v4343, %v4413
        %4415 = vmatprep.mubr.bf16.mxu0 %v597
        %4416 = vmatmul.mubr.bf16.gmra.mxu0 %v596
        %v4417 = vpop.f32.mrf.mxu0
        %v4418 = vadd.f32 %v4347, %v4417
        %v4419 = vpop.f32.mrf.mxu0
        %v4420 = vadd.f32 %v4349, %v4419
        %v4421 = vpop.f32.mrf.mxu0
        %v4422 = vpop.f32.mrf.mxu0
        %4423 = vdwg.mxu0
        %4424 = vmatprep.subr.bf16.mxu0 %v3287
        %4425 = vmatpush1.bf16.msra.mxu0 %v3286
        %4426 = vmatprep.subr.bf16.mxu0 %v3283
        %4427 = vmatpush1.bf16.msra.mxu0 %v3282
        %4428 = vmatprep.subr.bf16.mxu0 %v3279
        %4429 = vmatpush1.bf16.msra.mxu0 %v3278
        %4430 = vmatprep.subr.bf16.mxu0 %v3275
        %4431 = vmatpush1.bf16.msra.mxu0 %v3274
        %4432 = vmatprep.subr.bf16.mxu0 %v3271
        %4433 = vmatpush1.bf16.msra.mxu0 %v3270
        %4434 = vmatprep.subr.bf16.mxu0 %v3267
        %4435 = vmatpush1.bf16.msra.mxu0 %v3266
        %4436 = vmatprep.subr.bf16.mxu0 %v3263
        %4437 = vmatpush1.bf16.msra.mxu0 %v3262
        %4438 = vmatprep.subr.bf16.mxu0 %v3259
        %4439 = vmatpush1.bf16.msra.mxu0 %v3258
        %4440 = vmatprep.subr.bf16.mxu0 %v3319
        %4441 = vmatpush2.bf16.msra.mxu0 %v3318
        %4442 = vmatprep.subr.bf16.mxu0 %v3315
        %4443 = vmatpush2.bf16.msra.mxu0 %v3314
        %4444 = vmatprep.subr.bf16.mxu0 %v3311
        %4445 = vmatpush2.bf16.msra.mxu0 %v3310
        %4446 = vmatprep.subr.bf16.mxu0 %v3307
        %4447 = vmatpush2.bf16.msra.mxu0 %v3306
        %4448 = vmatprep.subr.bf16.mxu0 %v3303
        %4449 = vmatpush2.bf16.msra.mxu0 %v3302
        %4450 = vmatprep.subr.bf16.mxu0 %v3299
        %4451 = vmatpush2.bf16.msra.mxu0 %v3298
        %4452 = vmatprep.subr.bf16.mxu0 %v3295
        %4453 = vmatpush2.bf16.msra.mxu0 %v3294
        %4454 = vmatprep.subr.bf16.mxu0 %v3291
        %4455 = vmatpush2.bf16.msra.mxu0 %v3290
        %4456 = vmatprep.mubr.bf16.mxu0 %v545
        %4457 = vmatmul.mubr.bf16.gmra.mxu0 %v544
        %v4458 = vpop.f32.mrf.mxu0
        %v4459 = vadd.f32 %v4388, %v4458
        %v4460 = vpop.f32.mrf.mxu0
        %v4461 = vadd.f32 %v4390, %v4460
        %v4462 = vpop.f32.mrf.mxu0
        %v4463 = vadd.f32 %v4392, %v4462
        %v4464 = vpop.f32.mrf.mxu0
        %v4465 = vadd.f32 %v4394, %v4464
        %4466 = vmatprep.mubr.bf16.mxu0 %v563
        %4467 = vmatmul.mubr.bf16.gmra.mxu0 %v562
        %v4468 = vpop.f32.mrf.mxu0
        %v4469 = vadd.f32 %v4398, %v4468
        %v4470 = vpop.f32.mrf.mxu0
        %v4471 = vadd.f32 %v4400, %v4470
        %v4472 = vpop.f32.mrf.mxu0
        %v4473 = vadd.f32 %v4402, %v4472
        %v4474 = vpop.f32.mrf.mxu0
        %v4475 = vadd.f32 %v4404, %v4474
        %4476 = vmatprep.mubr.bf16.mxu0 %v581
        %4477 = vmatmul.mubr.bf16.gmra.mxu0 %v580
        %v4478 = vpop.f32.mrf.mxu0
        %v4479 = vadd.f32 %v4408, %v4478
        %v4480 = vpop.f32.mrf.mxu0
        %v4481 = vadd.f32 %v4410, %v4480
        %v4482 = vpop.f32.mrf.mxu0
        %v4483 = vadd.f32 %v4412, %v4482
        %v4484 = vpop.f32.mrf.mxu0
        %v4485 = vadd.f32 %v4414, %v4484
        %4486 = vmatprep.mubr.bf16.mxu0 %v599
        %4487 = vmatmul.mubr.bf16.gmra.mxu0 %v598
        %v4488 = vpop.f32.mrf.mxu0
        %v4489 = vadd.f32 %v4418, %v4488
        %v4490 = vpop.f32.mrf.mxu0
        %v4491 = vadd.f32 %v4420, %v4490
        %v4492 = vpop.f32.mrf.mxu0
        %v4493 = vpop.f32.mrf.mxu0
        %4494 = vdwg.mxu0
        %4495 = vmatprep.subr.bf16.mxu0 %v3351
        %4496 = vmatpush1.bf16.msra.mxu0 %v3350
        %4497 = vmatprep.subr.bf16.mxu0 %v3347
        %4498 = vmatpush1.bf16.msra.mxu0 %v3346
        %4499 = vmatprep.subr.bf16.mxu0 %v3343
        %4500 = vmatpush1.bf16.msra.mxu0 %v3342
        %4501 = vmatprep.subr.bf16.mxu0 %v3339
        %4502 = vmatpush1.bf16.msra.mxu0 %v3338
        %4503 = vmatprep.subr.bf16.mxu0 %v3335
        %4504 = vmatpush1.bf16.msra.mxu0 %v3334
        %4505 = vmatprep.subr.bf16.mxu0 %v3331
        %4506 = vmatpush1.bf16.msra.mxu0 %v3330
        %4507 = vmatprep.subr.bf16.mxu0 %v3327
        %4508 = vmatpush1.bf16.msra.mxu0 %v3326
        %4509 = vmatprep.subr.bf16.mxu0 %v3323
        %4510 = vmatpush1.bf16.msra.mxu0 %v3322
        %4511 = vmatprep.subr.bf16.mxu0 0
        %4512 = vmatpush2.bf16.msra.mxu0 0
        %4513 = vmatprep.subr.bf16.mxu0 0
        %4514 = vmatpush2.bf16.msra.mxu0 0
        %4515 = vmatprep.subr.bf16.mxu0 0
        %4516 = vmatpush2.bf16.msra.mxu0 0
        %4517 = vmatprep.subr.bf16.mxu0 0
        %4518 = vmatpush2.bf16.msra.mxu0 0
        %4519 = vmatprep.subr.bf16.mxu0 0
        %4520 = vmatpush2.bf16.msra.mxu0 0
        %4521 = vmatprep.subr.bf16.mxu0 0
        %4522 = vmatpush2.bf16.msra.mxu0 0
        %4523 = vmatprep.subr.bf16.mxu0 %v3359
        %4524 = vmatpush2.bf16.msra.mxu0 %v3358
        %4525 = vmatprep.subr.bf16.mxu0 %v3355
        %4526 = vmatpush2.bf16.msra.mxu0 %v3354
        %4527 = vmatprep.mubr.bf16.mxu0 %v3916
        %4528 = vmatmul.mubr.bf16.gmra.mxu0 %v546
        %v4529 = vpop.f32.mrf.mxu0
        %v4530 = vadd.f32 %v4459, %v4529
        %v4531 = vpop.f32.mrf.mxu0
        %v4532 = vadd.f32 %v4461, %v4531
        %v4533 = vpop.f32.mrf.mxu0
        %v4534 = vadd.f32 %v4463, %v4533
        %v4535 = vpop.f32.mrf.mxu0
        %v4536 = vadd.f32 %v4465, %v4535
        %4537 = vmatprep.mubr.bf16.mxu0 %v3919
        %4538 = vmatmul.mubr.bf16.gmra.mxu0 %v564
        %v4539 = vpop.f32.mrf.mxu0
        %v4540 = vadd.f32 %v4469, %v4539
        %v4541 = vpop.f32.mrf.mxu0
        %v4542 = vadd.f32 %v4471, %v4541
        %v4543 = vpop.f32.mrf.mxu0
        %v4544 = vadd.f32 %v4473, %v4543
        %v4545 = vpop.f32.mrf.mxu0
        %v4546 = vadd.f32 %v4475, %v4545
        %4547 = vmatprep.mubr.bf16.mxu0 %v3922
        %4548 = vmatmul.mubr.bf16.gmra.mxu0 %v582
        %v4549 = vpop.f32.mrf.mxu0
        %v4550 = vadd.f32 %v4479, %v4549
        %v4551 = vpop.f32.mrf.mxu0
        %v4552 = vadd.f32 %v4481, %v4551
        %v4553 = vpop.f32.mrf.mxu0
        %v4554 = vadd.f32 %v4483, %v4553
        %v4555 = vpop.f32.mrf.mxu0
        %v4556 = vadd.f32 %v4485, %v4555
        %4557 = vmatprep.mubr.bf16.mxu0 %v3925
        %4558 = vmatmul.mubr.bf16.gmra.mxu0 %v600
        %v4559 = vpop.f32.mrf.mxu0
        %v4560 = vadd.f32 %v4489, %v4559
        %v4561 = vpop.f32.mrf.mxu0
        %v4562 = vadd.f32 %v4491, %v4561
        %v4563 = vpop.f32.mrf.mxu0
        %v4564 = vpop.f32.mrf.mxu0
        %4565 = vdwg.mxu0
        %4566 = vmatprep.subr.bf16.mxu0 %v2841
        %4567 = vmatpush1.bf16.msra.mxu0 %v2840
        %4568 = vmatprep.subr.bf16.mxu0 %v2837
        %4569 = vmatpush1.bf16.msra.mxu0 %v2836
        %4570 = vmatprep.subr.bf16.mxu0 %v2833
        %4571 = vmatpush1.bf16.msra.mxu0 %v2832
        %4572 = vmatprep.subr.bf16.mxu0 %v2829
        %4573 = vmatpush1.bf16.msra.mxu0 %v2828
        %4574 = vmatprep.subr.bf16.mxu0 %v2825
        %4575 = vmatpush1.bf16.msra.mxu0 %v2824
        %4576 = vmatprep.subr.bf16.mxu0 %v2821
        %4577 = vmatpush1.bf16.msra.mxu0 %v2820
        %4578 = vmatprep.subr.bf16.mxu0 %v2817
        %4579 = vmatpush1.bf16.msra.mxu0 %v2816
        %4580 = vmatprep.subr.bf16.mxu0 %v2813
        %4581 = vmatpush1.bf16.msra.mxu0 %v2812
        %4582 = vmatprep.subr.bf16.mxu0 %v2873
        %4583 = vmatpush2.bf16.msra.mxu0 %v2872
        %4584 = vmatprep.subr.bf16.mxu0 %v2869
        %4585 = vmatpush2.bf16.msra.mxu0 %v2868
        %4586 = vmatprep.subr.bf16.mxu0 %v2865
        %4587 = vmatpush2.bf16.msra.mxu0 %v2864
        %4588 = vmatprep.subr.bf16.mxu0 %v2861
        %4589 = vmatpush2.bf16.msra.mxu0 %v2860
        %4590 = vmatprep.subr.bf16.mxu0 %v2857
        %4591 = vmatpush2.bf16.msra.mxu0 %v2856
        %4592 = vmatprep.subr.bf16.mxu0 %v2853
        %4593 = vmatpush2.bf16.msra.mxu0 %v2852
        %4594 = vmatprep.subr.bf16.mxu0 %v2849
        %4595 = vmatpush2.bf16.msra.mxu0 %v2848
        %4596 = vmatprep.subr.bf16.mxu0 %v2845
        %4597 = vmatpush2.bf16.msra.mxu0 %v2844
        %4598 = vmatprep.mubr.bf16.mxu0 %v531
        %4599 = vmatmul.mubr.bf16.gmra.mxu0 %v530
        %v4600 = vpop.f32.mrf.mxu0
        %v4601 = vadd.f32 0.0, %v4600
        %v4602 = vpop.f32.mrf.mxu0
        %v4603 = vadd.f32 0.0, %v4602
        %v4604 = vpop.f32.mrf.mxu0
        %v4605 = vadd.f32 0.0, %v4604
        %v4606 = vpop.f32.mrf.mxu0
        %v4607 = vadd.f32 0.0, %v4606
        %4608 = vmatprep.mubr.bf16.mxu0 %v549
        %4609 = vmatmul.mubr.bf16.gmra.mxu0 %v548
        %v4610 = vpop.f32.mrf.mxu0
        %v4611 = vadd.f32 0.0, %v4610
        %v4612 = vpop.f32.mrf.mxu0
        %v4613 = vadd.f32 0.0, %v4612
        %v4614 = vpop.f32.mrf.mxu0
        %v4615 = vadd.f32 0.0, %v4614
        %v4616 = vpop.f32.mrf.mxu0
        %v4617 = vadd.f32 0.0, %v4616
        %4618 = vmatprep.mubr.bf16.mxu0 %v567
        %4619 = vmatmul.mubr.bf16.gmra.mxu0 %v566
        %v4620 = vpop.f32.mrf.mxu0
        %v4621 = vadd.f32 0.0, %v4620
        %v4622 = vpop.f32.mrf.mxu0
        %v4623 = vadd.f32 0.0, %v4622
        %v4624 = vpop.f32.mrf.mxu0
        %v4625 = vadd.f32 0.0, %v4624
        %v4626 = vpop.f32.mrf.mxu0
        %v4627 = vadd.f32 0.0, %v4626
        %4628 = vmatprep.mubr.bf16.mxu0 %v585
        %4629 = vmatmul.mubr.bf16.gmra.mxu0 %v584
        %v4630 = vpop.f32.mrf.mxu0
        %v4631 = vadd.f32 0.0, %v4630
        %v4632 = vpop.f32.mrf.mxu0
        %v4633 = vadd.f32 0.0, %v4632
        %v4634 = vpop.f32.mrf.mxu0
        %v4635 = vpop.f32.mrf.mxu0
        %4636 = vdwg.mxu0
        %4637 = vmatprep.subr.bf16.mxu0 %v2905
        %4638 = vmatpush1.bf16.msra.mxu0 %v2904
        %4639 = vmatprep.subr.bf16.mxu0 %v2901
        %4640 = vmatpush1.bf16.msra.mxu0 %v2900
        %4641 = vmatprep.subr.bf16.mxu0 %v2897
        %4642 = vmatpush1.bf16.msra.mxu0 %v2896
        %4643 = vmatprep.subr.bf16.mxu0 %v2893
        %4644 = vmatpush1.bf16.msra.mxu0 %v2892
        %4645 = vmatprep.subr.bf16.mxu0 %v2889
        %4646 = vmatpush1.bf16.msra.mxu0 %v2888
        %4647 = vmatprep.subr.bf16.mxu0 %v2885
        %4648 = vmatpush1.bf16.msra.mxu0 %v2884
        %4649 = vmatprep.subr.bf16.mxu0 %v2881
        %4650 = vmatpush1.bf16.msra.mxu0 %v2880
        %4651 = vmatprep.subr.bf16.mxu0 %v2877
        %4652 = vmatpush1.bf16.msra.mxu0 %v2876
        %4653 = vmatprep.subr.bf16.mxu0 %v2937
        %4654 = vmatpush2.bf16.msra.mxu0 %v2936
        %4655 = vmatprep.subr.bf16.mxu0 %v2933
        %4656 = vmatpush2.bf16.msra.mxu0 %v2932
        %4657 = vmatprep.subr.bf16.mxu0 %v2929
        %4658 = vmatpush2.bf16.msra.mxu0 %v2928
        %4659 = vmatprep.subr.bf16.mxu0 %v2925
        %4660 = vmatpush2.bf16.msra.mxu0 %v2924
        %4661 = vmatprep.subr.bf16.mxu0 %v2921
        %4662 = vmatpush2.bf16.msra.mxu0 %v2920
        %4663 = vmatprep.subr.bf16.mxu0 %v2917
        %4664 = vmatpush2.bf16.msra.mxu0 %v2916
        %4665 = vmatprep.subr.bf16.mxu0 %v2913
        %4666 = vmatpush2.bf16.msra.mxu0 %v2912
        %4667 = vmatprep.subr.bf16.mxu0 %v2909
        %4668 = vmatpush2.bf16.msra.mxu0 %v2908
        %4669 = vmatprep.mubr.bf16.mxu0 %v533
        %4670 = vmatmul.mubr.bf16.gmra.mxu0 %v532
        %v4671 = vpop.f32.mrf.mxu0
        %v4672 = vadd.f32 %v4601, %v4671
        %v4673 = vpop.f32.mrf.mxu0
        %v4674 = vadd.f32 %v4603, %v4673
        %v4675 = vpop.f32.mrf.mxu0
        %v4676 = vadd.f32 %v4605, %v4675
        %v4677 = vpop.f32.mrf.mxu0
        %v4678 = vadd.f32 %v4607, %v4677
        %4679 = vmatprep.mubr.bf16.mxu0 %v551
        %4680 = vmatmul.mubr.bf16.gmra.mxu0 %v550
        %v4681 = vpop.f32.mrf.mxu0
        %v4682 = vadd.f32 %v4611, %v4681
        %v4683 = vpop.f32.mrf.mxu0
        %v4684 = vadd.f32 %v4613, %v4683
        %v4685 = vpop.f32.mrf.mxu0
        %v4686 = vadd.f32 %v4615, %v4685
        %v4687 = vpop.f32.mrf.mxu0
        %v4688 = vadd.f32 %v4617, %v4687
        %4689 = vmatprep.mubr.bf16.mxu0 %v569
        %4690 = vmatmul.mubr.bf16.gmra.mxu0 %v568
        %v4691 = vpop.f32.mrf.mxu0
        %v4692 = vadd.f32 %v4621, %v4691
        %v4693 = vpop.f32.mrf.mxu0
        %v4694 = vadd.f32 %v4623, %v4693
        %v4695 = vpop.f32.mrf.mxu0
        %v4696 = vadd.f32 %v4625, %v4695
        %v4697 = vpop.f32.mrf.mxu0
        %v4698 = vadd.f32 %v4627, %v4697
        %4699 = vmatprep.mubr.bf16.mxu0 %v587
        %4700 = vmatmul.mubr.bf16.gmra.mxu0 %v586
        %v4701 = vpop.f32.mrf.mxu0
        %v4702 = vadd.f32 %v4631, %v4701
        %v4703 = vpop.f32.mrf.mxu0
        %v4704 = vadd.f32 %v4633, %v4703
        %v4705 = vpop.f32.mrf.mxu0
        %v4706 = vpop.f32.mrf.mxu0
        %4707 = vdwg.mxu0
        %4708 = vmatprep.subr.bf16.mxu0 %v2969
        %4709 = vmatpush1.bf16.msra.mxu0 %v2968
        %4710 = vmatprep.subr.bf16.mxu0 %v2965
        %4711 = vmatpush1.bf16.msra.mxu0 %v2964
        %4712 = vmatprep.subr.bf16.mxu0 %v2961
        %4713 = vmatpush1.bf16.msra.mxu0 %v2960
        %4714 = vmatprep.subr.bf16.mxu0 %v2957
        %4715 = vmatpush1.bf16.msra.mxu0 %v2956
        %4716 = vmatprep.subr.bf16.mxu0 %v2953
        %4717 = vmatpush1.bf16.msra.mxu0 %v2952
        %4718 = vmatprep.subr.bf16.mxu0 %v2949
        %4719 = vmatpush1.bf16.msra.mxu0 %v2948
        %4720 = vmatprep.subr.bf16.mxu0 %v2945
        %4721 = vmatpush1.bf16.msra.mxu0 %v2944
        %4722 = vmatprep.subr.bf16.mxu0 %v2941
        %4723 = vmatpush1.bf16.msra.mxu0 %v2940
        %4724 = vmatprep.subr.bf16.mxu0 %v3001
        %4725 = vmatpush2.bf16.msra.mxu0 %v3000
        %4726 = vmatprep.subr.bf16.mxu0 %v2997
        %4727 = vmatpush2.bf16.msra.mxu0 %v2996
        %4728 = vmatprep.subr.bf16.mxu0 %v2993
        %4729 = vmatpush2.bf16.msra.mxu0 %v2992
        %4730 = vmatprep.subr.bf16.mxu0 %v2989
        %4731 = vmatpush2.bf16.msra.mxu0 %v2988
        %4732 = vmatprep.subr.bf16.mxu0 %v2985
        %4733 = vmatpush2.bf16.msra.mxu0 %v2984
        %4734 = vmatprep.subr.bf16.mxu0 %v2981
        %4735 = vmatpush2.bf16.msra.mxu0 %v2980
        %4736 = vmatprep.subr.bf16.mxu0 %v2977
        %4737 = vmatpush2.bf16.msra.mxu0 %v2976
        %4738 = vmatprep.subr.bf16.mxu0 %v2973
        %4739 = vmatpush2.bf16.msra.mxu0 %v2972
        %4740 = vmatprep.mubr.bf16.mxu0 %v535
        %4741 = vmatmul.mubr.bf16.gmra.mxu0 %v534
        %v4742 = vpop.f32.mrf.mxu0
        %v4743 = vadd.f32 %v4672, %v4742
        %v4744 = vpop.f32.mrf.mxu0
        %v4745 = vadd.f32 %v4674, %v4744
        %v4746 = vpop.f32.mrf.mxu0
        %v4747 = vadd.f32 %v4676, %v4746
        %v4748 = vpop.f32.mrf.mxu0
        %v4749 = vadd.f32 %v4678, %v4748
        %4750 = vmatprep.mubr.bf16.mxu0 %v553
        %4751 = vmatmul.mubr.bf16.gmra.mxu0 %v552
        %v4752 = vpop.f32.mrf.mxu0
        %v4753 = vadd.f32 %v4682, %v4752
        %v4754 = vpop.f32.mrf.mxu0
        %v4755 = vadd.f32 %v4684, %v4754
        %v4756 = vpop.f32.mrf.mxu0
        %v4757 = vadd.f32 %v4686, %v4756
        %v4758 = vpop.f32.mrf.mxu0
        %v4759 = vadd.f32 %v4688, %v4758
        %4760 = vmatprep.mubr.bf16.mxu0 %v571
        %4761 = vmatmul.mubr.bf16.gmra.mxu0 %v570
        %v4762 = vpop.f32.mrf.mxu0
        %v4763 = vadd.f32 %v4692, %v4762
        %v4764 = vpop.f32.mrf.mxu0
        %v4765 = vadd.f32 %v4694, %v4764
        %v4766 = vpop.f32.mrf.mxu0
        %v4767 = vadd.f32 %v4696, %v4766
        %v4768 = vpop.f32.mrf.mxu0
        %v4769 = vadd.f32 %v4698, %v4768
        %4770 = vmatprep.mubr.bf16.mxu0 %v589
        %4771 = vmatmul.mubr.bf16.gmra.mxu0 %v588
        %v4772 = vpop.f32.mrf.mxu0
        %v4773 = vadd.f32 %v4702, %v4772
        %v4774 = vpop.f32.mrf.mxu0
        %v4775 = vadd.f32 %v4704, %v4774
        %v4776 = vpop.f32.mrf.mxu0
        %v4777 = vpop.f32.mrf.mxu0
        %4778 = vdwg.mxu0
        %4779 = vmatprep.subr.bf16.mxu0 %v3033
        %4780 = vmatpush1.bf16.msra.mxu0 %v3032
        %4781 = vmatprep.subr.bf16.mxu0 %v3029
        %4782 = vmatpush1.bf16.msra.mxu0 %v3028
        %4783 = vmatprep.subr.bf16.mxu0 %v3025
        %4784 = vmatpush1.bf16.msra.mxu0 %v3024
        %4785 = vmatprep.subr.bf16.mxu0 %v3021
        %4786 = vmatpush1.bf16.msra.mxu0 %v3020
        %4787 = vmatprep.subr.bf16.mxu0 %v3017
        %4788 = vmatpush1.bf16.msra.mxu0 %v3016
        %4789 = vmatprep.subr.bf16.mxu0 %v3013
        %4790 = vmatpush1.bf16.msra.mxu0 %v3012
        %4791 = vmatprep.subr.bf16.mxu0 %v3009
        %4792 = vmatpush1.bf16.msra.mxu0 %v3008
        %4793 = vmatprep.subr.bf16.mxu0 %v3005
        %4794 = vmatpush1.bf16.msra.mxu0 %v3004
        %4795 = vmatprep.subr.bf16.mxu0 %v3065
        %4796 = vmatpush2.bf16.msra.mxu0 %v3064
        %4797 = vmatprep.subr.bf16.mxu0 %v3061
        %4798 = vmatpush2.bf16.msra.mxu0 %v3060
        %4799 = vmatprep.subr.bf16.mxu0 %v3057
        %4800 = vmatpush2.bf16.msra.mxu0 %v3056
        %4801 = vmatprep.subr.bf16.mxu0 %v3053
        %4802 = vmatpush2.bf16.msra.mxu0 %v3052
        %4803 = vmatprep.subr.bf16.mxu0 %v3049
        %4804 = vmatpush2.bf16.msra.mxu0 %v3048
        %4805 = vmatprep.subr.bf16.mxu0 %v3045
        %4806 = vmatpush2.bf16.msra.mxu0 %v3044
        %4807 = vmatprep.subr.bf16.mxu0 %v3041
        %4808 = vmatpush2.bf16.msra.mxu0 %v3040
        %4809 = vmatprep.subr.bf16.mxu0 %v3037
        %4810 = vmatpush2.bf16.msra.mxu0 %v3036
        %4811 = vmatprep.mubr.bf16.mxu0 %v537
        %4812 = vmatmul.mubr.bf16.gmra.mxu0 %v536
        %v4813 = vpop.f32.mrf.mxu0
        %v4814 = vadd.f32 %v4743, %v4813
        %v4815 = vpop.f32.mrf.mxu0
        %v4816 = vadd.f32 %v4745, %v4815
        %v4817 = vpop.f32.mrf.mxu0
        %v4818 = vadd.f32 %v4747, %v4817
        %v4819 = vpop.f32.mrf.mxu0
        %v4820 = vadd.f32 %v4749, %v4819
        %4821 = vmatprep.mubr.bf16.mxu0 %v555
        %4822 = vmatmul.mubr.bf16.gmra.mxu0 %v554
        %v4823 = vpop.f32.mrf.mxu0
        %v4824 = vadd.f32 %v4753, %v4823
        %v4825 = vpop.f32.mrf.mxu0
        %v4826 = vadd.f32 %v4755, %v4825
        %v4827 = vpop.f32.mrf.mxu0
        %v4828 = vadd.f32 %v4757, %v4827
        %v4829 = vpop.f32.mrf.mxu0
        %v4830 = vadd.f32 %v4759, %v4829
        %4831 = vmatprep.mubr.bf16.mxu0 %v573
        %4832 = vmatmul.mubr.bf16.gmra.mxu0 %v572
        %v4833 = vpop.f32.mrf.mxu0
        %v4834 = vadd.f32 %v4763, %v4833
        %v4835 = vpop.f32.mrf.mxu0
        %v4836 = vadd.f32 %v4765, %v4835
        %v4837 = vpop.f32.mrf.mxu0
        %v4838 = vadd.f32 %v4767, %v4837
        %v4839 = vpop.f32.mrf.mxu0
        %v4840 = vadd.f32 %v4769, %v4839
        %4841 = vmatprep.mubr.bf16.mxu0 %v591
        %4842 = vmatmul.mubr.bf16.gmra.mxu0 %v590
        %v4843 = vpop.f32.mrf.mxu0
        %v4844 = vadd.f32 %v4773, %v4843
        %v4845 = vpop.f32.mrf.mxu0
        %v4846 = vadd.f32 %v4775, %v4845
        %v4847 = vpop.f32.mrf.mxu0
        %v4848 = vpop.f32.mrf.mxu0
        %4849 = vdwg.mxu0
        %4850 = vmatprep.subr.bf16.mxu0 %v3097
        %4851 = vmatpush1.bf16.msra.mxu0 %v3096
        %4852 = vmatprep.subr.bf16.mxu0 %v3093
        %4853 = vmatpush1.bf16.msra.mxu0 %v3092
        %4854 = vmatprep.subr.bf16.mxu0 %v3089
        %4855 = vmatpush1.bf16.msra.mxu0 %v3088
        %4856 = vmatprep.subr.bf16.mxu0 %v3085
        %4857 = vmatpush1.bf16.msra.mxu0 %v3084
        %4858 = vmatprep.subr.bf16.mxu0 %v3081
        %4859 = vmatpush1.bf16.msra.mxu0 %v3080
        %4860 = vmatprep.subr.bf16.mxu0 %v3077
        %4861 = vmatpush1.bf16.msra.mxu0 %v3076
        %4862 = vmatprep.subr.bf16.mxu0 %v3073
        %4863 = vmatpush1.bf16.msra.mxu0 %v3072
        %4864 = vmatprep.subr.bf16.mxu0 %v3069
        %4865 = vmatpush1.bf16.msra.mxu0 %v3068
        %4866 = vmatprep.subr.bf16.mxu0 %v3129
        %4867 = vmatpush2.bf16.msra.mxu0 %v3128
        %4868 = vmatprep.subr.bf16.mxu0 %v3125
        %4869 = vmatpush2.bf16.msra.mxu0 %v3124
        %4870 = vmatprep.subr.bf16.mxu0 %v3121
        %4871 = vmatpush2.bf16.msra.mxu0 %v3120
        %4872 = vmatprep.subr.bf16.mxu0 %v3117
        %4873 = vmatpush2.bf16.msra.mxu0 %v3116
        %4874 = vmatprep.subr.bf16.mxu0 %v3113
        %4875 = vmatpush2.bf16.msra.mxu0 %v3112
        %4876 = vmatprep.subr.bf16.mxu0 %v3109
        %4877 = vmatpush2.bf16.msra.mxu0 %v3108
        %4878 = vmatprep.subr.bf16.mxu0 %v3105
        %4879 = vmatpush2.bf16.msra.mxu0 %v3104
        %4880 = vmatprep.subr.bf16.mxu0 %v3101
        %4881 = vmatpush2.bf16.msra.mxu0 %v3100
        %4882 = vmatprep.mubr.bf16.mxu0 %v539
        %4883 = vmatmul.mubr.bf16.gmra.mxu0 %v538
        %v4884 = vpop.f32.mrf.mxu0
        %v4885 = vadd.f32 %v4814, %v4884
        %v4886 = vpop.f32.mrf.mxu0
        %v4887 = vadd.f32 %v4816, %v4886
        %v4888 = vpop.f32.mrf.mxu0
        %v4889 = vadd.f32 %v4818, %v4888
        %v4890 = vpop.f32.mrf.mxu0
        %v4891 = vadd.f32 %v4820, %v4890
        %4892 = vmatprep.mubr.bf16.mxu0 %v557
        %4893 = vmatmul.mubr.bf16.gmra.mxu0 %v556
        %v4894 = vpop.f32.mrf.mxu0
        %v4895 = vadd.f32 %v4824, %v4894
        %v4896 = vpop.f32.mrf.mxu0
        %v4897 = vadd.f32 %v4826, %v4896
        %v4898 = vpop.f32.mrf.mxu0
        %v4899 = vadd.f32 %v4828, %v4898
        %v4900 = vpop.f32.mrf.mxu0
        %v4901 = vadd.f32 %v4830, %v4900
        %4902 = vmatprep.mubr.bf16.mxu0 %v575
        %4903 = vmatmul.mubr.bf16.gmra.mxu0 %v574
        %v4904 = vpop.f32.mrf.mxu0
        %v4905 = vadd.f32 %v4834, %v4904
        %v4906 = vpop.f32.mrf.mxu0
        %v4907 = vadd.f32 %v4836, %v4906
        %v4908 = vpop.f32.mrf.mxu0
        %v4909 = vadd.f32 %v4838, %v4908
        %v4910 = vpop.f32.mrf.mxu0
        %v4911 = vadd.f32 %v4840, %v4910
        %4912 = vmatprep.mubr.bf16.mxu0 %v593
        %4913 = vmatmul.mubr.bf16.gmra.mxu0 %v592
        %v4914 = vpop.f32.mrf.mxu0
        %v4915 = vadd.f32 %v4844, %v4914
        %v4916 = vpop.f32.mrf.mxu0
        %v4917 = vadd.f32 %v4846, %v4916
        %v4918 = vpop.f32.mrf.mxu0
        %v4919 = vpop.f32.mrf.mxu0
        %4920 = vdwg.mxu0
        %4921 = vmatprep.subr.bf16.mxu0 %v3161
        %4922 = vmatpush1.bf16.msra.mxu0 %v3160
        %4923 = vmatprep.subr.bf16.mxu0 %v3157
        %4924 = vmatpush1.bf16.msra.mxu0 %v3156
        %4925 = vmatprep.subr.bf16.mxu0 %v3153
        %4926 = vmatpush1.bf16.msra.mxu0 %v3152
        %4927 = vmatprep.subr.bf16.mxu0 %v3149
        %4928 = vmatpush1.bf16.msra.mxu0 %v3148
        %4929 = vmatprep.subr.bf16.mxu0 %v3145
        %4930 = vmatpush1.bf16.msra.mxu0 %v3144
        %4931 = vmatprep.subr.bf16.mxu0 %v3141
        %4932 = vmatpush1.bf16.msra.mxu0 %v3140
        %4933 = vmatprep.subr.bf16.mxu0 %v3137
        %4934 = vmatpush1.bf16.msra.mxu0 %v3136
        %4935 = vmatprep.subr.bf16.mxu0 %v3133
        %4936 = vmatpush1.bf16.msra.mxu0 %v3132
        %4937 = vmatprep.subr.bf16.mxu0 %v3193
        %4938 = vmatpush2.bf16.msra.mxu0 %v3192
        %4939 = vmatprep.subr.bf16.mxu0 %v3189
        %4940 = vmatpush2.bf16.msra.mxu0 %v3188
        %4941 = vmatprep.subr.bf16.mxu0 %v3185
        %4942 = vmatpush2.bf16.msra.mxu0 %v3184
        %4943 = vmatprep.subr.bf16.mxu0 %v3181
        %4944 = vmatpush2.bf16.msra.mxu0 %v3180
        %4945 = vmatprep.subr.bf16.mxu0 %v3177
        %4946 = vmatpush2.bf16.msra.mxu0 %v3176
        %4947 = vmatprep.subr.bf16.mxu0 %v3173
        %4948 = vmatpush2.bf16.msra.mxu0 %v3172
        %4949 = vmatprep.subr.bf16.mxu0 %v3169
        %4950 = vmatpush2.bf16.msra.mxu0 %v3168
        %4951 = vmatprep.subr.bf16.mxu0 %v3165
        %4952 = vmatpush2.bf16.msra.mxu0 %v3164
        %4953 = vmatprep.mubr.bf16.mxu0 %v541
        %4954 = vmatmul.mubr.bf16.gmra.mxu0 %v540
        %v4955 = vpop.f32.mrf.mxu0
        %v4956 = vadd.f32 %v4885, %v4955
        %v4957 = vpop.f32.mrf.mxu0
        %v4958 = vadd.f32 %v4887, %v4957
        %v4959 = vpop.f32.mrf.mxu0
        %v4960 = vadd.f32 %v4889, %v4959
        %v4961 = vpop.f32.mrf.mxu0
        %v4962 = vadd.f32 %v4891, %v4961
        %4963 = vmatprep.mubr.bf16.mxu0 %v559
        %4964 = vmatmul.mubr.bf16.gmra.mxu0 %v558
        %v4965 = vpop.f32.mrf.mxu0
        %v4966 = vadd.f32 %v4895, %v4965
        %v4967 = vpop.f32.mrf.mxu0
        %v4968 = vadd.f32 %v4897, %v4967
        %v4969 = vpop.f32.mrf.mxu0
        %v4970 = vadd.f32 %v4899, %v4969
        %v4971 = vpop.f32.mrf.mxu0
        %v4972 = vadd.f32 %v4901, %v4971
        %4973 = vmatprep.mubr.bf16.mxu0 %v577
        %4974 = vmatmul.mubr.bf16.gmra.mxu0 %v576
        %v4975 = vpop.f32.mrf.mxu0
        %v4976 = vadd.f32 %v4905, %v4975
        %v4977 = vpop.f32.mrf.mxu0
        %v4978 = vadd.f32 %v4907, %v4977
        %v4979 = vpop.f32.mrf.mxu0
        %v4980 = vadd.f32 %v4909, %v4979
        %v4981 = vpop.f32.mrf.mxu0
        %v4982 = vadd.f32 %v4911, %v4981
        %4983 = vmatprep.mubr.bf16.mxu0 %v595
        %4984 = vmatmul.mubr.bf16.gmra.mxu0 %v594
        %v4985 = vpop.f32.mrf.mxu0
        %v4986 = vadd.f32 %v4915, %v4985
        %v4987 = vpop.f32.mrf.mxu0
        %v4988 = vadd.f32 %v4917, %v4987
        %v4989 = vpop.f32.mrf.mxu0
        %v4990 = vpop.f32.mrf.mxu0
        %4991 = vdwg.mxu0
        %4992 = vmatprep.subr.bf16.mxu0 %v3225
        %4993 = vmatpush1.bf16.msra.mxu0 %v3224
        %4994 = vmatprep.subr.bf16.mxu0 %v3221
        %4995 = vmatpush1.bf16.msra.mxu0 %v3220
        %4996 = vmatprep.subr.bf16.mxu0 %v3217
        %4997 = vmatpush1.bf16.msra.mxu0 %v3216
        %4998 = vmatprep.subr.bf16.mxu0 %v3213
        %4999 = vmatpush1.bf16.msra.mxu0 %v3212
        %5000 = vmatprep.subr.bf16.mxu0 %v3209
        %5001 = vmatpush1.bf16.msra.mxu0 %v3208
        %5002 = vmatprep.subr.bf16.mxu0 %v3205
        %5003 = vmatpush1.bf16.msra.mxu0 %v3204
        %5004 = vmatprep.subr.bf16.mxu0 %v3201
        %5005 = vmatpush1.bf16.msra.mxu0 %v3200
        %5006 = vmatprep.subr.bf16.mxu0 %v3197
        %5007 = vmatpush1.bf16.msra.mxu0 %v3196
        %5008 = vmatprep.subr.bf16.mxu0 %v3257
        %5009 = vmatpush2.bf16.msra.mxu0 %v3256
        %5010 = vmatprep.subr.bf16.mxu0 %v3253
        %5011 = vmatpush2.bf16.msra.mxu0 %v3252
        %5012 = vmatprep.subr.bf16.mxu0 %v3249
        %5013 = vmatpush2.bf16.msra.mxu0 %v3248
        %5014 = vmatprep.subr.bf16.mxu0 %v3245
        %5015 = vmatpush2.bf16.msra.mxu0 %v3244
        %5016 = vmatprep.subr.bf16.mxu0 %v3241
        %5017 = vmatpush2.bf16.msra.mxu0 %v3240
        %5018 = vmatprep.subr.bf16.mxu0 %v3237
        %5019 = vmatpush2.bf16.msra.mxu0 %v3236
        %5020 = vmatprep.subr.bf16.mxu0 %v3233
        %5021 = vmatpush2.bf16.msra.mxu0 %v3232
        %5022 = vmatprep.subr.bf16.mxu0 %v3229
        %5023 = vmatpush2.bf16.msra.mxu0 %v3228
        %5024 = vmatprep.mubr.bf16.mxu0 %v543
        %5025 = vmatmul.mubr.bf16.gmra.mxu0 %v542
        %v5026 = vpop.f32.mrf.mxu0
        %v5027 = vadd.f32 %v4956, %v5026
        %v5028 = vpop.f32.mrf.mxu0
        %v5029 = vadd.f32 %v4958, %v5028
        %v5030 = vpop.f32.mrf.mxu0
        %v5031 = vadd.f32 %v4960, %v5030
        %v5032 = vpop.f32.mrf.mxu0
        %v5033 = vadd.f32 %v4962, %v5032
        %5034 = vmatprep.mubr.bf16.mxu0 %v561
        %5035 = vmatmul.mubr.bf16.gmra.mxu0 %v560
        %v5036 = vpop.f32.mrf.mxu0
        %v5037 = vadd.f32 %v4966, %v5036
        %v5038 = vpop.f32.mrf.mxu0
        %v5039 = vadd.f32 %v4968, %v5038
        %v5040 = vpop.f32.mrf.mxu0
        %v5041 = vadd.f32 %v4970, %v5040
        %v5042 = vpop.f32.mrf.mxu0
        %v5043 = vadd.f32 %v4972, %v5042
        %5044 = vmatprep.mubr.bf16.mxu0 %v579
        %5045 = vmatmul.mubr.bf16.gmra.mxu0 %v578
        %v5046 = vpop.f32.mrf.mxu0
        %v5047 = vadd.f32 %v4976, %v5046
        %v5048 = vpop.f32.mrf.mxu0
        %v5049 = vadd.f32 %v4978, %v5048
        %v5050 = vpop.f32.mrf.mxu0
        %v5051 = vadd.f32 %v4980, %v5050
        %v5052 = vpop.f32.mrf.mxu0
        %v5053 = vadd.f32 %v4982, %v5052
        %5054 = vmatprep.mubr.bf16.mxu0 %v597
        %5055 = vmatmul.mubr.bf16.gmra.mxu0 %v596
        %v5056 = vpop.f32.mrf.mxu0
        %v5057 = vadd.f32 %v4986, %v5056
        %v5058 = vpop.f32.mrf.mxu0
        %v5059 = vadd.f32 %v4988, %v5058
        %v5060 = vpop.f32.mrf.mxu0
        %v5061 = vpop.f32.mrf.mxu0
        %5062 = vdwg.mxu0
        %5063 = vmatprep.subr.bf16.mxu0 %v3289
        %5064 = vmatpush1.bf16.msra.mxu0 %v3288
        %5065 = vmatprep.subr.bf16.mxu0 %v3285
        %5066 = vmatpush1.bf16.msra.mxu0 %v3284
        %5067 = vmatprep.subr.bf16.mxu0 %v3281
        %5068 = vmatpush1.bf16.msra.mxu0 %v3280
        %5069 = vmatprep.subr.bf16.mxu0 %v3277
        %5070 = vmatpush1.bf16.msra.mxu0 %v3276
        %5071 = vmatprep.subr.bf16.mxu0 %v3273
        %5072 = vmatpush1.bf16.msra.mxu0 %v3272
        %5073 = vmatprep.subr.bf16.mxu0 %v3269
        %5074 = vmatpush1.bf16.msra.mxu0 %v3268
        %5075 = vmatprep.subr.bf16.mxu0 %v3265
        %5076 = vmatpush1.bf16.msra.mxu0 %v3264
        %5077 = vmatprep.subr.bf16.mxu0 %v3261
        %5078 = vmatpush1.bf16.msra.mxu0 %v3260
        %5079 = vmatprep.subr.bf16.mxu0 %v3321
        %5080 = vmatpush2.bf16.msra.mxu0 %v3320
        %5081 = vmatprep.subr.bf16.mxu0 %v3317
        %5082 = vmatpush2.bf16.msra.mxu0 %v3316
        %5083 = vmatprep.subr.bf16.mxu0 %v3313
        %5084 = vmatpush2.bf16.msra.mxu0 %v3312
        %5085 = vmatprep.subr.bf16.mxu0 %v3309
        %5086 = vmatpush2.bf16.msra.mxu0 %v3308
        %5087 = vmatprep.subr.bf16.mxu0 %v3305
        %5088 = vmatpush2.bf16.msra.mxu0 %v3304
        %5089 = vmatprep.subr.bf16.mxu0 %v3301
        %5090 = vmatpush2.bf16.msra.mxu0 %v3300
        %5091 = vmatprep.subr.bf16.mxu0 %v3297
        %5092 = vmatpush2.bf16.msra.mxu0 %v3296
        %5093 = vmatprep.subr.bf16.mxu0 %v3293
        %5094 = vmatpush2.bf16.msra.mxu0 %v3292
        %5095 = vmatprep.mubr.bf16.mxu0 %v545
        %5096 = vmatmul.mubr.bf16.gmra.mxu0 %v544
        %v5097 = vpop.f32.mrf.mxu0
        %v5098 = vadd.f32 %v5027, %v5097
        %v5099 = vpop.f32.mrf.mxu0
        %v5100 = vadd.f32 %v5029, %v5099
        %v5101 = vpop.f32.mrf.mxu0
        %v5102 = vadd.f32 %v5031, %v5101
        %v5103 = vpop.f32.mrf.mxu0
        %v5104 = vadd.f32 %v5033, %v5103
        %5105 = vmatprep.mubr.bf16.mxu0 %v563
        %5106 = vmatmul.mubr.bf16.gmra.mxu0 %v562
        %v5107 = vpop.f32.mrf.mxu0
        %v5108 = vadd.f32 %v5037, %v5107
        %v5109 = vpop.f32.mrf.mxu0
        %v5110 = vadd.f32 %v5039, %v5109
        %v5111 = vpop.f32.mrf.mxu0
        %v5112 = vadd.f32 %v5041, %v5111
        %v5113 = vpop.f32.mrf.mxu0
        %v5114 = vadd.f32 %v5043, %v5113
        %5115 = vmatprep.mubr.bf16.mxu0 %v581
        %5116 = vmatmul.mubr.bf16.gmra.mxu0 %v580
        %v5117 = vpop.f32.mrf.mxu0
        %v5118 = vadd.f32 %v5047, %v5117
        %v5119 = vpop.f32.mrf.mxu0
        %v5120 = vadd.f32 %v5049, %v5119
        %v5121 = vpop.f32.mrf.mxu0
        %v5122 = vadd.f32 %v5051, %v5121
        %v5123 = vpop.f32.mrf.mxu0
        %v5124 = vadd.f32 %v5053, %v5123
        %5125 = vmatprep.mubr.bf16.mxu0 %v599
        %5126 = vmatmul.mubr.bf16.gmra.mxu0 %v598
        %v5127 = vpop.f32.mrf.mxu0
        %v5128 = vadd.f32 %v5057, %v5127
        %v5129 = vpop.f32.mrf.mxu0
        %v5130 = vadd.f32 %v5059, %v5129
        %v5131 = vpop.f32.mrf.mxu0
        %v5132 = vpop.f32.mrf.mxu0
        %5133 = vdwg.mxu0
        %5134 = vmatprep.subr.bf16.mxu0 %v3353
        %5135 = vmatpush1.bf16.msra.mxu0 %v3352
        %5136 = vmatprep.subr.bf16.mxu0 %v3349
        %5137 = vmatpush1.bf16.msra.mxu0 %v3348
        %5138 = vmatprep.subr.bf16.mxu0 %v3345
        %5139 = vmatpush1.bf16.msra.mxu0 %v3344
        %5140 = vmatprep.subr.bf16.mxu0 %v3341
        %5141 = vmatpush1.bf16.msra.mxu0 %v3340
        %5142 = vmatprep.subr.bf16.mxu0 %v3337
        %5143 = vmatpush1.bf16.msra.mxu0 %v3336
        %5144 = vmatprep.subr.bf16.mxu0 %v3333
        %5145 = vmatpush1.bf16.msra.mxu0 %v3332
        %5146 = vmatprep.subr.bf16.mxu0 %v3329
        %5147 = vmatpush1.bf16.msra.mxu0 %v3328
        %5148 = vmatprep.subr.bf16.mxu0 %v3325
        %5149 = vmatpush1.bf16.msra.mxu0 %v3324
        %5150 = vmatprep.subr.bf16.mxu0 0
        %5151 = vmatpush2.bf16.msra.mxu0 0
        %5152 = vmatprep.subr.bf16.mxu0 0
        %5153 = vmatpush2.bf16.msra.mxu0 0
        %5154 = vmatprep.subr.bf16.mxu0 0
        %5155 = vmatpush2.bf16.msra.mxu0 0
        %5156 = vmatprep.subr.bf16.mxu0 0
        %5157 = vmatpush2.bf16.msra.mxu0 0
        %5158 = vmatprep.subr.bf16.mxu0 0
        %5159 = vmatpush2.bf16.msra.mxu0 0
        %5160 = vmatprep.subr.bf16.mxu0 0
        %5161 = vmatpush2.bf16.msra.mxu0 0
        %5162 = vmatprep.subr.bf16.mxu0 %v3361
        %5163 = vmatpush2.bf16.msra.mxu0 %v3360
        %5164 = vmatprep.subr.bf16.mxu0 %v3357
        %5165 = vmatpush2.bf16.msra.mxu0 %v3356
        %5166 = vmatprep.mubr.bf16.mxu0 %v3916
        %5167 = vmatmul.mubr.bf16.gmra.mxu0 %v546
        %v5168 = vpop.f32.mrf.mxu0
        %v5169 = vadd.f32 %v5098, %v5168
        %v5170 = vpop.f32.mrf.mxu0
        %v5171 = vadd.f32 %v5100, %v5170
        %v5172 = vpop.f32.mrf.mxu0
        %v5173 = vadd.f32 %v5102, %v5172
        %v5174 = vpop.f32.mrf.mxu0
        %v5175 = vadd.f32 %v5104, %v5174
        %5176 = vmatprep.mubr.bf16.mxu0 %v3919
        %5177 = vmatmul.mubr.bf16.gmra.mxu0 %v564
        %v5178 = vpop.f32.mrf.mxu0
        %v5179 = vadd.f32 %v5108, %v5178
        %v5180 = vpop.f32.mrf.mxu0
        %v5181 = vadd.f32 %v5110, %v5180
        %v5182 = vpop.f32.mrf.mxu0
        %v5183 = vadd.f32 %v5112, %v5182
        %v5184 = vpop.f32.mrf.mxu0
        %v5185 = vadd.f32 %v5114, %v5184
        %5186 = vmatprep.mubr.bf16.mxu0 %v3922
        %5187 = vmatmul.mubr.bf16.gmra.mxu0 %v582
        %v5188 = vpop.f32.mrf.mxu0
        %v5189 = vadd.f32 %v5118, %v5188
        %v5190 = vpop.f32.mrf.mxu0
        %v5191 = vadd.f32 %v5120, %v5190
        %v5192 = vpop.f32.mrf.mxu0
        %v5193 = vadd.f32 %v5122, %v5192
        %v5194 = vpop.f32.mrf.mxu0
        %v5195 = vadd.f32 %v5124, %v5194
        %5196 = vmatprep.mubr.bf16.mxu0 %v3925
        %5197 = vmatmul.mubr.bf16.gmra.mxu0 %v600
        %v5198 = vpop.f32.mrf.mxu0
        %v5199 = vadd.f32 %v5128, %v5198
        %v5200 = vpop.f32.mrf.mxu0
        %v5201 = vadd.f32 %v5130, %v5200
        %v5202 = vpop.f32.mrf.mxu0
        %v5203 = vpop.f32.mrf.mxu0
        %5204 = vdwg.mxu0
        %v5205 = vadd.f32 %v4530, %v4534
        %v5206 = vadd.f32 %v5205, %v4540
        %v5207 = vadd.f32 %v5206, %v4544
        %v5208 = vadd.f32 %v5207, %v4550
        %v5209 = vadd.f32 %v5208, %v4554
        %vm5210 = vcmask 1040384
        %v5211 = vsel %vm5210, %v4560, 0.0
        %v5212 = vadd.f32 %v5209, %v5211
        %v5213 = vrot.slane %v5212, 4
        %v5214 = vadd.f32 %v5212, %v5213
        %v5215 = vrot.slane %v5214, 2
        %v5216 = vadd.f32 %v5214, %v5215
        %v5217 = vrot.slane %v5216, 1
        %v5218 = vadd.f32 %v5216, %v5217
        %v5219 = vadd.f32 %v4532, %v4536
        %v5220 = vadd.f32 %v5219, %v4542
        %v5221 = vadd.f32 %v5220, %v4546
        %v5222 = vadd.f32 %v5221, %v4552
        %v5223 = vadd.f32 %v5222, %v4556
        %v5224 = vsel %vm5210, %v4562, 0.0
        %v5225 = vadd.f32 %v5223, %v5224
        %v5226 = vrot.slane %v5225, 4
        %v5227 = vadd.f32 %v5225, %v5226
        %v5228 = vrot.slane %v5227, 2
        %v5229 = vadd.f32 %v5227, %v5228
        %v5230 = vrot.slane %v5229, 1
        %v5231 = vadd.f32 %v5229, %v5230
        %v5232 = vadd.f32 %v5169, %v5173
        %v5233 = vadd.f32 %v5232, %v5179
        %v5234 = vadd.f32 %v5233, %v5183
        %v5235 = vadd.f32 %v5234, %v5189
        %v5236 = vadd.f32 %v5235, %v5193
        %v5237 = vsel %vm5210, %v5199, 0.0
        %v5238 = vadd.f32 %v5236, %v5237
        %v5239 = vrot.slane %v5238, 4
        %v5240 = vadd.f32 %v5238, %v5239
        %v5241 = vrot.slane %v5240, 2
        %v5242 = vadd.f32 %v5240, %v5241
        %v5243 = vrot.slane %v5242, 1
        %v5244 = vadd.f32 %v5242, %v5243
        %v5245 = vadd.f32 %v5171, %v5175
        %v5246 = vadd.f32 %v5245, %v5181
        %v5247 = vadd.f32 %v5246, %v5185
        %v5248 = vadd.f32 %v5247, %v5191
        %v5249 = vadd.f32 %v5248, %v5195
        %v5250 = vsel %vm5210, %v5201, 0.0
        %v5251 = vadd.f32 %v5249, %v5250
        %v5252 = vrot.slane %v5251, 4
        %v5253 = vadd.f32 %v5251, %v5252
        %v5254 = vrot.slane %v5253, 2
        %v5255 = vadd.f32 %v5253, %v5254
        %v5256 = vrot.slane %v5255, 1
        %v5257 = vadd.f32 %v5255, %v5256
        %v5258 = vrcp.pop 49.0
        %v5259 = vmul.f32 %v5218, %v5258
        %v5260 = vmul.f32 %v5231, %v5258
        %v5261 = vmul.f32 %v5244, %v5258
        %v5262 = vmul.f32 %v5257, %v5258
        %v5263 = vld [vmem:[#allocation5] sm:$0xf]
        %v5265 = vlaneseq
        %v5266 = vshrl.u32 %v5265, 7
        %v5267 = vsub.s32 0, %v5266
        %v5268 = vrot.slane %v5263, %v5267
        %v5269 = vlaneseq
        %v5270 = vshrl.u32 %v5269, 7
        %v5271 = vsub.s32 1, %v5270
        %v5272 = vrot.slane %v5263, %v5271
        %v5273 = vlaneseq
        %v5274 = vshrl.u32 %v5273, 7
        %v5275 = vsub.s32 2, %v5274
        %v5276 = vrot.slane %v5263, %v5275
        %v5277 = vlaneseq
        %v5278 = vshrl.u32 %v5277, 7
        %v5279 = vsub.s32 3, %v5278
        %v5280 = vrot.slane %v5263, %v5279
        %v5285 = vadd.f32 %v5259, %v5268
        %v5286 = vadd.f32 %v5260, %v5272
        %v5287 = vadd.f32 %v5261, %v5276
        %v5288 = vadd.f32 %v5262, %v5280
        %vm5289 = vcmp.gt.f32.partialorder %v5285, 20.0
        %vm5290 = vcmp.gt.f32.partialorder %v5286, 20.0
        %vm5291 = vcmp.gt.f32.partialorder %v5287, 20.0
        %vm5292 = vcmp.gt.f32.partialorder %v5288, 20.0
        %v5293 = vmin.f32 %v5285, 20.0
        %v5294 = vmin.f32 %v5286, 20.0
        %v5295 = vmin.f32 %v5287, 20.0
        %v5296 = vmin.f32 %v5288, 20.0
        %v5297 = vmul.f32 %v5293, 1.442695
        %v5298 = vpow.pop %v5297
        %v5299 = vmul.f32 %v5294, 1.442695
        %v5300 = vpow.pop %v5299
        %v5301 = vmul.f32 %v5295, 1.442695
        %v5302 = vpow.pop %v5301
        %v5303 = vmul.f32 %v5296, 1.442695
        %v5304 = vpow.pop %v5303
        %v5305 = vadd.f32 %v5298, 1.0
        %v5306 = vlog2.pop %v5305
        %v5307 = vmul.f32 %v5306, 0.6931472
        %v5308 = vmul.f32 -0.5, %v5298
        %v5309 = vadd.f32 %v5308, 1.0
        %v5310 = vmul.f32 %v5309, %v5298
        %v5311 = vand.u32 2147483647, %v5298
        %vm5312 = vcmp.lt.f32.partialorder %v5311, 0.0004427343
        %v5313 = vsel %vm5312, %v5310, %v5307
        %v5314 = vadd.f32 %v5300, 1.0
        %v5315 = vlog2.pop %v5314
        %v5316 = vmul.f32 %v5315, 0.6931472
        %v5317 = vmul.f32 -0.5, %v5300
        %v5318 = vadd.f32 %v5317, 1.0
        %v5319 = vmul.f32 %v5318, %v5300
        %v5320 = vand.u32 2147483647, %v5300
        %vm5321 = vcmp.lt.f32.partialorder %v5320, 0.0004427343
        %v5322 = vsel %vm5321, %v5319, %v5316
        %v5323 = vadd.f32 %v5302, 1.0
        %v5324 = vlog2.pop %v5323
        %v5325 = vmul.f32 %v5324, 0.6931472
        %v5326 = vmul.f32 -0.5, %v5302
        %v5327 = vadd.f32 %v5326, 1.0
        %v5328 = vmul.f32 %v5327, %v5302
        %v5329 = vand.u32 2147483647, %v5302
        %vm5330 = vcmp.lt.f32.partialorder %v5329, 0.0004427343
        %v5331 = vsel %vm5330, %v5328, %v5325
        %v5332 = vadd.f32 %v5304, 1.0
        %v5333 = vlog2.pop %v5332
        %v5334 = vmul.f32 %v5333, 0.6931472
        %v5335 = vmul.f32 -0.5, %v5304
        %v5336 = vadd.f32 %v5335, 1.0
        %v5337 = vmul.f32 %v5336, %v5304
        %v5338 = vand.u32 2147483647, %v5304
        %vm5339 = vcmp.lt.f32.partialorder %v5338, 0.0004427343
        %v5340 = vsel %vm5339, %v5337, %v5334
        %v5341 = vsel %vm5289, %v5285, %v5313
        %v5342 = vsel %vm5290, %v5286, %v5322
        %v5343 = vsel %vm5291, %v5287, %v5331
        %v5344 = vsel %vm5292, %v5288, %v5340
        %v5345 = vtanh.pop %v5341
        %v5346 = vtanh.pop %v5342
        %v5347 = vtanh.pop %v5343
        %v5348 = vtanh.pop %v5344
        %v5349 = vmul.f32 %v5285, %v5345
        %v5350 = vmul.f32 %v5286, %v5346
        %v5351 = vmul.f32 %v5287, %v5347
        %v5352 = vmul.f32 %v5288, %v5348
        %v5353 = vld [vmem:[#allocation7] sm:$0xff]
        %v5354 = vld [vmem:[#allocation7 + $0x8] sm:$0xff]
        %v5355 = vld [vmem:[#allocation7 + $0x10] sm:$0xff]
        %v5356 = vld [vmem:[#allocation7 + $0x18] sm:$0xff]
        %v5357 = vld [vmem:[#allocation7 + $0x20] sm:$0xff]
        %v5358 = vld [vmem:[#allocation7 + $0x28] sm:$0xff]
        %v5359 = vld [vmem:[#allocation7 + $0x30] sm:$0xff]
        %v5360 = vld [vmem:[#allocation7 + $0x38] sm:$0xff]
        %v5361 = vld [vmem:[#allocation7 + $0x40] sm:$0xff]
        %v5362 = vld [vmem:[#allocation7 + $0x48] sm:$0xff]
        %v5363 = vld [vmem:[#allocation7 + $0x50] sm:$0xff]
        %v5364 = vld [vmem:[#allocation7 + $0x58] sm:$0xff]
        %v5365 = vld [vmem:[#allocation7 + $0x60] sm:$0xff]
        %v5366 = vld [vmem:[#allocation7 + $0x68] sm:$0xff]
        %v5367 = vld [vmem:[#allocation7 + $0x70] sm:$0xff]
        %v5368 = vld [vmem:[#allocation7 + $0x78] sm:$0xff]
        %v5369 = vld [vmem:[#allocation7 + $0x80] sm:$0xff]
        %v5370 = vld [vmem:[#allocation7 + $0x88] sm:$0xff]
        %v5371 = vld [vmem:[#allocation7 + $0x90] sm:$0xff]
        %v5372 = vld [vmem:[#allocation7 + $0x98] sm:$0xff]
        %v5373 = vld [vmem:[#allocation7 + $0xa0] sm:$0xff]
        %v5374 = vld [vmem:[#allocation7 + $0xa8] sm:$0xff]
        %v5375 = vld [vmem:[#allocation7 + $0xb0] sm:$0xff]
        %v5376 = vld [vmem:[#allocation7 + $0xb8] sm:$0xff]
        %v5377 = vld [vmem:[#allocation7 + $0xc0] sm:$0xff]
        %v5378 = vld [vmem:[#allocation7 + $0xc8] sm:$0xff]
        %v5379 = vld [vmem:[#allocation7 + $0xd0] sm:$0xff]
        %v5380 = vld [vmem:[#allocation7 + $0xd8] sm:$0xff]
        %v5381 = vld [vmem:[#allocation7 + $0xe0] sm:$0xff]
        %v5382 = vld [vmem:[#allocation7 + $0xe8] sm:$0xff]
        %v5383 = vld [vmem:[#allocation7 + $0xf0] sm:$0xff]
        %v5384 = vld [vmem:[#allocation7 + $0xf8] sm:$0xff]
        %v5385 = vld [vmem:[#allocation7 + $0x100] sm:$0xff]
        %v5386 = vld [vmem:[#allocation7 + $0x108] sm:$0xff]
        %v5387 = vld [vmem:[#allocation7 + $0x110] sm:$0xff]
        %v5388 = vld [vmem:[#allocation7 + $0x118] sm:$0xff]
        %v5389 = vld [vmem:[#allocation7 + $0x120] sm:$0xff]
        %v5390 = vld [vmem:[#allocation7 + $0x128] sm:$0xff]
        %v5391 = vld [vmem:[#allocation7 + $0x130] sm:$0xff]
        %v5392 = vld [vmem:[#allocation7 + $0x138] sm:$0xff]
        %v5393 = vld [vmem:[#allocation7 + $0x140] sm:$0xff]
        %v5394 = vld [vmem:[#allocation7 + $0x148] sm:$0xff]
        %v5395 = vld [vmem:[#allocation7 + $0x150] sm:$0xff]
        %v5396 = vld [vmem:[#allocation7 + $0x158] sm:$0xff]
        %v5397 = vld [vmem:[#allocation7 + $0x160] sm:$0xff]
        %v5398 = vld [vmem:[#allocation7 + $0x168] sm:$0xff]
        %v5399 = vld [vmem:[#allocation7 + $0x170] sm:$0xff]
        %v5400 = vld [vmem:[#allocation7 + $0x178] sm:$0xff]
        %v5401 = vld [vmem:[#allocation7 + $0x180] sm:$0xff]
        %v5402 = vld [vmem:[#allocation7 + $0x188] sm:$0xff]
        %v5403 = vld [vmem:[#allocation7 + $0x190] sm:$0xff]
        %v5404 = vld [vmem:[#allocation7 + $0x198] sm:$0xff]
        %v5405 = vld [vmem:[#allocation7 + $0x1a0] sm:$0xff]
        %v5406 = vld [vmem:[#allocation7 + $0x1a8] sm:$0xff]
        %v5407 = vld [vmem:[#allocation7 + $0x1b0] sm:$0xff]
        %v5408 = vld [vmem:[#allocation7 + $0x1b8] sm:$0xff]
        %v5409 = vld [vmem:[#allocation7 + $0x1c0] sm:$0xff]
        %v5410 = vld [vmem:[#allocation7 + $0x1c8] sm:$0xff]
        %v5411 = vld [vmem:[#allocation7 + $0x1d0] sm:$0xff]
        %v5412 = vld [vmem:[#allocation7 + $0x1d8] sm:$0xff]
        %v5413 = vld [vmem:[#allocation7 + $0x1e0] sm:$0xff]
        %v5414 = vld [vmem:[#allocation7 + $0x1e8] sm:$0xff]
        %v5415 = vld [vmem:[#allocation7 + $0x1f0] sm:$0xff]
        %v5416 = vld [vmem:[#allocation7 + $0x1f8] sm:$0xff]
        %v5417 = vld [vmem:[#allocation8] sm:$0x1]
        %5418 = vmatprep.subr.mxu0 0.0
        %5419 = vmatpush1.msra.mxu0 %v5368
        %5420 = vmatprep.subr.mxu0 0.0
        %5421 = vmatpush1.msra.mxu0 %v5367
        %5422 = vmatprep.subr.mxu0 0.0
        %5423 = vmatpush1.msra.mxu0 %v5366
        %5424 = vmatprep.subr.mxu0 0.0
        %5425 = vmatpush1.msra.mxu0 %v5365
        %5426 = vmatprep.subr.mxu0 0.0
        %5427 = vmatpush1.msra.mxu0 %v5364
        %5428 = vmatprep.subr.mxu0 0.0
        %5429 = vmatpush1.msra.mxu0 %v5363
        %5430 = vmatprep.subr.mxu0 0.0
        %5431 = vmatpush1.msra.mxu0 %v5362
        %5432 = vmatprep.subr.mxu0 0.0
        %5433 = vmatpush1.msra.mxu0 %v5361
        %5434 = vmatprep.subr.mxu0 0.0
        %5435 = vmatpush1.msra.mxu0 %v5360
        %5436 = vmatprep.subr.mxu0 0.0
        %5437 = vmatpush1.msra.mxu0 %v5359
        %5438 = vmatprep.subr.mxu0 0.0
        %5439 = vmatpush1.msra.mxu0 %v5358
        %5440 = vmatprep.subr.mxu0 0.0
        %5441 = vmatpush1.msra.mxu0 %v5357
        %5442 = vmatprep.subr.mxu0 0.0
        %5443 = vmatpush1.msra.mxu0 %v5356
        %5444 = vmatprep.subr.mxu0 0.0
        %5445 = vmatpush1.msra.mxu0 %v5355
        %5446 = vmatprep.subr.mxu0 0.0
        %5447 = vmatpush1.msra.mxu0 %v5354
        %5448 = vmatprep.subr.mxu0 0.0
        %5449 = vmatpush1.msra.mxu0 %v5353
        %5450 = vmatprep.subr.mxu0 0.0
        %5451 = vmatpush2.msra.mxu0 %v5384
        %5452 = vmatprep.subr.mxu0 0.0
        %5453 = vmatpush2.msra.mxu0 %v5383
        %5454 = vmatprep.subr.mxu0 0.0
        %5455 = vmatpush2.msra.mxu0 %v5382
        %5456 = vmatprep.subr.mxu0 0.0
        %5457 = vmatpush2.msra.mxu0 %v5381
        %5458 = vmatprep.subr.mxu0 0.0
        %5459 = vmatpush2.msra.mxu0 %v5380
        %5460 = vmatprep.subr.mxu0 0.0
        %5461 = vmatpush2.msra.mxu0 %v5379
        %5462 = vmatprep.subr.mxu0 0.0
        %5463 = vmatpush2.msra.mxu0 %v5378
        %5464 = vmatprep.subr.mxu0 0.0
        %5465 = vmatpush2.msra.mxu0 %v5377
        %5466 = vmatprep.subr.mxu0 0.0
        %5467 = vmatpush2.msra.mxu0 %v5376
        %5468 = vmatprep.subr.mxu0 0.0
        %5469 = vmatpush2.msra.mxu0 %v5375
        %5470 = vmatprep.subr.mxu0 0.0
        %5471 = vmatpush2.msra.mxu0 %v5374
        %5472 = vmatprep.subr.mxu0 0.0
        %5473 = vmatpush2.msra.mxu0 %v5373
        %5474 = vmatprep.subr.mxu0 0.0
        %5475 = vmatpush2.msra.mxu0 %v5372
        %5476 = vmatprep.subr.mxu0 0.0
        %5477 = vmatpush2.msra.mxu0 %v5371
        %5478 = vmatprep.subr.mxu0 0.0
        %5479 = vmatpush2.msra.mxu0 %v5370
        %5480 = vmatprep.subr.mxu0 0.0
        %5481 = vmatpush2.msra.mxu0 %v5369
        %5482 = vmatprep.mubr.f32.mxu0 %v5350
        %5483 = vmatmul.mubr.f32.gmra.mxu0 %v5349
        %v5484 = vpop.f32.mrf.mxu0
        %v5485 = vadd.f32 %v5417, %v5484
        %v5486 = vpop.f32.mrf.mxu0
        %5487 = vdwg.mxu0
        %5488 = vmatprep.subr.mxu0 0.0
        %5489 = vmatpush1.msra.mxu0 %v5400
        %5490 = vmatprep.subr.mxu0 0.0
        %5491 = vmatpush1.msra.mxu0 %v5399
        %5492 = vmatprep.subr.mxu0 0.0
        %5493 = vmatpush1.msra.mxu0 %v5398
        %5494 = vmatprep.subr.mxu0 0.0
        %5495 = vmatpush1.msra.mxu0 %v5397
        %5496 = vmatprep.subr.mxu0 0.0
        %5497 = vmatpush1.msra.mxu0 %v5396
        %5498 = vmatprep.subr.mxu0 0.0
        %5499 = vmatpush1.msra.mxu0 %v5395
        %5500 = vmatprep.subr.mxu0 0.0
        %5501 = vmatpush1.msra.mxu0 %v5394
        %5502 = vmatprep.subr.mxu0 0.0
        %5503 = vmatpush1.msra.mxu0 %v5393
        %5504 = vmatprep.subr.mxu0 0.0
        %5505 = vmatpush1.msra.mxu0 %v5392
        %5506 = vmatprep.subr.mxu0 0.0
        %5507 = vmatpush1.msra.mxu0 %v5391
        %5508 = vmatprep.subr.mxu0 0.0
        %5509 = vmatpush1.msra.mxu0 %v5390
        %5510 = vmatprep.subr.mxu0 0.0
        %5511 = vmatpush1.msra.mxu0 %v5389
        %5512 = vmatprep.subr.mxu0 0.0
        %5513 = vmatpush1.msra.mxu0 %v5388
        %5514 = vmatprep.subr.mxu0 0.0
        %5515 = vmatpush1.msra.mxu0 %v5387
        %5516 = vmatprep.subr.mxu0 0.0
        %5517 = vmatpush1.msra.mxu0 %v5386
        %5518 = vmatprep.subr.mxu0 0.0
        %5519 = vmatpush1.msra.mxu0 %v5385
        %5520 = vmatprep.subr.mxu0 0.0
        %5521 = vmatpush2.msra.mxu0 %v5416
        %5522 = vmatprep.subr.mxu0 0.0
        %5523 = vmatpush2.msra.mxu0 %v5415
        %5524 = vmatprep.subr.mxu0 0.0
        %5525 = vmatpush2.msra.mxu0 %v5414
        %5526 = vmatprep.subr.mxu0 0.0
        %5527 = vmatpush2.msra.mxu0 %v5413
        %5528 = vmatprep.subr.mxu0 0.0
        %5529 = vmatpush2.msra.mxu0 %v5412
        %5530 = vmatprep.subr.mxu0 0.0
        %5531 = vmatpush2.msra.mxu0 %v5411
        %5532 = vmatprep.subr.mxu0 0.0
        %5533 = vmatpush2.msra.mxu0 %v5410
        %5534 = vmatprep.subr.mxu0 0.0
        %5535 = vmatpush2.msra.mxu0 %v5409
        %5536 = vmatprep.subr.mxu0 0.0
        %5537 = vmatpush2.msra.mxu0 %v5408
        %5538 = vmatprep.subr.mxu0 0.0
        %5539 = vmatpush2.msra.mxu0 %v5407
        %5540 = vmatprep.subr.mxu0 0.0
        %5541 = vmatpush2.msra.mxu0 %v5406
        %5542 = vmatprep.subr.mxu0 0.0
        %5543 = vmatpush2.msra.mxu0 %v5405
        %5544 = vmatprep.subr.mxu0 0.0
        %5545 = vmatpush2.msra.mxu0 %v5404
        %5546 = vmatprep.subr.mxu0 0.0
        %5547 = vmatpush2.msra.mxu0 %v5403
        %5548 = vmatprep.subr.mxu0 0.0
        %5549 = vmatpush2.msra.mxu0 %v5402
        %5550 = vmatprep.subr.mxu0 0.0
        %5551 = vmatpush2.msra.mxu0 %v5401
        %5552 = vmatprep.mubr.f32.mxu0 %v5352
        %5553 = vmatmul.mubr.f32.gmra.mxu0 %v5351
        %v5554 = vpop.f32.mrf.mxu0
        %v5555 = vadd.f32 %v5485, %v5554
        %v5556 = vpop.f32.mrf.mxu0
        %5557 = vdwg.mxu0
        %5558 = vst [vmem:[%s271] sm:$0x1] %v5555
        %s5559 = sand.u32 %s140, 1
        %s5560 = scalar_lea.sflag [#allocation4], %s5559
        %s5561 = sand.u32 %s140, 1
        %s5562 = scalar_lea.vmem [#allocation10], %s5561
        // Predicated region
        $region57: #{tpu_custom_call.1} parent=39 // pred_check
          %p5563 = pneg %p150
        $region58: #{tpu_custom_call.1} parent=39 // pred_check_branch
          %5565 = sbr.rel (%p5563) target = $region60
        $region59: #{tpu_custom_call.1} parent=39 // pred_region
          %s5567 = ssub.s32 16, 16
          %5568 = vsyncadd %s5560, %s5567
          %s5569 = smul.addr %s22, 16
          %s5570 = scalar_lea.hbm %s5, %s5569
          %s5572 = sshll.u32 %s5562, 4
          %s5573 = int_to_ptr.vmem [resolvable:$true] %s5572
          %5575 = dma.vmem_to_hbm [thread:$0]  %s5573, 16, %s5570, %s5560
        $region60: #{tpu_custom_call.1} parent=39 // pred_fallthru
          _
      $region40: #{tpu_custom_call.1} parent=5 // pred_fallthru
        _
      %p5576 = scmp.le.s32.totalorder 2, %s17
      // Predicated region
      $region61: #{tpu_custom_call.1} parent=5 // pred_check
        %p5577 = pneg %p5576
      $region62: #{tpu_custom_call.1} parent=5 // pred_check_branch
        %5579 = sbr.rel (%p5577) target = $region64
      $region63: #{tpu_custom_call.1} parent=5 // pred_region
        %s5580 = ssub.s32 %s17, 2
        // Predicated region
        $region65: #{tpu_custom_call.1} parent=63 // pred_check
          %p5581 = pneg %p156
        $region66: #{tpu_custom_call.1} parent=63 // pred_check_branch
          %5583 = sbr.rel (%p5581) target = $region68
        $region67: #{tpu_custom_call.1} parent=63 // pred_region
          %s5584 = sand.u32 %s141, 1
          %s5585 = scalar_lea.sflag [#allocation4], %s5584
          %s5586 = sand.u32 %s141, 1
          %s5587 = scalar_lea.vmem [#allocation10], %s5586
          %5588 = dma.done %s5585, 16
        $region68: #{tpu_custom_call.1} parent=63 // pred_fallthru
          _
      $region64: #{tpu_custom_call.1} parent=5 // pred_fallthru
        _
    $region6: #{tpu_custom_call.1} parent=1 // loop_footer
      %s21 = sadd.s32 1, %s17
    $region7: #{tpu_custom_call.1} parent=1 // loop_footer_branch
      %16 = sbr.rel target = $region3
    $region8: #{tpu_custom_call.1} parent=1 // loop_exit
      _
    %5589 = vsyncpa [#allocation3], 1
    %s5590 = scalar_lea.sflag [#allocation3], 1
    %5591 = vsyncpa %s5590, 1
    %5592 = vsyncpa [#allocation6], 1
    %5593 = vsyncpa [#allocation9], 1
    %5594 = vsyncpa [#allocation4], 1
    %s5595 = scalar_lea.sflag [#allocation4], 1
    %5596 = vsyncpa %s5595, 1

</llo_original>
